<compile_context>
chip_gen: v6e
topology: v6e:2x2x1
jax: 0.10.0
libtpu: 0.0.40
codegen_flags: <defaults>
</compile_context>

<pallas_src>
import math

import jax
import jax.numpy as jnp
from jax.experimental import pallas as pl
from jax.experimental.pallas import tpu as pltpu

# ---------------- configuration ----------------
B, S, F_IN = 2, 8, 16            # batch, sequence length, input feature dim
D_MODEL, N_HEADS = 32, 4
D_K = D_MODEL // N_HEADS
D_FF = 64
N_LAYERS = 2
N_OUT = 8
EPS = 1e-5


# ---------------- fused Pallas kernel ----------------
def _fused_forward_kernel(
    # activations / geometry
    src_ref, dist_ref, mask_ref,
    # embeddings
    ws_ref, bs_ref, wf_ref, bf_ref,
    # per-layer stacked encoder weights  (leading axis = layer)
    wqkv_ref, bqkv_ref, wo_ref, bo_ref,
    w1_ref, bff1_ref, w2_ref, bff2_ref,
    g1_ref, be1_ref, g2_ref, be2_ref,
    # final LN + generator
    gf_ref, bfn_ref, wg_ref, bg_ref,
    # SMEM: per-layer per-head distance scales
    scales_ref,
    # output
    out_ref,
):
    inv_sqrt_dk = 1.0 / math.sqrt(D_K)

    def layernorm(v, g, b):
        mu = jnp.mean(v, axis=-1, keepdims=True)
        var = jnp.mean(jnp.square(v - mu), axis=-1, keepdims=True)
        return (v - mu) * jax.lax.rsqrt(var + EPS) * g + b

    # ---- x = src_embed(src) + feat_embed(src), fused into ONE matmul ----
    s = src_ref[...]                                              # [B*S, F_IN]
    w_emb = ws_ref[...] + wf_ref[...]                             # [F_IN, D_MODEL]
    b_emb = bs_ref[...] + bf_ref[...]                             # [1, D_MODEL]
    x = jnp.dot(s, w_emb, preferred_element_type=jnp.float32) + b_emb

    # ---- per-batch geometry, hoisted out of the layer loop (read once) ----
    dist_b = [dist_ref[b] for b in range(B)]                          # [S, S]
    negm_b = [jnp.where(mask_ref[b] > 0.0, 0.0, -1e9) for b in range(B)]  # [1, S]

    # ---- encoder layers (statically unrolled) ----
    for l in range(N_LAYERS):
        # fused QKV projection: one [B*S, 3*D_MODEL] matmul
        qkv = jnp.dot(x, wqkv_ref[l], preferred_element_type=jnp.float32) + bqkv_ref[l]
        q_all = qkv[:, 0:D_MODEL]
        k_all = qkv[:, D_MODEL:2 * D_MODEL]
        v_all = qkv[:, 2 * D_MODEL:3 * D_MODEL]

        # distance-biased, masked multi-head attention, unrolled over (b, h);
        # head outputs assembled by value-level concat (no scratch stores).
        batch_rows = []
        for b in range(B):
            rows = slice(b * S, (b + 1) * S)
            heads = []
            for h in range(N_HEADS):
                cols = slice(h * D_K, (h + 1) * D_K)
                q_h = q_all[rows, cols]                            # [S, D_K]
                k_h = k_all[rows, cols]
                v_h = v_all[rows, cols]
                sc = jnp.dot(q_h, k_h.T,
                             preferred_element_type=jnp.float32) * inv_sqrt_dk
                sc = sc - dist_b[b] * scales_ref[l, h] + negm_b[b]  # bias + mask
                sc = sc - jnp.max(sc, axis=-1, keepdims=True)
                p = jnp.exp(sc)
                p = p / jnp.sum(p, axis=-1, keepdims=True)
                heads.append(jnp.dot(p, v_h, preferred_element_type=jnp.float32))
            batch_rows.append(jnp.concatenate(heads, axis=-1))     # [S, D_MODEL]
        attn = jnp.concatenate(batch_rows, axis=0)                 # [B*S, D_MODEL]

        # output projection + residual + LayerNorm (post-LN)
        o = jnp.dot(attn, wo_ref[l],
                    preferred_element_type=jnp.float32) + bo_ref[l]
        x = layernorm(x + o, g1_ref[l], be1_ref[l])

        # FFN (ReLU) + residual + LayerNorm
        hff = jnp.dot(x, w1_ref[l], preferred_element_type=jnp.float32) + bff1_ref[l]
        hff = jnp.maximum(hff, 0.0)
        hff = jnp.dot(hff, w2_ref[l], preferred_element_type=jnp.float32) + bff2_ref[l]
        x = layernorm(x + hff, g2_ref[l], be2_ref[l])

    # ---- only the CLS rows reach the final LN + generator ----
    x_cls = jnp.concatenate([x[b * S:b * S + 1, :] for b in range(B)], axis=0)
    x_cls = layernorm(x_cls, gf_ref[...], bfn_ref[...])            # [B, D_MODEL]

    logits = jnp.dot(x_cls, wg_ref[...],
                     preferred_element_type=jnp.float32) + bg_ref[...]   # [B, N_OUT]
    m = jnp.max(logits, axis=-1, keepdims=True)
    z = logits - m
    out_ref[...] = z - jnp.log(jnp.sum(jnp.exp(z), axis=-1, keepdims=True))


# ---------------- wrapper ----------------
def forward(params, src, src_mask, dist):
    src2d = src.reshape(B * S, F_IN)
    vmem = pl.BlockSpec(memory_space=pltpu.MemorySpace.VMEM)
    smem = pl.BlockSpec(memory_space=pltpu.MemorySpace.SMEM)
    return pl.pallas_call(
        _fused_forward_kernel,
        out_shape=jax.ShapeDtypeStruct((B, N_OUT), jnp.float32),
        in_specs=[vmem] * 23 + [smem],
        out_specs=vmem,
    )(
        src2d, dist, src_mask,
        params["Ws"], params["bs"], params["Wf"], params["bf"],
        params["Wqkv"], params["bqkv"], params["Wo"], params["bo"],
        params["W1"], params["bff1"], params["W2"], params["bff2"],
        params["g1"], params["be1"], params["g2"], params["be2"],
        params["gf"], params["bfn"], params["Wg"], params["bg"],
        params["scales"],
    )


# ---------------- deterministic parameter init (layer-stacked) ----------------
def init_params(key):
    keys = iter(jax.random.split(key, 16))

    def w(shape, scale=0.08):
        return (scale * jax.random.normal(next(keys), shape)).astype(jnp.float32)

    zeros = lambda shape: jnp.zeros(shape, jnp.float32)
    ones = lambda shape: jnp.ones(shape, jnp.float32)

    params = {
        # embeddings
        "Ws": w((F_IN, D_MODEL)), "bs": zeros((1, D_MODEL)),
        "Wf": w((F_IN, D_MODEL)), "bf": zeros((1, D_MODEL)),
        # encoder layers, stacked along the leading (layer) axis
        "Wqkv": w((N_LAYERS, D_MODEL, 3 * D_MODEL)),
        "bqkv": zeros((N_LAYERS, 1, 3 * D_MODEL)),
        "Wo": w((N_LAYERS, D_MODEL, D_MODEL)), "bo": zeros((N_LAYERS, 1, D_MODEL)),
        "W1": w((N_LAYERS, D_MODEL, D_FF)), "bff1": zeros((N_LAYERS, 1, D_FF)),
        "W2": w((N_LAYERS, D_FF, D_MODEL)), "bff2": zeros((N_LAYERS, 1, D_MODEL)),
        "g1": ones((N_LAYERS, 1, D_MODEL)), "be1": zeros((N_LAYERS, 1, D_MODEL)),
        "g2": ones((N_LAYERS, 1, D_MODEL)), "be2": zeros((N_LAYERS, 1, D_MODEL)),
        # per-layer per-head distance scales -> the "multi-scale" part
        "scales": jnp.stack(
            [jnp.array([1.0, 0.5, 0.25, 0.125], jnp.float32) / (l + 1)
             for l in range(N_LAYERS)]),
        # final LN + generator
        "gf": ones((1, D_MODEL)), "bfn": zeros((1, D_MODEL)),
        "Wg": w((D_MODEL, N_OUT)), "bg": zeros((1, N_OUT)),
    }
    return params


if __name__ == "__main__":
    key = jax.random.PRNGKey(0)
    k_src, k_coord, k_param = jax.random.split(key, 3)

    src = jax.random.normal(k_src, (B, S, F_IN), jnp.float32)
    coords = jax.random.normal(k_coord, (B, S, 3), jnp.float32)
    dist = jnp.sqrt(
        jnp.sum((coords[:, :, None, :] - coords[:, None, :, :]) ** 2, axis=-1) + 1e-12
    )                                                            # [B, S, S]
    src_mask = jnp.ones((B, 1, S), jnp.float32).at[1, 0, 6:].set(0.0)  # [B, 1, S]

    params = init_params(k_param)

    out = jax.jit(forward)(params, src, src_mask, dist)
    out = jax.block_until_ready(out)
    assert out.shape == (B, N_OUT) and out.dtype == jnp.float32
    assert bool(jnp.all(jnp.isfinite(out)))
    print("KERNEL_OK")
</pallas_src>

<mosaic_0001>
module attributes {stable_mosaic.version = 11 : i64} {
  func.func @_fused_forward_kernel(%arg0: memref<16x16xf32, #tpu.memory_space<vmem>>, %arg1: memref<2x8x8xf32, #tpu.memory_space<vmem>>, %arg2: memref<2x1x8xf32, #tpu.memory_space<vmem>>, %arg3: memref<16x32xf32, #tpu.memory_space<vmem>>, %arg4: memref<1x32xf32, #tpu.memory_space<vmem>>, %arg5: memref<16x32xf32, #tpu.memory_space<vmem>>, %arg6: memref<1x32xf32, #tpu.memory_space<vmem>>, %arg7: memref<2x32x96xf32, #tpu.memory_space<vmem>>, %arg8: memref<2x1x96xf32, #tpu.memory_space<vmem>>, %arg9: memref<2x32x32xf32, #tpu.memory_space<vmem>>, %arg10: memref<2x1x32xf32, #tpu.memory_space<vmem>>, %arg11: memref<2x32x64xf32, #tpu.memory_space<vmem>>, %arg12: memref<2x1x64xf32, #tpu.memory_space<vmem>>, %arg13: memref<2x64x32xf32, #tpu.memory_space<vmem>>, %arg14: memref<2x1x32xf32, #tpu.memory_space<vmem>>, %arg15: memref<2x1x32xf32, #tpu.memory_space<vmem>>, %arg16: memref<2x1x32xf32, #tpu.memory_space<vmem>>, %arg17: memref<2x1x32xf32, #tpu.memory_space<vmem>>, %arg18: memref<2x1x32xf32, #tpu.memory_space<vmem>>, %arg19: memref<1x32xf32, #tpu.memory_space<vmem>>, %arg20: memref<1x32xf32, #tpu.memory_space<vmem>>, %arg21: memref<32x8xf32, #tpu.memory_space<vmem>>, %arg22: memref<1x8xf32, #tpu.memory_space<vmem>>, %arg23: memref<2x4xf32, #tpu.memory_space<smem>>, %arg24: memref<2x8xf32, #tpu.memory_space<vmem>>) attributes {dimension_semantics = [], scalar_prefetch = 0 : i64, scratch_operands = 0 : i64, tpu.core_type = #tpu.core_type<tc>} {
    %c0 = arith.constant 0 : index
    %c0_0 = arith.constant 0 : index
    %0 = vector.load %arg0[%c0, %c0_0] : memref<16x16xf32, #tpu.memory_space<vmem>>, vector<16x16xf32>
    %c0_1 = arith.constant 0 : index
    %c0_2 = arith.constant 0 : index
    %1 = vector.load %arg3[%c0_1, %c0_2] : memref<16x32xf32, #tpu.memory_space<vmem>>, vector<16x32xf32>
    %c0_3 = arith.constant 0 : index
    %c0_4 = arith.constant 0 : index
    %2 = vector.load %arg5[%c0_3, %c0_4] : memref<16x32xf32, #tpu.memory_space<vmem>>, vector<16x32xf32>
    %3 = arith.addf %1, %2 : vector<16x32xf32>
    %c0_5 = arith.constant 0 : index
    %c0_6 = arith.constant 0 : index
    %4 = vector.load %arg4[%c0_5, %c0_6] : memref<1x32xf32, #tpu.memory_space<vmem>>, vector<1x32xf32>
    %c0_7 = arith.constant 0 : index
    %c0_8 = arith.constant 0 : index
    %5 = vector.load %arg6[%c0_7, %c0_8] : memref<1x32xf32, #tpu.memory_space<vmem>>, vector<1x32xf32>
    %6 = arith.addf %4, %5 : vector<1x32xf32>
    %cst = arith.constant dense<0.000000e+00> : vector<16x32xf32>
    %7 = tpu.matmul %0, %3, %cst {dimension_numbers = #tpu.dot_dimension_numbers<[1], [0], [0], [1], [0, 0, 1, 1], [], []>} : vector<16x16xf32>, vector<16x32xf32>, vector<16x32xf32> -> vector<16x32xf32>
    %8 = vector.broadcast %6 : vector<1x32xf32> to vector<16x32xf32>
    %9 = arith.addf %7, %8 : vector<16x32xf32>
    %c0_9 = arith.constant 0 : index
    %c0_10 = arith.constant 0 : index
    %c0_11 = arith.constant 0 : index
    %10 = vector.load %arg1[%c0_9, %c0_10, %c0_11] : memref<2x8x8xf32, #tpu.memory_space<vmem>>, vector<1x8x8xf32>
    %11 = vector.shape_cast %10 : vector<1x8x8xf32> to vector<8x8xf32>
    %c1 = arith.constant 1 : index
    %c0_12 = arith.constant 0 : index
    %c0_13 = arith.constant 0 : index
    %12 = vector.load %arg1[%c1, %c0_12, %c0_13] : memref<2x8x8xf32, #tpu.memory_space<vmem>>, vector<1x8x8xf32>
    %13 = vector.shape_cast %12 : vector<1x8x8xf32> to vector<8x8xf32>
    %c0_14 = arith.constant 0 : index
    %c0_15 = arith.constant 0 : index
    %c0_16 = arith.constant 0 : index
    %14 = vector.load %arg2[%c0_14, %c0_15, %c0_16] : memref<2x1x8xf32, #tpu.memory_space<vmem>>, vector<1x1x8xf32>
    %15 = vector.shape_cast %14 : vector<1x1x8xf32> to vector<1x8xf32>
    %cst_17 = arith.constant 0.000000e+00 : f32
    %16 = vector.broadcast %cst_17 : f32 to vector<1x8xf32>
    %17 = arith.cmpf ogt, %15, %16 : vector<1x8xf32>
    %cst_18 = arith.constant 0.000000e+00 : f32
    %cst_19 = arith.constant -1.000000e+09 : f32
    %18 = vector.broadcast %cst_18 : f32 to vector<1x8xf32>
    %19 = vector.broadcast %cst_19 : f32 to vector<1x8xf32>
    %20 = arith.select %17, %18, %19 : vector<1x8xi1>, vector<1x8xf32>
    %c1_20 = arith.constant 1 : index
    %c0_21 = arith.constant 0 : index
    %c0_22 = arith.constant 0 : index
    %21 = vector.load %arg2[%c1_20, %c0_21, %c0_22] : memref<2x1x8xf32, #tpu.memory_space<vmem>>, vector<1x1x8xf32>
    %22 = vector.shape_cast %21 : vector<1x1x8xf32> to vector<1x8xf32>
    %cst_23 = arith.constant 0.000000e+00 : f32
    %23 = vector.broadcast %cst_23 : f32 to vector<1x8xf32>
    %24 = arith.cmpf ogt, %22, %23 : vector<1x8xf32>
    %cst_24 = arith.constant 0.000000e+00 : f32
    %cst_25 = arith.constant -1.000000e+09 : f32
    %25 = vector.broadcast %cst_24 : f32 to vector<1x8xf32>
    %26 = vector.broadcast %cst_25 : f32 to vector<1x8xf32>
    %27 = arith.select %24, %25, %26 : vector<1x8xi1>, vector<1x8xf32>
    %c0_26 = arith.constant 0 : index
    %c0_27 = arith.constant 0 : index
    %c0_28 = arith.constant 0 : index
    %28 = vector.load %arg7[%c0_26, %c0_27, %c0_28] : memref<2x32x96xf32, #tpu.memory_space<vmem>>, vector<1x32x96xf32>
    %29 = vector.shape_cast %28 : vector<1x32x96xf32> to vector<32x96xf32>
    %cst_29 = arith.constant dense<0.000000e+00> : vector<16x96xf32>
    %30 = tpu.matmul %9, %29, %cst_29 {dimension_numbers = #tpu.dot_dimension_numbers<[1], [0], [0], [1], [0, 0, 1, 1], [], []>} : vector<16x32xf32>, vector<32x96xf32>, vector<16x96xf32> -> vector<16x96xf32>
    %c0_30 = arith.constant 0 : index
    %c0_31 = arith.constant 0 : index
    %c0_32 = arith.constant 0 : index
    %31 = vector.load %arg8[%c0_30, %c0_31, %c0_32] : memref<2x1x96xf32, #tpu.memory_space<vmem>>, vector<1x1x96xf32>
    %32 = vector.shape_cast %31 : vector<1x1x96xf32> to vector<1x96xf32>
    %33 = vector.broadcast %32 : vector<1x96xf32> to vector<16x96xf32>
    %34 = arith.addf %30, %33 : vector<16x96xf32>
    %35 = vector.extract_strided_slice %34 {offsets = [0, 0], sizes = [16, 32], strides = [1, 1]} : vector<16x96xf32> to vector<16x32xf32>
    %36 = vector.extract_strided_slice %34 {offsets = [0, 32], sizes = [16, 32], strides = [1, 1]} : vector<16x96xf32> to vector<16x32xf32>
    %37 = vector.extract_strided_slice %34 {offsets = [0, 64], sizes = [16, 32], strides = [1, 1]} : vector<16x96xf32> to vector<16x32xf32>
    %38 = vector.extract_strided_slice %35 {offsets = [0, 0], sizes = [8, 8], strides = [1, 1]} : vector<16x32xf32> to vector<8x8xf32>
    %39 = vector.extract_strided_slice %36 {offsets = [0, 0], sizes = [8, 8], strides = [1, 1]} : vector<16x32xf32> to vector<8x8xf32>
    %40 = vector.extract_strided_slice %37 {offsets = [0, 0], sizes = [8, 8], strides = [1, 1]} : vector<16x32xf32> to vector<8x8xf32>
    %41 = tpu.transpose %39, [1, 0] : vector<8x8xf32> -> vector<8x8xf32>
    %cst_33 = arith.constant dense<0.000000e+00> : vector<8x8xf32>
    %42 = tpu.matmul %38, %41, %cst_33 {dimension_numbers = #tpu.dot_dimension_numbers<[1], [0], [0], [1], [0, 0, 1, 1], [], []>} : vector<8x8xf32>, vector<8x8xf32>, vector<8x8xf32> -> vector<8x8xf32>
    %cst_34 = arith.constant 0.353553385 : f32
    %43 = vector.broadcast %cst_34 : f32 to vector<8x8xf32>
    %44 = arith.mulf %42, %43 : vector<8x8xf32>
    %c0_35 = arith.constant 0 : index
    %c0_36 = arith.constant 0 : index
    %45 = memref.load %arg23[%c0_35, %c0_36] : memref<2x4xf32, #tpu.memory_space<smem>>
    %46 = vector.broadcast %45 : f32 to vector<8x8xf32>
    %47 = arith.mulf %11, %46 : vector<8x8xf32>
    %48 = arith.subf %44, %47 : vector<8x8xf32>
    %49 = vector.broadcast %20 : vector<1x8xf32> to vector<8x8xf32>
    %50 = arith.addf %48, %49 : vector<8x8xf32>
    %cst_37 = arith.constant dense<0xFF800000> : vector<8xf32>
    %51 = vector.multi_reduction <maximumf>, %50, %cst_37 [1] : vector<8x8xf32> to vector<8xf32>
    %52 = vector.shape_cast %51 : vector<8xf32> to vector<8x1xf32>
    %53 = vector.broadcast %52 : vector<8x1xf32> to vector<8x8xf32>
    %54 = arith.subf %50, %53 : vector<8x8xf32>
    %55 = math.exp %54 : vector<8x8xf32>
    %cst_38 = arith.constant dense<0.000000e+00> : vector<8xf32>
    %56 = vector.multi_reduction <add>, %55, %cst_38 [1] : vector<8x8xf32> to vector<8xf32>
    %57 = vector.shape_cast %56 : vector<8xf32> to vector<8x1xf32>
    %58 = vector.broadcast %57 : vector<8x1xf32> to vector<8x8xf32>
    %59 = arith.divf %55, %58 : vector<8x8xf32>
    %cst_39 = arith.constant dense<0.000000e+00> : vector<8x8xf32>
    %60 = tpu.matmul %59, %40, %cst_39 {dimension_numbers = #tpu.dot_dimension_numbers<[1], [0], [0], [1], [0, 0, 1, 1], [], []>} : vector<8x8xf32>, vector<8x8xf32>, vector<8x8xf32> -> vector<8x8xf32>
    %61 = vector.extract_strided_slice %35 {offsets = [0, 8], sizes = [8, 8], strides = [1, 1]} : vector<16x32xf32> to vector<8x8xf32>
    %62 = vector.extract_strided_slice %36 {offsets = [0, 8], sizes = [8, 8], strides = [1, 1]} : vector<16x32xf32> to vector<8x8xf32>
    %63 = vector.extract_strided_slice %37 {offsets = [0, 8], sizes = [8, 8], strides = [1, 1]} : vector<16x32xf32> to vector<8x8xf32>
    %64 = tpu.transpose %62, [1, 0] : vector<8x8xf32> -> vector<8x8xf32>
    %cst_40 = arith.constant dense<0.000000e+00> : vector<8x8xf32>
    %65 = tpu.matmul %61, %64, %cst_40 {dimension_numbers = #tpu.dot_dimension_numbers<[1], [0], [0], [1], [0, 0, 1, 1], [], []>} : vector<8x8xf32>, vector<8x8xf32>, vector<8x8xf32> -> vector<8x8xf32>
    %cst_41 = arith.constant 0.353553385 : f32
    %66 = vector.broadcast %cst_41 : f32 to vector<8x8xf32>
    %67 = arith.mulf %65, %66 : vector<8x8xf32>
    %c0_42 = arith.constant 0 : index
    %c1_43 = arith.constant 1 : index
    %68 = memref.load %arg23[%c0_42, %c1_43] : memref<2x4xf32, #tpu.memory_space<smem>>
    %69 = vector.broadcast %68 : f32 to vector<8x8xf32>
    %70 = arith.mulf %11, %69 : vector<8x8xf32>
    %71 = arith.subf %67, %70 : vector<8x8xf32>
    %72 = vector.broadcast %20 : vector<1x8xf32> to vector<8x8xf32>
    %73 = arith.addf %71, %72 : vector<8x8xf32>
    %cst_44 = arith.constant dense<0xFF800000> : vector<8xf32>
    %74 = vector.multi_reduction <maximumf>, %73, %cst_44 [1] : vector<8x8xf32> to vector<8xf32>
    %75 = vector.shape_cast %74 : vector<8xf32> to vector<8x1xf32>
    %76 = vector.broadcast %75 : vector<8x1xf32> to vector<8x8xf32>
    %77 = arith.subf %73, %76 : vector<8x8xf32>
    %78 = math.exp %77 : vector<8x8xf32>
    %cst_45 = arith.constant dense<0.000000e+00> : vector<8xf32>
    %79 = vector.multi_reduction <add>, %78, %cst_45 [1] : vector<8x8xf32> to vector<8xf32>
    %80 = vector.shape_cast %79 : vector<8xf32> to vector<8x1xf32>
    %81 = vector.broadcast %80 : vector<8x1xf32> to vector<8x8xf32>
    %82 = arith.divf %78, %81 : vector<8x8xf32>
    %cst_46 = arith.constant dense<0.000000e+00> : vector<8x8xf32>
    %83 = tpu.matmul %82, %63, %cst_46 {dimension_numbers = #tpu.dot_dimension_numbers<[1], [0], [0], [1], [0, 0, 1, 1], [], []>} : vector<8x8xf32>, vector<8x8xf32>, vector<8x8xf32> -> vector<8x8xf32>
    %84 = vector.extract_strided_slice %35 {offsets = [0, 16], sizes = [8, 8], strides = [1, 1]} : vector<16x32xf32> to vector<8x8xf32>
    %85 = vector.extract_strided_slice %36 {offsets = [0, 16], sizes = [8, 8], strides = [1, 1]} : vector<16x32xf32> to vector<8x8xf32>
    %86 = vector.extract_strided_slice %37 {offsets = [0, 16], sizes = [8, 8], strides = [1, 1]} : vector<16x32xf32> to vector<8x8xf32>
    %87 = tpu.transpose %85, [1, 0] : vector<8x8xf32> -> vector<8x8xf32>
    %cst_47 = arith.constant dense<0.000000e+00> : vector<8x8xf32>
    %88 = tpu.matmul %84, %87, %cst_47 {dimension_numbers = #tpu.dot_dimension_numbers<[1], [0], [0], [1], [0, 0, 1, 1], [], []>} : vector<8x8xf32>, vector<8x8xf32>, vector<8x8xf32> -> vector<8x8xf32>
    %cst_48 = arith.constant 0.353553385 : f32
    %89 = vector.broadcast %cst_48 : f32 to vector<8x8xf32>
    %90 = arith.mulf %88, %89 : vector<8x8xf32>
    %c0_49 = arith.constant 0 : index
    %c2 = arith.constant 2 : index
    %91 = memref.load %arg23[%c0_49, %c2] : memref<2x4xf32, #tpu.memory_space<smem>>
    %92 = vector.broadcast %91 : f32 to vector<8x8xf32>
    %93 = arith.mulf %11, %92 : vector<8x8xf32>
    %94 = arith.subf %90, %93 : vector<8x8xf32>
    %95 = vector.broadcast %20 : vector<1x8xf32> to vector<8x8xf32>
    %96 = arith.addf %94, %95 : vector<8x8xf32>
    %cst_50 = arith.constant dense<0xFF800000> : vector<8xf32>
    %97 = vector.multi_reduction <maximumf>, %96, %cst_50 [1] : vector<8x8xf32> to vector<8xf32>
    %98 = vector.shape_cast %97 : vector<8xf32> to vector<8x1xf32>
    %99 = vector.broadcast %98 : vector<8x1xf32> to vector<8x8xf32>
    %100 = arith.subf %96, %99 : vector<8x8xf32>
    %101 = math.exp %100 : vector<8x8xf32>
    %cst_51 = arith.constant dense<0.000000e+00> : vector<8xf32>
    %102 = vector.multi_reduction <add>, %101, %cst_51 [1] : vector<8x8xf32> to vector<8xf32>
    %103 = vector.shape_cast %102 : vector<8xf32> to vector<8x1xf32>
    %104 = vector.broadcast %103 : vector<8x1xf32> to vector<8x8xf32>
    %105 = arith.divf %101, %104 : vector<8x8xf32>
    %cst_52 = arith.constant dense<0.000000e+00> : vector<8x8xf32>
    %106 = tpu.matmul %105, %86, %cst_52 {dimension_numbers = #tpu.dot_dimension_numbers<[1], [0], [0], [1], [0, 0, 1, 1], [], []>} : vector<8x8xf32>, vector<8x8xf32>, vector<8x8xf32> -> vector<8x8xf32>
    %107 = vector.extract_strided_slice %35 {offsets = [0, 24], sizes = [8, 8], strides = [1, 1]} : vector<16x32xf32> to vector<8x8xf32>
    %108 = vector.extract_strided_slice %36 {offsets = [0, 24], sizes = [8, 8], strides = [1, 1]} : vector<16x32xf32> to vector<8x8xf32>
    %109 = vector.extract_strided_slice %37 {offsets = [0, 24], sizes = [8, 8], strides = [1, 1]} : vector<16x32xf32> to vector<8x8xf32>
    %110 = tpu.transpose %108, [1, 0] : vector<8x8xf32> -> vector<8x8xf32>
    %cst_53 = arith.constant dense<0.000000e+00> : vector<8x8xf32>
    %111 = tpu.matmul %107, %110, %cst_53 {dimension_numbers = #tpu.dot_dimension_numbers<[1], [0], [0], [1], [0, 0, 1, 1], [], []>} : vector<8x8xf32>, vector<8x8xf32>, vector<8x8xf32> -> vector<8x8xf32>
    %cst_54 = arith.constant 0.353553385 : f32
    %112 = vector.broadcast %cst_54 : f32 to vector<8x8xf32>
    %113 = arith.mulf %111, %112 : vector<8x8xf32>
    %c0_55 = arith.constant 0 : index
    %c3 = arith.constant 3 : index
    %114 = memref.load %arg23[%c0_55, %c3] : memref<2x4xf32, #tpu.memory_space<smem>>
    %115 = vector.broadcast %114 : f32 to vector<8x8xf32>
    %116 = arith.mulf %11, %115 : vector<8x8xf32>
    %117 = arith.subf %113, %116 : vector<8x8xf32>
    %118 = vector.broadcast %20 : vector<1x8xf32> to vector<8x8xf32>
    %119 = arith.addf %117, %118 : vector<8x8xf32>
    %cst_56 = arith.constant dense<0xFF800000> : vector<8xf32>
    %120 = vector.multi_reduction <maximumf>, %119, %cst_56 [1] : vector<8x8xf32> to vector<8xf32>
    %121 = vector.shape_cast %120 : vector<8xf32> to vector<8x1xf32>
    %122 = vector.broadcast %121 : vector<8x1xf32> to vector<8x8xf32>
    %123 = arith.subf %119, %122 : vector<8x8xf32>
    %124 = math.exp %123 : vector<8x8xf32>
    %cst_57 = arith.constant dense<0.000000e+00> : vector<8xf32>
    %125 = vector.multi_reduction <add>, %124, %cst_57 [1] : vector<8x8xf32> to vector<8xf32>
    %126 = vector.shape_cast %125 : vector<8xf32> to vector<8x1xf32>
    %127 = vector.broadcast %126 : vector<8x1xf32> to vector<8x8xf32>
    %128 = arith.divf %124, %127 : vector<8x8xf32>
    %cst_58 = arith.constant dense<0.000000e+00> : vector<8x8xf32>
    %129 = tpu.matmul %128, %109, %cst_58 {dimension_numbers = #tpu.dot_dimension_numbers<[1], [0], [0], [1], [0, 0, 1, 1], [], []>} : vector<8x8xf32>, vector<8x8xf32>, vector<8x8xf32> -> vector<8x8xf32>
    %130 = tpu.concatenate %60, %83, %106, %129 in 1 : vector<8x8xf32>, vector<8x8xf32>, vector<8x8xf32>, vector<8x8xf32> -> vector<8x32xf32>
    %131 = vector.extract_strided_slice %35 {offsets = [8, 0], sizes = [8, 8], strides = [1, 1]} : vector<16x32xf32> to vector<8x8xf32>
    %132 = vector.extract_strided_slice %36 {offsets = [8, 0], sizes = [8, 8], strides = [1, 1]} : vector<16x32xf32> to vector<8x8xf32>
    %133 = vector.extract_strided_slice %37 {offsets = [8, 0], sizes = [8, 8], strides = [1, 1]} : vector<16x32xf32> to vector<8x8xf32>
    %134 = tpu.transpose %132, [1, 0] : vector<8x8xf32> -> vector<8x8xf32>
    %cst_59 = arith.constant dense<0.000000e+00> : vector<8x8xf32>
    %135 = tpu.matmul %131, %134, %cst_59 {dimension_numbers = #tpu.dot_dimension_numbers<[1], [0], [0], [1], [0, 0, 1, 1], [], []>} : vector<8x8xf32>, vector<8x8xf32>, vector<8x8xf32> -> vector<8x8xf32>
    %cst_60 = arith.constant 0.353553385 : f32
    %136 = vector.broadcast %cst_60 : f32 to vector<8x8xf32>
    %137 = arith.mulf %135, %136 : vector<8x8xf32>
    %c0_61 = arith.constant 0 : index
    %c0_62 = arith.constant 0 : index
    %138 = memref.load %arg23[%c0_61, %c0_62] : memref<2x4xf32, #tpu.memory_space<smem>>
    %139 = vector.broadcast %138 : f32 to vector<8x8xf32>
    %140 = arith.mulf %13, %139 : vector<8x8xf32>
    %141 = arith.subf %137, %140 : vector<8x8xf32>
    %142 = vector.broadcast %27 : vector<1x8xf32> to vector<8x8xf32>
    %143 = arith.addf %141, %142 : vector<8x8xf32>
    %cst_63 = arith.constant dense<0xFF800000> : vector<8xf32>
    %144 = vector.multi_reduction <maximumf>, %143, %cst_63 [1] : vector<8x8xf32> to vector<8xf32>
    %145 = vector.shape_cast %144 : vector<8xf32> to vector<8x1xf32>
    %146 = vector.broadcast %145 : vector<8x1xf32> to vector<8x8xf32>
    %147 = arith.subf %143, %146 : vector<8x8xf32>
    %148 = math.exp %147 : vector<8x8xf32>
    %cst_64 = arith.constant dense<0.000000e+00> : vector<8xf32>
    %149 = vector.multi_reduction <add>, %148, %cst_64 [1] : vector<8x8xf32> to vector<8xf32>
    %150 = vector.shape_cast %149 : vector<8xf32> to vector<8x1xf32>
    %151 = vector.broadcast %150 : vector<8x1xf32> to vector<8x8xf32>
    %152 = arith.divf %148, %151 : vector<8x8xf32>
    %cst_65 = arith.constant dense<0.000000e+00> : vector<8x8xf32>
    %153 = tpu.matmul %152, %133, %cst_65 {dimension_numbers = #tpu.dot_dimension_numbers<[1], [0], [0], [1], [0, 0, 1, 1], [], []>} : vector<8x8xf32>, vector<8x8xf32>, vector<8x8xf32> -> vector<8x8xf32>
    %154 = vector.extract_strided_slice %35 {offsets = [8, 8], sizes = [8, 8], strides = [1, 1]} : vector<16x32xf32> to vector<8x8xf32>
    %155 = vector.extract_strided_slice %36 {offsets = [8, 8], sizes = [8, 8], strides = [1, 1]} : vector<16x32xf32> to vector<8x8xf32>
    %156 = vector.extract_strided_slice %37 {offsets = [8, 8], sizes = [8, 8], strides = [1, 1]} : vector<16x32xf32> to vector<8x8xf32>
    %157 = tpu.transpose %155, [1, 0] : vector<8x8xf32> -> vector<8x8xf32>
    %cst_66 = arith.constant dense<0.000000e+00> : vector<8x8xf32>
    %158 = tpu.matmul %154, %157, %cst_66 {dimension_numbers = #tpu.dot_dimension_numbers<[1], [0], [0], [1], [0, 0, 1, 1], [], []>} : vector<8x8xf32>, vector<8x8xf32>, vector<8x8xf32> -> vector<8x8xf32>
    %cst_67 = arith.constant 0.353553385 : f32
    %159 = vector.broadcast %cst_67 : f32 to vector<8x8xf32>
    %160 = arith.mulf %158, %159 : vector<8x8xf32>
    %c0_68 = arith.constant 0 : index
    %c1_69 = arith.constant 1 : index
    %161 = memref.load %arg23[%c0_68, %c1_69] : memref<2x4xf32, #tpu.memory_space<smem>>
    %162 = vector.broadcast %161 : f32 to vector<8x8xf32>
    %163 = arith.mulf %13, %162 : vector<8x8xf32>
    %164 = arith.subf %160, %163 : vector<8x8xf32>
    %165 = vector.broadcast %27 : vector<1x8xf32> to vector<8x8xf32>
    %166 = arith.addf %164, %165 : vector<8x8xf32>
    %cst_70 = arith.constant dense<0xFF800000> : vector<8xf32>
    %167 = vector.multi_reduction <maximumf>, %166, %cst_70 [1] : vector<8x8xf32> to vector<8xf32>
    %168 = vector.shape_cast %167 : vector<8xf32> to vector<8x1xf32>
    %169 = vector.broadcast %168 : vector<8x1xf32> to vector<8x8xf32>
    %170 = arith.subf %166, %169 : vector<8x8xf32>
    %171 = math.exp %170 : vector<8x8xf32>
    %cst_71 = arith.constant dense<0.000000e+00> : vector<8xf32>
    %172 = vector.multi_reduction <add>, %171, %cst_71 [1] : vector<8x8xf32> to vector<8xf32>
    %173 = vector.shape_cast %172 : vector<8xf32> to vector<8x1xf32>
    %174 = vector.broadcast %173 : vector<8x1xf32> to vector<8x8xf32>
    %175 = arith.divf %171, %174 : vector<8x8xf32>
    %cst_72 = arith.constant dense<0.000000e+00> : vector<8x8xf32>
    %176 = tpu.matmul %175, %156, %cst_72 {dimension_numbers = #tpu.dot_dimension_numbers<[1], [0], [0], [1], [0, 0, 1, 1], [], []>} : vector<8x8xf32>, vector<8x8xf32>, vector<8x8xf32> -> vector<8x8xf32>
    %177 = vector.extract_strided_slice %35 {offsets = [8, 16], sizes = [8, 8], strides = [1, 1]} : vector<16x32xf32> to vector<8x8xf32>
    %178 = vector.extract_strided_slice %36 {offsets = [8, 16], sizes = [8, 8], strides = [1, 1]} : vector<16x32xf32> to vector<8x8xf32>
    %179 = vector.extract_strided_slice %37 {offsets = [8, 16], sizes = [8, 8], strides = [1, 1]} : vector<16x32xf32> to vector<8x8xf32>
    %180 = tpu.transpose %178, [1, 0] : vector<8x8xf32> -> vector<8x8xf32>
    %cst_73 = arith.constant dense<0.000000e+00> : vector<8x8xf32>
    %181 = tpu.matmul %177, %180, %cst_73 {dimension_numbers = #tpu.dot_dimension_numbers<[1], [0], [0], [1], [0, 0, 1, 1], [], []>} : vector<8x8xf32>, vector<8x8xf32>, vector<8x8xf32> -> vector<8x8xf32>
    %cst_74 = arith.constant 0.353553385 : f32
    %182 = vector.broadcast %cst_74 : f32 to vector<8x8xf32>
    %183 = arith.mulf %181, %182 : vector<8x8xf32>
    %c0_75 = arith.constant 0 : index
    %c2_76 = arith.constant 2 : index
    %184 = memref.load %arg23[%c0_75, %c2_76] : memref<2x4xf32, #tpu.memory_space<smem>>
    %185 = vector.broadcast %184 : f32 to vector<8x8xf32>
    %186 = arith.mulf %13, %185 : vector<8x8xf32>
    %187 = arith.subf %183, %186 : vector<8x8xf32>
    %188 = vector.broadcast %27 : vector<1x8xf32> to vector<8x8xf32>
    %189 = arith.addf %187, %188 : vector<8x8xf32>
    %cst_77 = arith.constant dense<0xFF800000> : vector<8xf32>
    %190 = vector.multi_reduction <maximumf>, %189, %cst_77 [1] : vector<8x8xf32> to vector<8xf32>
    %191 = vector.shape_cast %190 : vector<8xf32> to vector<8x1xf32>
    %192 = vector.broadcast %191 : vector<8x1xf32> to vector<8x8xf32>
    %193 = arith.subf %189, %192 : vector<8x8xf32>
    %194 = math.exp %193 : vector<8x8xf32>
    %cst_78 = arith.constant dense<0.000000e+00> : vector<8xf32>
    %195 = vector.multi_reduction <add>, %194, %cst_78 [1] : vector<8x8xf32> to vector<8xf32>
    %196 = vector.shape_cast %195 : vector<8xf32> to vector<8x1xf32>
    %197 = vector.broadcast %196 : vector<8x1xf32> to vector<8x8xf32>
    %198 = arith.divf %194, %197 : vector<8x8xf32>
    %cst_79 = arith.constant dense<0.000000e+00> : vector<8x8xf32>
    %199 = tpu.matmul %198, %179, %cst_79 {dimension_numbers = #tpu.dot_dimension_numbers<[1], [0], [0], [1], [0, 0, 1, 1], [], []>} : vector<8x8xf32>, vector<8x8xf32>, vector<8x8xf32> -> vector<8x8xf32>
    %200 = vector.extract_strided_slice %35 {offsets = [8, 24], sizes = [8, 8], strides = [1, 1]} : vector<16x32xf32> to vector<8x8xf32>
    %201 = vector.extract_strided_slice %36 {offsets = [8, 24], sizes = [8, 8], strides = [1, 1]} : vector<16x32xf32> to vector<8x8xf32>
    %202 = vector.extract_strided_slice %37 {offsets = [8, 24], sizes = [8, 8], strides = [1, 1]} : vector<16x32xf32> to vector<8x8xf32>
    %203 = tpu.transpose %201, [1, 0] : vector<8x8xf32> -> vector<8x8xf32>
    %cst_80 = arith.constant dense<0.000000e+00> : vector<8x8xf32>
    %204 = tpu.matmul %200, %203, %cst_80 {dimension_numbers = #tpu.dot_dimension_numbers<[1], [0], [0], [1], [0, 0, 1, 1], [], []>} : vector<8x8xf32>, vector<8x8xf32>, vector<8x8xf32> -> vector<8x8xf32>
    %cst_81 = arith.constant 0.353553385 : f32
    %205 = vector.broadcast %cst_81 : f32 to vector<8x8xf32>
    %206 = arith.mulf %204, %205 : vector<8x8xf32>
    %c0_82 = arith.constant 0 : index
    %c3_83 = arith.constant 3 : index
    %207 = memref.load %arg23[%c0_82, %c3_83] : memref<2x4xf32, #tpu.memory_space<smem>>
    %208 = vector.broadcast %207 : f32 to vector<8x8xf32>
    %209 = arith.mulf %13, %208 : vector<8x8xf32>
    %210 = arith.subf %206, %209 : vector<8x8xf32>
    %211 = vector.broadcast %27 : vector<1x8xf32> to vector<8x8xf32>
    %212 = arith.addf %210, %211 : vector<8x8xf32>
    %cst_84 = arith.constant dense<0xFF800000> : vector<8xf32>
    %213 = vector.multi_reduction <maximumf>, %212, %cst_84 [1] : vector<8x8xf32> to vector<8xf32>
    %214 = vector.shape_cast %213 : vector<8xf32> to vector<8x1xf32>
    %215 = vector.broadcast %214 : vector<8x1xf32> to vector<8x8xf32>
    %216 = arith.subf %212, %215 : vector<8x8xf32>
    %217 = math.exp %216 : vector<8x8xf32>
    %cst_85 = arith.constant dense<0.000000e+00> : vector<8xf32>
    %218 = vector.multi_reduction <add>, %217, %cst_85 [1] : vector<8x8xf32> to vector<8xf32>
    %219 = vector.shape_cast %218 : vector<8xf32> to vector<8x1xf32>
    %220 = vector.broadcast %219 : vector<8x1xf32> to vector<8x8xf32>
    %221 = arith.divf %217, %220 : vector<8x8xf32>
    %cst_86 = arith.constant dense<0.000000e+00> : vector<8x8xf32>
    %222 = tpu.matmul %221, %202, %cst_86 {dimension_numbers = #tpu.dot_dimension_numbers<[1], [0], [0], [1], [0, 0, 1, 1], [], []>} : vector<8x8xf32>, vector<8x8xf32>, vector<8x8xf32> -> vector<8x8xf32>
    %223 = tpu.concatenate %153, %176, %199, %222 in 1 : vector<8x8xf32>, vector<8x8xf32>, vector<8x8xf32>, vector<8x8xf32> -> vector<8x32xf32>
    %224 = tpu.concatenate %130, %223 in 0 : vector<8x32xf32>, vector<8x32xf32> -> vector<16x32xf32>
    %c0_87 = arith.constant 0 : index
    %c0_88 = arith.constant 0 : index
    %c0_89 = arith.constant 0 : index
    %225 = vector.load %arg9[%c0_87, %c0_88, %c0_89] : memref<2x32x32xf32, #tpu.memory_space<vmem>>, vector<1x32x32xf32>
    %226 = vector.shape_cast %225 : vector<1x32x32xf32> to vector<32x32xf32>
    %cst_90 = arith.constant dense<0.000000e+00> : vector<16x32xf32>
    %227 = tpu.matmul %224, %226, %cst_90 {dimension_numbers = #tpu.dot_dimension_numbers<[1], [0], [0], [1], [0, 0, 1, 1], [], []>} : vector<16x32xf32>, vector<32x32xf32>, vector<16x32xf32> -> vector<16x32xf32>
    %c0_91 = arith.constant 0 : index
    %c0_92 = arith.constant 0 : index
    %c0_93 = arith.constant 0 : index
    %228 = vector.load %arg10[%c0_91, %c0_92, %c0_93] : memref<2x1x32xf32, #tpu.memory_space<vmem>>, vector<1x1x32xf32>
    %229 = vector.shape_cast %228 : vector<1x1x32xf32> to vector<1x32xf32>
    %230 = vector.broadcast %229 : vector<1x32xf32> to vector<16x32xf32>
    %231 = arith.addf %227, %230 : vector<16x32xf32>
    %232 = arith.addf %9, %231 : vector<16x32xf32>
    %c0_94 = arith.constant 0 : index
    %c0_95 = arith.constant 0 : index
    %c0_96 = arith.constant 0 : index
    %233 = vector.load %arg15[%c0_94, %c0_95, %c0_96] : memref<2x1x32xf32, #tpu.memory_space<vmem>>, vector<1x1x32xf32>
    %234 = vector.shape_cast %233 : vector<1x1x32xf32> to vector<1x32xf32>
    %c0_97 = arith.constant 0 : index
    %c0_98 = arith.constant 0 : index
    %c0_99 = arith.constant 0 : index
    %235 = vector.load %arg16[%c0_97, %c0_98, %c0_99] : memref<2x1x32xf32, #tpu.memory_space<vmem>>, vector<1x1x32xf32>
    %236 = vector.shape_cast %235 : vector<1x1x32xf32> to vector<1x32xf32>
    %cst_100 = arith.constant dense<0.000000e+00> : vector<16xf32>
    %237 = vector.multi_reduction <add>, %232, %cst_100 [1] : vector<16x32xf32> to vector<16xf32>
    %238 = vector.shape_cast %237 : vector<16xf32> to vector<16x1xf32>
    %cst_101 = arith.constant 3.200000e+01 : f32
    %239 = vector.broadcast %cst_101 : f32 to vector<16x1xf32>
    %240 = arith.divf %238, %239 : vector<16x1xf32>
    %241 = vector.broadcast %240 : vector<16x1xf32> to vector<16x32xf32>
    %242 = arith.subf %232, %241 : vector<16x32xf32>
    %243 = arith.mulf %242, %242 : vector<16x32xf32>
    %cst_102 = arith.constant dense<0.000000e+00> : vector<16xf32>
    %244 = vector.multi_reduction <add>, %243, %cst_102 [1] : vector<16x32xf32> to vector<16xf32>
    %245 = vector.shape_cast %244 : vector<16xf32> to vector<16x1xf32>
    %cst_103 = arith.constant 3.200000e+01 : f32
    %246 = vector.broadcast %cst_103 : f32 to vector<16x1xf32>
    %247 = arith.divf %245, %246 : vector<16x1xf32>
    %248 = vector.broadcast %240 : vector<16x1xf32> to vector<16x32xf32>
    %249 = arith.subf %232, %248 : vector<16x32xf32>
    %cst_104 = arith.constant 9.99999974E-6 : f32
    %250 = vector.broadcast %cst_104 : f32 to vector<16x1xf32>
    %251 = arith.addf %247, %250 : vector<16x1xf32>
    %252 = math.rsqrt %251 : vector<16x1xf32>
    %253 = vector.broadcast %252 : vector<16x1xf32> to vector<16x32xf32>
    %254 = arith.mulf %249, %253 : vector<16x32xf32>
    %255 = vector.broadcast %234 : vector<1x32xf32> to vector<16x32xf32>
    %256 = arith.mulf %254, %255 : vector<16x32xf32>
    %257 = vector.broadcast %236 : vector<1x32xf32> to vector<16x32xf32>
    %258 = arith.addf %256, %257 : vector<16x32xf32>
    %c0_105 = arith.constant 0 : index
    %c0_106 = arith.constant 0 : index
    %c0_107 = arith.constant 0 : index
    %259 = vector.load %arg11[%c0_105, %c0_106, %c0_107] : memref<2x32x64xf32, #tpu.memory_space<vmem>>, vector<1x32x64xf32>
    %260 = vector.shape_cast %259 : vector<1x32x64xf32> to vector<32x64xf32>
    %cst_108 = arith.constant dense<0.000000e+00> : vector<16x64xf32>
    %261 = tpu.matmul %258, %260, %cst_108 {dimension_numbers = #tpu.dot_dimension_numbers<[1], [0], [0], [1], [0, 0, 1, 1], [], []>} : vector<16x32xf32>, vector<32x64xf32>, vector<16x64xf32> -> vector<16x64xf32>
    %c0_109 = arith.constant 0 : index
    %c0_110 = arith.constant 0 : index
    %c0_111 = arith.constant 0 : index
    %262 = vector.load %arg12[%c0_109, %c0_110, %c0_111] : memref<2x1x64xf32, #tpu.memory_space<vmem>>, vector<1x1x64xf32>
    %263 = vector.shape_cast %262 : vector<1x1x64xf32> to vector<1x64xf32>
    %264 = vector.broadcast %263 : vector<1x64xf32> to vector<16x64xf32>
    %265 = arith.addf %261, %264 : vector<16x64xf32>
    %cst_112 = arith.constant 0.000000e+00 : f32
    %266 = vector.broadcast %cst_112 : f32 to vector<16x64xf32>
    %267 = arith.maximumf %265, %266 : vector<16x64xf32>
    %c0_113 = arith.constant 0 : index
    %c0_114 = arith.constant 0 : index
    %c0_115 = arith.constant 0 : index
    %268 = vector.load %arg13[%c0_113, %c0_114, %c0_115] : memref<2x64x32xf32, #tpu.memory_space<vmem>>, vector<1x64x32xf32>
    %269 = vector.shape_cast %268 : vector<1x64x32xf32> to vector<64x32xf32>
    %cst_116 = arith.constant dense<0.000000e+00> : vector<16x32xf32>
    %270 = tpu.matmul %267, %269, %cst_116 {dimension_numbers = #tpu.dot_dimension_numbers<[1], [0], [0], [1], [0, 0, 1, 1], [], []>} : vector<16x64xf32>, vector<64x32xf32>, vector<16x32xf32> -> vector<16x32xf32>
    %c0_117 = arith.constant 0 : index
    %c0_118 = arith.constant 0 : index
    %c0_119 = arith.constant 0 : index
    %271 = vector.load %arg14[%c0_117, %c0_118, %c0_119] : memref<2x1x32xf32, #tpu.memory_space<vmem>>, vector<1x1x32xf32>
    %272 = vector.shape_cast %271 : vector<1x1x32xf32> to vector<1x32xf32>
    %273 = vector.broadcast %272 : vector<1x32xf32> to vector<16x32xf32>
    %274 = arith.addf %270, %273 : vector<16x32xf32>
    %275 = arith.addf %258, %274 : vector<16x32xf32>
    %c0_120 = arith.constant 0 : index
    %c0_121 = arith.constant 0 : index
    %c0_122 = arith.constant 0 : index
    %276 = vector.load %arg17[%c0_120, %c0_121, %c0_122] : memref<2x1x32xf32, #tpu.memory_space<vmem>>, vector<1x1x32xf32>
    %277 = vector.shape_cast %276 : vector<1x1x32xf32> to vector<1x32xf32>
    %c0_123 = arith.constant 0 : index
    %c0_124 = arith.constant 0 : index
    %c0_125 = arith.constant 0 : index
    %278 = vector.load %arg18[%c0_123, %c0_124, %c0_125] : memref<2x1x32xf32, #tpu.memory_space<vmem>>, vector<1x1x32xf32>
    %279 = vector.shape_cast %278 : vector<1x1x32xf32> to vector<1x32xf32>
    %cst_126 = arith.constant dense<0.000000e+00> : vector<16xf32>
    %280 = vector.multi_reduction <add>, %275, %cst_126 [1] : vector<16x32xf32> to vector<16xf32>
    %281 = vector.shape_cast %280 : vector<16xf32> to vector<16x1xf32>
    %cst_127 = arith.constant 3.200000e+01 : f32
    %282 = vector.broadcast %cst_127 : f32 to vector<16x1xf32>
    %283 = arith.divf %281, %282 : vector<16x1xf32>
    %284 = vector.broadcast %283 : vector<16x1xf32> to vector<16x32xf32>
    %285 = arith.subf %275, %284 : vector<16x32xf32>
    %286 = arith.mulf %285, %285 : vector<16x32xf32>
    %cst_128 = arith.constant dense<0.000000e+00> : vector<16xf32>
    %287 = vector.multi_reduction <add>, %286, %cst_128 [1] : vector<16x32xf32> to vector<16xf32>
    %288 = vector.shape_cast %287 : vector<16xf32> to vector<16x1xf32>
    %cst_129 = arith.constant 3.200000e+01 : f32
    %289 = vector.broadcast %cst_129 : f32 to vector<16x1xf32>
    %290 = arith.divf %288, %289 : vector<16x1xf32>
    %291 = vector.broadcast %283 : vector<16x1xf32> to vector<16x32xf32>
    %292 = arith.subf %275, %291 : vector<16x32xf32>
    %cst_130 = arith.constant 9.99999974E-6 : f32
    %293 = vector.broadcast %cst_130 : f32 to vector<16x1xf32>
    %294 = arith.addf %290, %293 : vector<16x1xf32>
    %295 = math.rsqrt %294 : vector<16x1xf32>
    %296 = vector.broadcast %295 : vector<16x1xf32> to vector<16x32xf32>
    %297 = arith.mulf %292, %296 : vector<16x32xf32>
    %298 = vector.broadcast %277 : vector<1x32xf32> to vector<16x32xf32>
    %299 = arith.mulf %297, %298 : vector<16x32xf32>
    %300 = vector.broadcast %279 : vector<1x32xf32> to vector<16x32xf32>
    %301 = arith.addf %299, %300 : vector<16x32xf32>
    %c1_131 = arith.constant 1 : index
    %c0_132 = arith.constant 0 : index
    %c0_133 = arith.constant 0 : index
    %302 = vector.load %arg7[%c1_131, %c0_132, %c0_133] : memref<2x32x96xf32, #tpu.memory_space<vmem>>, vector<1x32x96xf32>
    %303 = vector.shape_cast %302 : vector<1x32x96xf32> to vector<32x96xf32>
    %cst_134 = arith.constant dense<0.000000e+00> : vector<16x96xf32>
    %304 = tpu.matmul %301, %303, %cst_134 {dimension_numbers = #tpu.dot_dimension_numbers<[1], [0], [0], [1], [0, 0, 1, 1], [], []>} : vector<16x32xf32>, vector<32x96xf32>, vector<16x96xf32> -> vector<16x96xf32>
    %c1_135 = arith.constant 1 : index
    %c0_136 = arith.constant 0 : index
    %c0_137 = arith.constant 0 : index
    %305 = vector.load %arg8[%c1_135, %c0_136, %c0_137] : memref<2x1x96xf32, #tpu.memory_space<vmem>>, vector<1x1x96xf32>
    %306 = vector.shape_cast %305 : vector<1x1x96xf32> to vector<1x96xf32>
    %307 = vector.broadcast %306 : vector<1x96xf32> to vector<16x96xf32>
    %308 = arith.addf %304, %307 : vector<16x96xf32>
    %309 = vector.extract_strided_slice %308 {offsets = [0, 0], sizes = [16, 32], strides = [1, 1]} : vector<16x96xf32> to vector<16x32xf32>
    %310 = vector.extract_strided_slice %308 {offsets = [0, 32], sizes = [16, 32], strides = [1, 1]} : vector<16x96xf32> to vector<16x32xf32>
    %311 = vector.extract_strided_slice %308 {offsets = [0, 64], sizes = [16, 32], strides = [1, 1]} : vector<16x96xf32> to vector<16x32xf32>
    %312 = vector.extract_strided_slice %309 {offsets = [0, 0], sizes = [8, 8], strides = [1, 1]} : vector<16x32xf32> to vector<8x8xf32>
    %313 = vector.extract_strided_slice %310 {offsets = [0, 0], sizes = [8, 8], strides = [1, 1]} : vector<16x32xf32> to vector<8x8xf32>
    %314 = vector.extract_strided_slice %311 {offsets = [0, 0], sizes = [8, 8], strides = [1, 1]} : vector<16x32xf32> to vector<8x8xf32>
    %315 = tpu.transpose %313, [1, 0] : vector<8x8xf32> -> vector<8x8xf32>
    %cst_138 = arith.constant dense<0.000000e+00> : vector<8x8xf32>
    %316 = tpu.matmul %312, %315, %cst_138 {dimension_numbers = #tpu.dot_dimension_numbers<[1], [0], [0], [1], [0, 0, 1, 1], [], []>} : vector<8x8xf32>, vector<8x8xf32>, vector<8x8xf32> -> vector<8x8xf32>
    %cst_139 = arith.constant 0.353553385 : f32
    %317 = vector.broadcast %cst_139 : f32 to vector<8x8xf32>
    %318 = arith.mulf %316, %317 : vector<8x8xf32>
    %c1_140 = arith.constant 1 : index
    %c0_141 = arith.constant 0 : index
    %319 = memref.load %arg23[%c1_140, %c0_141] : memref<2x4xf32, #tpu.memory_space<smem>>
    %320 = vector.broadcast %319 : f32 to vector<8x8xf32>
    %321 = arith.mulf %11, %320 : vector<8x8xf32>
    %322 = arith.subf %318, %321 : vector<8x8xf32>
    %323 = vector.broadcast %20 : vector<1x8xf32> to vector<8x8xf32>
    %324 = arith.addf %322, %323 : vector<8x8xf32>
    %cst_142 = arith.constant dense<0xFF800000> : vector<8xf32>
    %325 = vector.multi_reduction <maximumf>, %324, %cst_142 [1] : vector<8x8xf32> to vector<8xf32>
    %326 = vector.shape_cast %325 : vector<8xf32> to vector<8x1xf32>
    %327 = vector.broadcast %326 : vector<8x1xf32> to vector<8x8xf32>
    %328 = arith.subf %324, %327 : vector<8x8xf32>
    %329 = math.exp %328 : vector<8x8xf32>
    %cst_143 = arith.constant dense<0.000000e+00> : vector<8xf32>
    %330 = vector.multi_reduction <add>, %329, %cst_143 [1] : vector<8x8xf32> to vector<8xf32>
    %331 = vector.shape_cast %330 : vector<8xf32> to vector<8x1xf32>
    %332 = vector.broadcast %331 : vector<8x1xf32> to vector<8x8xf32>
    %333 = arith.divf %329, %332 : vector<8x8xf32>
    %cst_144 = arith.constant dense<0.000000e+00> : vector<8x8xf32>
    %334 = tpu.matmul %333, %314, %cst_144 {dimension_numbers = #tpu.dot_dimension_numbers<[1], [0], [0], [1], [0, 0, 1, 1], [], []>} : vector<8x8xf32>, vector<8x8xf32>, vector<8x8xf32> -> vector<8x8xf32>
    %335 = vector.extract_strided_slice %309 {offsets = [0, 8], sizes = [8, 8], strides = [1, 1]} : vector<16x32xf32> to vector<8x8xf32>
    %336 = vector.extract_strided_slice %310 {offsets = [0, 8], sizes = [8, 8], strides = [1, 1]} : vector<16x32xf32> to vector<8x8xf32>
    %337 = vector.extract_strided_slice %311 {offsets = [0, 8], sizes = [8, 8], strides = [1, 1]} : vector<16x32xf32> to vector<8x8xf32>
    %338 = tpu.transpose %336, [1, 0] : vector<8x8xf32> -> vector<8x8xf32>
    %cst_145 = arith.constant dense<0.000000e+00> : vector<8x8xf32>
    %339 = tpu.matmul %335, %338, %cst_145 {dimension_numbers = #tpu.dot_dimension_numbers<[1], [0], [0], [1], [0, 0, 1, 1], [], []>} : vector<8x8xf32>, vector<8x8xf32>, vector<8x8xf32> -> vector<8x8xf32>
    %cst_146 = arith.constant 0.353553385 : f32
    %340 = vector.broadcast %cst_146 : f32 to vector<8x8xf32>
    %341 = arith.mulf %339, %340 : vector<8x8xf32>
    %c1_147 = arith.constant 1 : index
    %c1_148 = arith.constant 1 : index
    %342 = memref.load %arg23[%c1_147, %c1_148] : memref<2x4xf32, #tpu.memory_space<smem>>
    %343 = vector.broadcast %342 : f32 to vector<8x8xf32>
    %344 = arith.mulf %11, %343 : vector<8x8xf32>
    %345 = arith.subf %341, %344 : vector<8x8xf32>
    %346 = vector.broadcast %20 : vector<1x8xf32> to vector<8x8xf32>
    %347 = arith.addf %345, %346 : vector<8x8xf32>
    %cst_149 = arith.constant dense<0xFF800000> : vector<8xf32>
    %348 = vector.multi_reduction <maximumf>, %347, %cst_149 [1] : vector<8x8xf32> to vector<8xf32>
    %349 = vector.shape_cast %348 : vector<8xf32> to vector<8x1xf32>
    %350 = vector.broadcast %349 : vector<8x1xf32> to vector<8x8xf32>
    %351 = arith.subf %347, %350 : vector<8x8xf32>
    %352 = math.exp %351 : vector<8x8xf32>
    %cst_150 = arith.constant dense<0.000000e+00> : vector<8xf32>
    %353 = vector.multi_reduction <add>, %352, %cst_150 [1] : vector<8x8xf32> to vector<8xf32>
    %354 = vector.shape_cast %353 : vector<8xf32> to vector<8x1xf32>
    %355 = vector.broadcast %354 : vector<8x1xf32> to vector<8x8xf32>
    %356 = arith.divf %352, %355 : vector<8x8xf32>
    %cst_151 = arith.constant dense<0.000000e+00> : vector<8x8xf32>
    %357 = tpu.matmul %356, %337, %cst_151 {dimension_numbers = #tpu.dot_dimension_numbers<[1], [0], [0], [1], [0, 0, 1, 1], [], []>} : vector<8x8xf32>, vector<8x8xf32>, vector<8x8xf32> -> vector<8x8xf32>
    %358 = vector.extract_strided_slice %309 {offsets = [0, 16], sizes = [8, 8], strides = [1, 1]} : vector<16x32xf32> to vector<8x8xf32>
    %359 = vector.extract_strided_slice %310 {offsets = [0, 16], sizes = [8, 8], strides = [1, 1]} : vector<16x32xf32> to vector<8x8xf32>
    %360 = vector.extract_strided_slice %311 {offsets = [0, 16], sizes = [8, 8], strides = [1, 1]} : vector<16x32xf32> to vector<8x8xf32>
    %361 = tpu.transpose %359, [1, 0] : vector<8x8xf32> -> vector<8x8xf32>
    %cst_152 = arith.constant dense<0.000000e+00> : vector<8x8xf32>
    %362 = tpu.matmul %358, %361, %cst_152 {dimension_numbers = #tpu.dot_dimension_numbers<[1], [0], [0], [1], [0, 0, 1, 1], [], []>} : vector<8x8xf32>, vector<8x8xf32>, vector<8x8xf32> -> vector<8x8xf32>
    %cst_153 = arith.constant 0.353553385 : f32
    %363 = vector.broadcast %cst_153 : f32 to vector<8x8xf32>
    %364 = arith.mulf %362, %363 : vector<8x8xf32>
    %c1_154 = arith.constant 1 : index
    %c2_155 = arith.constant 2 : index
    %365 = memref.load %arg23[%c1_154, %c2_155] : memref<2x4xf32, #tpu.memory_space<smem>>
    %366 = vector.broadcast %365 : f32 to vector<8x8xf32>
    %367 = arith.mulf %11, %366 : vector<8x8xf32>
    %368 = arith.subf %364, %367 : vector<8x8xf32>
    %369 = vector.broadcast %20 : vector<1x8xf32> to vector<8x8xf32>
    %370 = arith.addf %368, %369 : vector<8x8xf32>
    %cst_156 = arith.constant dense<0xFF800000> : vector<8xf32>
    %371 = vector.multi_reduction <maximumf>, %370, %cst_156 [1] : vector<8x8xf32> to vector<8xf32>
    %372 = vector.shape_cast %371 : vector<8xf32> to vector<8x1xf32>
    %373 = vector.broadcast %372 : vector<8x1xf32> to vector<8x8xf32>
    %374 = arith.subf %370, %373 : vector<8x8xf32>
    %375 = math.exp %374 : vector<8x8xf32>
    %cst_157 = arith.constant dense<0.000000e+00> : vector<8xf32>
    %376 = vector.multi_reduction <add>, %375, %cst_157 [1] : vector<8x8xf32> to vector<8xf32>
    %377 = vector.shape_cast %376 : vector<8xf32> to vector<8x1xf32>
    %378 = vector.broadcast %377 : vector<8x1xf32> to vector<8x8xf32>
    %379 = arith.divf %375, %378 : vector<8x8xf32>
    %cst_158 = arith.constant dense<0.000000e+00> : vector<8x8xf32>
    %380 = tpu.matmul %379, %360, %cst_158 {dimension_numbers = #tpu.dot_dimension_numbers<[1], [0], [0], [1], [0, 0, 1, 1], [], []>} : vector<8x8xf32>, vector<8x8xf32>, vector<8x8xf32> -> vector<8x8xf32>
    %381 = vector.extract_strided_slice %309 {offsets = [0, 24], sizes = [8, 8], strides = [1, 1]} : vector<16x32xf32> to vector<8x8xf32>
    %382 = vector.extract_strided_slice %310 {offsets = [0, 24], sizes = [8, 8], strides = [1, 1]} : vector<16x32xf32> to vector<8x8xf32>
    %383 = vector.extract_strided_slice %311 {offsets = [0, 24], sizes = [8, 8], strides = [1, 1]} : vector<16x32xf32> to vector<8x8xf32>
    %384 = tpu.transpose %382, [1, 0] : vector<8x8xf32> -> vector<8x8xf32>
    %cst_159 = arith.constant dense<0.000000e+00> : vector<8x8xf32>
    %385 = tpu.matmul %381, %384, %cst_159 {dimension_numbers = #tpu.dot_dimension_numbers<[1], [0], [0], [1], [0, 0, 1, 1], [], []>} : vector<8x8xf32>, vector<8x8xf32>, vector<8x8xf32> -> vector<8x8xf32>
    %cst_160 = arith.constant 0.353553385 : f32
    %386 = vector.broadcast %cst_160 : f32 to vector<8x8xf32>
    %387 = arith.mulf %385, %386 : vector<8x8xf32>
    %c1_161 = arith.constant 1 : index
    %c3_162 = arith.constant 3 : index
    %388 = memref.load %arg23[%c1_161, %c3_162] : memref<2x4xf32, #tpu.memory_space<smem>>
    %389 = vector.broadcast %388 : f32 to vector<8x8xf32>
    %390 = arith.mulf %11, %389 : vector<8x8xf32>
    %391 = arith.subf %387, %390 : vector<8x8xf32>
    %392 = vector.broadcast %20 : vector<1x8xf32> to vector<8x8xf32>
    %393 = arith.addf %391, %392 : vector<8x8xf32>
    %cst_163 = arith.constant dense<0xFF800000> : vector<8xf32>
    %394 = vector.multi_reduction <maximumf>, %393, %cst_163 [1] : vector<8x8xf32> to vector<8xf32>
    %395 = vector.shape_cast %394 : vector<8xf32> to vector<8x1xf32>
    %396 = vector.broadcast %395 : vector<8x1xf32> to vector<8x8xf32>
    %397 = arith.subf %393, %396 : vector<8x8xf32>
    %398 = math.exp %397 : vector<8x8xf32>
    %cst_164 = arith.constant dense<0.000000e+00> : vector<8xf32>
    %399 = vector.multi_reduction <add>, %398, %cst_164 [1] : vector<8x8xf32> to vector<8xf32>
    %400 = vector.shape_cast %399 : vector<8xf32> to vector<8x1xf32>
    %401 = vector.broadcast %400 : vector<8x1xf32> to vector<8x8xf32>
    %402 = arith.divf %398, %401 : vector<8x8xf32>
    %cst_165 = arith.constant dense<0.000000e+00> : vector<8x8xf32>
    %403 = tpu.matmul %402, %383, %cst_165 {dimension_numbers = #tpu.dot_dimension_numbers<[1], [0], [0], [1], [0, 0, 1, 1], [], []>} : vector<8x8xf32>, vector<8x8xf32>, vector<8x8xf32> -> vector<8x8xf32>
    %404 = tpu.concatenate %334, %357, %380, %403 in 1 : vector<8x8xf32>, vector<8x8xf32>, vector<8x8xf32>, vector<8x8xf32> -> vector<8x32xf32>
    %405 = vector.extract_strided_slice %309 {offsets = [8, 0], sizes = [8, 8], strides = [1, 1]} : vector<16x32xf32> to vector<8x8xf32>
    %406 = vector.extract_strided_slice %310 {offsets = [8, 0], sizes = [8, 8], strides = [1, 1]} : vector<16x32xf32> to vector<8x8xf32>
    %407 = vector.extract_strided_slice %311 {offsets = [8, 0], sizes = [8, 8], strides = [1, 1]} : vector<16x32xf32> to vector<8x8xf32>
    %408 = tpu.transpose %406, [1, 0] : vector<8x8xf32> -> vector<8x8xf32>
    %cst_166 = arith.constant dense<0.000000e+00> : vector<8x8xf32>
    %409 = tpu.matmul %405, %408, %cst_166 {dimension_numbers = #tpu.dot_dimension_numbers<[1], [0], [0], [1], [0, 0, 1, 1], [], []>} : vector<8x8xf32>, vector<8x8xf32>, vector<8x8xf32> -> vector<8x8xf32>
    %cst_167 = arith.constant 0.353553385 : f32
    %410 = vector.broadcast %cst_167 : f32 to vector<8x8xf32>
    %411 = arith.mulf %409, %410 : vector<8x8xf32>
    %c1_168 = arith.constant 1 : index
    %c0_169 = arith.constant 0 : index
    %412 = memref.load %arg23[%c1_168, %c0_169] : memref<2x4xf32, #tpu.memory_space<smem>>
    %413 = vector.broadcast %412 : f32 to vector<8x8xf32>
    %414 = arith.mulf %13, %413 : vector<8x8xf32>
    %415 = arith.subf %411, %414 : vector<8x8xf32>
    %416 = vector.broadcast %27 : vector<1x8xf32> to vector<8x8xf32>
    %417 = arith.addf %415, %416 : vector<8x8xf32>
    %cst_170 = arith.constant dense<0xFF800000> : vector<8xf32>
    %418 = vector.multi_reduction <maximumf>, %417, %cst_170 [1] : vector<8x8xf32> to vector<8xf32>
    %419 = vector.shape_cast %418 : vector<8xf32> to vector<8x1xf32>
    %420 = vector.broadcast %419 : vector<8x1xf32> to vector<8x8xf32>
    %421 = arith.subf %417, %420 : vector<8x8xf32>
    %422 = math.exp %421 : vector<8x8xf32>
    %cst_171 = arith.constant dense<0.000000e+00> : vector<8xf32>
    %423 = vector.multi_reduction <add>, %422, %cst_171 [1] : vector<8x8xf32> to vector<8xf32>
    %424 = vector.shape_cast %423 : vector<8xf32> to vector<8x1xf32>
    %425 = vector.broadcast %424 : vector<8x1xf32> to vector<8x8xf32>
    %426 = arith.divf %422, %425 : vector<8x8xf32>
    %cst_172 = arith.constant dense<0.000000e+00> : vector<8x8xf32>
    %427 = tpu.matmul %426, %407, %cst_172 {dimension_numbers = #tpu.dot_dimension_numbers<[1], [0], [0], [1], [0, 0, 1, 1], [], []>} : vector<8x8xf32>, vector<8x8xf32>, vector<8x8xf32> -> vector<8x8xf32>
    %428 = vector.extract_strided_slice %309 {offsets = [8, 8], sizes = [8, 8], strides = [1, 1]} : vector<16x32xf32> to vector<8x8xf32>
    %429 = vector.extract_strided_slice %310 {offsets = [8, 8], sizes = [8, 8], strides = [1, 1]} : vector<16x32xf32> to vector<8x8xf32>
    %430 = vector.extract_strided_slice %311 {offsets = [8, 8], sizes = [8, 8], strides = [1, 1]} : vector<16x32xf32> to vector<8x8xf32>
    %431 = tpu.transpose %429, [1, 0] : vector<8x8xf32> -> vector<8x8xf32>
    %cst_173 = arith.constant dense<0.000000e+00> : vector<8x8xf32>
    %432 = tpu.matmul %428, %431, %cst_173 {dimension_numbers = #tpu.dot_dimension_numbers<[1], [0], [0], [1], [0, 0, 1, 1], [], []>} : vector<8x8xf32>, vector<8x8xf32>, vector<8x8xf32> -> vector<8x8xf32>
    %cst_174 = arith.constant 0.353553385 : f32
    %433 = vector.broadcast %cst_174 : f32 to vector<8x8xf32>
    %434 = arith.mulf %432, %433 : vector<8x8xf32>
    %c1_175 = arith.constant 1 : index
    %c1_176 = arith.constant 1 : index
    %435 = memref.load %arg23[%c1_175, %c1_176] : memref<2x4xf32, #tpu.memory_space<smem>>
    %436 = vector.broadcast %435 : f32 to vector<8x8xf32>
    %437 = arith.mulf %13, %436 : vector<8x8xf32>
    %438 = arith.subf %434, %437 : vector<8x8xf32>
    %439 = vector.broadcast %27 : vector<1x8xf32> to vector<8x8xf32>
    %440 = arith.addf %438, %439 : vector<8x8xf32>
    %cst_177 = arith.constant dense<0xFF800000> : vector<8xf32>
    %441 = vector.multi_reduction <maximumf>, %440, %cst_177 [1] : vector<8x8xf32> to vector<8xf32>
    %442 = vector.shape_cast %441 : vector<8xf32> to vector<8x1xf32>
    %443 = vector.broadcast %442 : vector<8x1xf32> to vector<8x8xf32>
    %444 = arith.subf %440, %443 : vector<8x8xf32>
    %445 = math.exp %444 : vector<8x8xf32>
    %cst_178 = arith.constant dense<0.000000e+00> : vector<8xf32>
    %446 = vector.multi_reduction <add>, %445, %cst_178 [1] : vector<8x8xf32> to vector<8xf32>
    %447 = vector.shape_cast %446 : vector<8xf32> to vector<8x1xf32>
    %448 = vector.broadcast %447 : vector<8x1xf32> to vector<8x8xf32>
    %449 = arith.divf %445, %448 : vector<8x8xf32>
    %cst_179 = arith.constant dense<0.000000e+00> : vector<8x8xf32>
    %450 = tpu.matmul %449, %430, %cst_179 {dimension_numbers = #tpu.dot_dimension_numbers<[1], [0], [0], [1], [0, 0, 1, 1], [], []>} : vector<8x8xf32>, vector<8x8xf32>, vector<8x8xf32> -> vector<8x8xf32>
    %451 = vector.extract_strided_slice %309 {offsets = [8, 16], sizes = [8, 8], strides = [1, 1]} : vector<16x32xf32> to vector<8x8xf32>
    %452 = vector.extract_strided_slice %310 {offsets = [8, 16], sizes = [8, 8], strides = [1, 1]} : vector<16x32xf32> to vector<8x8xf32>
    %453 = vector.extract_strided_slice %311 {offsets = [8, 16], sizes = [8, 8], strides = [1, 1]} : vector<16x32xf32> to vector<8x8xf32>
    %454 = tpu.transpose %452, [1, 0] : vector<8x8xf32> -> vector<8x8xf32>
    %cst_180 = arith.constant dense<0.000000e+00> : vector<8x8xf32>
    %455 = tpu.matmul %451, %454, %cst_180 {dimension_numbers = #tpu.dot_dimension_numbers<[1], [0], [0], [1], [0, 0, 1, 1], [], []>} : vector<8x8xf32>, vector<8x8xf32>, vector<8x8xf32> -> vector<8x8xf32>
    %cst_181 = arith.constant 0.353553385 : f32
    %456 = vector.broadcast %cst_181 : f32 to vector<8x8xf32>
    %457 = arith.mulf %455, %456 : vector<8x8xf32>
    %c1_182 = arith.constant 1 : index
    %c2_183 = arith.constant 2 : index
    %458 = memref.load %arg23[%c1_182, %c2_183] : memref<2x4xf32, #tpu.memory_space<smem>>
    %459 = vector.broadcast %458 : f32 to vector<8x8xf32>
    %460 = arith.mulf %13, %459 : vector<8x8xf32>
    %461 = arith.subf %457, %460 : vector<8x8xf32>
    %462 = vector.broadcast %27 : vector<1x8xf32> to vector<8x8xf32>
    %463 = arith.addf %461, %462 : vector<8x8xf32>
    %cst_184 = arith.constant dense<0xFF800000> : vector<8xf32>
    %464 = vector.multi_reduction <maximumf>, %463, %cst_184 [1] : vector<8x8xf32> to vector<8xf32>
    %465 = vector.shape_cast %464 : vector<8xf32> to vector<8x1xf32>
    %466 = vector.broadcast %465 : vector<8x1xf32> to vector<8x8xf32>
    %467 = arith.subf %463, %466 : vector<8x8xf32>
    %468 = math.exp %467 : vector<8x8xf32>
    %cst_185 = arith.constant dense<0.000000e+00> : vector<8xf32>
    %469 = vector.multi_reduction <add>, %468, %cst_185 [1] : vector<8x8xf32> to vector<8xf32>
    %470 = vector.shape_cast %469 : vector<8xf32> to vector<8x1xf32>
    %471 = vector.broadcast %470 : vector<8x1xf32> to vector<8x8xf32>
    %472 = arith.divf %468, %471 : vector<8x8xf32>
    %cst_186 = arith.constant dense<0.000000e+00> : vector<8x8xf32>
    %473 = tpu.matmul %472, %453, %cst_186 {dimension_numbers = #tpu.dot_dimension_numbers<[1], [0], [0], [1], [0, 0, 1, 1], [], []>} : vector<8x8xf32>, vector<8x8xf32>, vector<8x8xf32> -> vector<8x8xf32>
    %474 = vector.extract_strided_slice %309 {offsets = [8, 24], sizes = [8, 8], strides = [1, 1]} : vector<16x32xf32> to vector<8x8xf32>
    %475 = vector.extract_strided_slice %310 {offsets = [8, 24], sizes = [8, 8], strides = [1, 1]} : vector<16x32xf32> to vector<8x8xf32>
    %476 = vector.extract_strided_slice %311 {offsets = [8, 24], sizes = [8, 8], strides = [1, 1]} : vector<16x32xf32> to vector<8x8xf32>
    %477 = tpu.transpose %475, [1, 0] : vector<8x8xf32> -> vector<8x8xf32>
    %cst_187 = arith.constant dense<0.000000e+00> : vector<8x8xf32>
    %478 = tpu.matmul %474, %477, %cst_187 {dimension_numbers = #tpu.dot_dimension_numbers<[1], [0], [0], [1], [0, 0, 1, 1], [], []>} : vector<8x8xf32>, vector<8x8xf32>, vector<8x8xf32> -> vector<8x8xf32>
    %cst_188 = arith.constant 0.353553385 : f32
    %479 = vector.broadcast %cst_188 : f32 to vector<8x8xf32>
    %480 = arith.mulf %478, %479 : vector<8x8xf32>
    %c1_189 = arith.constant 1 : index
    %c3_190 = arith.constant 3 : index
    %481 = memref.load %arg23[%c1_189, %c3_190] : memref<2x4xf32, #tpu.memory_space<smem>>
    %482 = vector.broadcast %481 : f32 to vector<8x8xf32>
    %483 = arith.mulf %13, %482 : vector<8x8xf32>
    %484 = arith.subf %480, %483 : vector<8x8xf32>
    %485 = vector.broadcast %27 : vector<1x8xf32> to vector<8x8xf32>
    %486 = arith.addf %484, %485 : vector<8x8xf32>
    %cst_191 = arith.constant dense<0xFF800000> : vector<8xf32>
    %487 = vector.multi_reduction <maximumf>, %486, %cst_191 [1] : vector<8x8xf32> to vector<8xf32>
    %488 = vector.shape_cast %487 : vector<8xf32> to vector<8x1xf32>
    %489 = vector.broadcast %488 : vector<8x1xf32> to vector<8x8xf32>
    %490 = arith.subf %486, %489 : vector<8x8xf32>
    %491 = math.exp %490 : vector<8x8xf32>
    %cst_192 = arith.constant dense<0.000000e+00> : vector<8xf32>
    %492 = vector.multi_reduction <add>, %491, %cst_192 [1] : vector<8x8xf32> to vector<8xf32>
    %493 = vector.shape_cast %492 : vector<8xf32> to vector<8x1xf32>
    %494 = vector.broadcast %493 : vector<8x1xf32> to vector<8x8xf32>
    %495 = arith.divf %491, %494 : vector<8x8xf32>
    %cst_193 = arith.constant dense<0.000000e+00> : vector<8x8xf32>
    %496 = tpu.matmul %495, %476, %cst_193 {dimension_numbers = #tpu.dot_dimension_numbers<[1], [0], [0], [1], [0, 0, 1, 1], [], []>} : vector<8x8xf32>, vector<8x8xf32>, vector<8x8xf32> -> vector<8x8xf32>
    %497 = tpu.concatenate %427, %450, %473, %496 in 1 : vector<8x8xf32>, vector<8x8xf32>, vector<8x8xf32>, vector<8x8xf32> -> vector<8x32xf32>
    %498 = tpu.concatenate %404, %497 in 0 : vector<8x32xf32>, vector<8x32xf32> -> vector<16x32xf32>
    %c1_194 = arith.constant 1 : index
    %c0_195 = arith.constant 0 : index
    %c0_196 = arith.constant 0 : index
    %499 = vector.load %arg9[%c1_194, %c0_195, %c0_196] : memref<2x32x32xf32, #tpu.memory_space<vmem>>, vector<1x32x32xf32>
    %500 = vector.shape_cast %499 : vector<1x32x32xf32> to vector<32x32xf32>
    %cst_197 = arith.constant dense<0.000000e+00> : vector<16x32xf32>
    %501 = tpu.matmul %498, %500, %cst_197 {dimension_numbers = #tpu.dot_dimension_numbers<[1], [0], [0], [1], [0, 0, 1, 1], [], []>} : vector<16x32xf32>, vector<32x32xf32>, vector<16x32xf32> -> vector<16x32xf32>
    %c1_198 = arith.constant 1 : index
    %c0_199 = arith.constant 0 : index
    %c0_200 = arith.constant 0 : index
    %502 = vector.load %arg10[%c1_198, %c0_199, %c0_200] : memref<2x1x32xf32, #tpu.memory_space<vmem>>, vector<1x1x32xf32>
    %503 = vector.shape_cast %502 : vector<1x1x32xf32> to vector<1x32xf32>
    %504 = vector.broadcast %503 : vector<1x32xf32> to vector<16x32xf32>
    %505 = arith.addf %501, %504 : vector<16x32xf32>
    %506 = arith.addf %301, %505 : vector<16x32xf32>
    %c1_201 = arith.constant 1 : index
    %c0_202 = arith.constant 0 : index
    %c0_203 = arith.constant 0 : index
    %507 = vector.load %arg15[%c1_201, %c0_202, %c0_203] : memref<2x1x32xf32, #tpu.memory_space<vmem>>, vector<1x1x32xf32>
    %508 = vector.shape_cast %507 : vector<1x1x32xf32> to vector<1x32xf32>
    %c1_204 = arith.constant 1 : index
    %c0_205 = arith.constant 0 : index
    %c0_206 = arith.constant 0 : index
    %509 = vector.load %arg16[%c1_204, %c0_205, %c0_206] : memref<2x1x32xf32, #tpu.memory_space<vmem>>, vector<1x1x32xf32>
    %510 = vector.shape_cast %509 : vector<1x1x32xf32> to vector<1x32xf32>
    %cst_207 = arith.constant dense<0.000000e+00> : vector<16xf32>
    %511 = vector.multi_reduction <add>, %506, %cst_207 [1] : vector<16x32xf32> to vector<16xf32>
    %512 = vector.shape_cast %511 : vector<16xf32> to vector<16x1xf32>
    %cst_208 = arith.constant 3.200000e+01 : f32
    %513 = vector.broadcast %cst_208 : f32 to vector<16x1xf32>
    %514 = arith.divf %512, %513 : vector<16x1xf32>
    %515 = vector.broadcast %514 : vector<16x1xf32> to vector<16x32xf32>
    %516 = arith.subf %506, %515 : vector<16x32xf32>
    %517 = arith.mulf %516, %516 : vector<16x32xf32>
    %cst_209 = arith.constant dense<0.000000e+00> : vector<16xf32>
    %518 = vector.multi_reduction <add>, %517, %cst_209 [1] : vector<16x32xf32> to vector<16xf32>
    %519 = vector.shape_cast %518 : vector<16xf32> to vector<16x1xf32>
    %cst_210 = arith.constant 3.200000e+01 : f32
    %520 = vector.broadcast %cst_210 : f32 to vector<16x1xf32>
    %521 = arith.divf %519, %520 : vector<16x1xf32>
    %522 = vector.broadcast %514 : vector<16x1xf32> to vector<16x32xf32>
    %523 = arith.subf %506, %522 : vector<16x32xf32>
    %cst_211 = arith.constant 9.99999974E-6 : f32
    %524 = vector.broadcast %cst_211 : f32 to vector<16x1xf32>
    %525 = arith.addf %521, %524 : vector<16x1xf32>
    %526 = math.rsqrt %525 : vector<16x1xf32>
    %527 = vector.broadcast %526 : vector<16x1xf32> to vector<16x32xf32>
    %528 = arith.mulf %523, %527 : vector<16x32xf32>
    %529 = vector.broadcast %508 : vector<1x32xf32> to vector<16x32xf32>
    %530 = arith.mulf %528, %529 : vector<16x32xf32>
    %531 = vector.broadcast %510 : vector<1x32xf32> to vector<16x32xf32>
    %532 = arith.addf %530, %531 : vector<16x32xf32>
    %c1_212 = arith.constant 1 : index
    %c0_213 = arith.constant 0 : index
    %c0_214 = arith.constant 0 : index
    %533 = vector.load %arg11[%c1_212, %c0_213, %c0_214] : memref<2x32x64xf32, #tpu.memory_space<vmem>>, vector<1x32x64xf32>
    %534 = vector.shape_cast %533 : vector<1x32x64xf32> to vector<32x64xf32>
    %cst_215 = arith.constant dense<0.000000e+00> : vector<16x64xf32>
    %535 = tpu.matmul %532, %534, %cst_215 {dimension_numbers = #tpu.dot_dimension_numbers<[1], [0], [0], [1], [0, 0, 1, 1], [], []>} : vector<16x32xf32>, vector<32x64xf32>, vector<16x64xf32> -> vector<16x64xf32>
    %c1_216 = arith.constant 1 : index
    %c0_217 = arith.constant 0 : index
    %c0_218 = arith.constant 0 : index
    %536 = vector.load %arg12[%c1_216, %c0_217, %c0_218] : memref<2x1x64xf32, #tpu.memory_space<vmem>>, vector<1x1x64xf32>
    %537 = vector.shape_cast %536 : vector<1x1x64xf32> to vector<1x64xf32>
    %538 = vector.broadcast %537 : vector<1x64xf32> to vector<16x64xf32>
    %539 = arith.addf %535, %538 : vector<16x64xf32>
    %cst_219 = arith.constant 0.000000e+00 : f32
    %540 = vector.broadcast %cst_219 : f32 to vector<16x64xf32>
    %541 = arith.maximumf %539, %540 : vector<16x64xf32>
    %c1_220 = arith.constant 1 : index
    %c0_221 = arith.constant 0 : index
    %c0_222 = arith.constant 0 : index
    %542 = vector.load %arg13[%c1_220, %c0_221, %c0_222] : memref<2x64x32xf32, #tpu.memory_space<vmem>>, vector<1x64x32xf32>
    %543 = vector.shape_cast %542 : vector<1x64x32xf32> to vector<64x32xf32>
    %cst_223 = arith.constant dense<0.000000e+00> : vector<16x32xf32>
    %544 = tpu.matmul %541, %543, %cst_223 {dimension_numbers = #tpu.dot_dimension_numbers<[1], [0], [0], [1], [0, 0, 1, 1], [], []>} : vector<16x64xf32>, vector<64x32xf32>, vector<16x32xf32> -> vector<16x32xf32>
    %c1_224 = arith.constant 1 : index
    %c0_225 = arith.constant 0 : index
    %c0_226 = arith.constant 0 : index
    %545 = vector.load %arg14[%c1_224, %c0_225, %c0_226] : memref<2x1x32xf32, #tpu.memory_space<vmem>>, vector<1x1x32xf32>
    %546 = vector.shape_cast %545 : vector<1x1x32xf32> to vector<1x32xf32>
    %547 = vector.broadcast %546 : vector<1x32xf32> to vector<16x32xf32>
    %548 = arith.addf %544, %547 : vector<16x32xf32>
    %549 = arith.addf %532, %548 : vector<16x32xf32>
    %c1_227 = arith.constant 1 : index
    %c0_228 = arith.constant 0 : index
    %c0_229 = arith.constant 0 : index
    %550 = vector.load %arg17[%c1_227, %c0_228, %c0_229] : memref<2x1x32xf32, #tpu.memory_space<vmem>>, vector<1x1x32xf32>
    %551 = vector.shape_cast %550 : vector<1x1x32xf32> to vector<1x32xf32>
    %c1_230 = arith.constant 1 : index
    %c0_231 = arith.constant 0 : index
    %c0_232 = arith.constant 0 : index
    %552 = vector.load %arg18[%c1_230, %c0_231, %c0_232] : memref<2x1x32xf32, #tpu.memory_space<vmem>>, vector<1x1x32xf32>
    %553 = vector.shape_cast %552 : vector<1x1x32xf32> to vector<1x32xf32>
    %cst_233 = arith.constant dense<0.000000e+00> : vector<16xf32>
    %554 = vector.multi_reduction <add>, %549, %cst_233 [1] : vector<16x32xf32> to vector<16xf32>
    %555 = vector.shape_cast %554 : vector<16xf32> to vector<16x1xf32>
    %cst_234 = arith.constant 3.200000e+01 : f32
    %556 = vector.broadcast %cst_234 : f32 to vector<16x1xf32>
    %557 = arith.divf %555, %556 : vector<16x1xf32>
    %558 = vector.broadcast %557 : vector<16x1xf32> to vector<16x32xf32>
    %559 = arith.subf %549, %558 : vector<16x32xf32>
    %560 = arith.mulf %559, %559 : vector<16x32xf32>
    %cst_235 = arith.constant dense<0.000000e+00> : vector<16xf32>
    %561 = vector.multi_reduction <add>, %560, %cst_235 [1] : vector<16x32xf32> to vector<16xf32>
    %562 = vector.shape_cast %561 : vector<16xf32> to vector<16x1xf32>
    %cst_236 = arith.constant 3.200000e+01 : f32
    %563 = vector.broadcast %cst_236 : f32 to vector<16x1xf32>
    %564 = arith.divf %562, %563 : vector<16x1xf32>
    %565 = vector.broadcast %557 : vector<16x1xf32> to vector<16x32xf32>
    %566 = arith.subf %549, %565 : vector<16x32xf32>
    %cst_237 = arith.constant 9.99999974E-6 : f32
    %567 = vector.broadcast %cst_237 : f32 to vector<16x1xf32>
    %568 = arith.addf %564, %567 : vector<16x1xf32>
    %569 = math.rsqrt %568 : vector<16x1xf32>
    %570 = vector.broadcast %569 : vector<16x1xf32> to vector<16x32xf32>
    %571 = arith.mulf %566, %570 : vector<16x32xf32>
    %572 = vector.broadcast %551 : vector<1x32xf32> to vector<16x32xf32>
    %573 = arith.mulf %571, %572 : vector<16x32xf32>
    %574 = vector.broadcast %553 : vector<1x32xf32> to vector<16x32xf32>
    %575 = arith.addf %573, %574 : vector<16x32xf32>
    %576 = vector.extract_strided_slice %575 {offsets = [0, 0], sizes = [1, 32], strides = [1, 1]} : vector<16x32xf32> to vector<1x32xf32>
    %577 = vector.extract_strided_slice %575 {offsets = [8, 0], sizes = [1, 32], strides = [1, 1]} : vector<16x32xf32> to vector<1x32xf32>
    %578 = tpu.concatenate %576, %577 in 0 : vector<1x32xf32>, vector<1x32xf32> -> vector<2x32xf32>
    %c0_238 = arith.constant 0 : index
    %c0_239 = arith.constant 0 : index
    %579 = vector.load %arg19[%c0_238, %c0_239] : memref<1x32xf32, #tpu.memory_space<vmem>>, vector<1x32xf32>
    %c0_240 = arith.constant 0 : index
    %c0_241 = arith.constant 0 : index
    %580 = vector.load %arg20[%c0_240, %c0_241] : memref<1x32xf32, #tpu.memory_space<vmem>>, vector<1x32xf32>
    %cst_242 = arith.constant dense<0.000000e+00> : vector<2xf32>
    %581 = vector.multi_reduction <add>, %578, %cst_242 [1] : vector<2x32xf32> to vector<2xf32>
    %582 = vector.shape_cast %581 : vector<2xf32> to vector<2x1xf32>
    %cst_243 = arith.constant 3.200000e+01 : f32
    %583 = vector.broadcast %cst_243 : f32 to vector<2x1xf32>
    %584 = arith.divf %582, %583 : vector<2x1xf32>
    %585 = vector.broadcast %584 : vector<2x1xf32> to vector<2x32xf32>
    %586 = arith.subf %578, %585 : vector<2x32xf32>
    %587 = arith.mulf %586, %586 : vector<2x32xf32>
    %cst_244 = arith.constant dense<0.000000e+00> : vector<2xf32>
    %588 = vector.multi_reduction <add>, %587, %cst_244 [1] : vector<2x32xf32> to vector<2xf32>
    %589 = vector.shape_cast %588 : vector<2xf32> to vector<2x1xf32>
    %cst_245 = arith.constant 3.200000e+01 : f32
    %590 = vector.broadcast %cst_245 : f32 to vector<2x1xf32>
    %591 = arith.divf %589, %590 : vector<2x1xf32>
    %592 = vector.broadcast %584 : vector<2x1xf32> to vector<2x32xf32>
    %593 = arith.subf %578, %592 : vector<2x32xf32>
    %cst_246 = arith.constant 9.99999974E-6 : f32
    %594 = vector.broadcast %cst_246 : f32 to vector<2x1xf32>
    %595 = arith.addf %591, %594 : vector<2x1xf32>
    %596 = math.rsqrt %595 : vector<2x1xf32>
    %597 = vector.broadcast %596 : vector<2x1xf32> to vector<2x32xf32>
    %598 = arith.mulf %593, %597 : vector<2x32xf32>
    %599 = vector.broadcast %579 : vector<1x32xf32> to vector<2x32xf32>
    %600 = arith.mulf %598, %599 : vector<2x32xf32>
    %601 = vector.broadcast %580 : vector<1x32xf32> to vector<2x32xf32>
    %602 = arith.addf %600, %601 : vector<2x32xf32>
    %c0_247 = arith.constant 0 : index
    %c0_248 = arith.constant 0 : index
    %603 = vector.load %arg21[%c0_247, %c0_248] : memref<32x8xf32, #tpu.memory_space<vmem>>, vector<32x8xf32>
    %cst_249 = arith.constant dense<0.000000e+00> : vector<2x8xf32>
    %604 = tpu.matmul %602, %603, %cst_249 {dimension_numbers = #tpu.dot_dimension_numbers<[1], [0], [0], [1], [0, 0, 1, 1], [], []>} : vector<2x32xf32>, vector<32x8xf32>, vector<2x8xf32> -> vector<2x8xf32>
    %c0_250 = arith.constant 0 : index
    %c0_251 = arith.constant 0 : index
    %605 = vector.load %arg22[%c0_250, %c0_251] : memref<1x8xf32, #tpu.memory_space<vmem>>, vector<1x8xf32>
    %606 = vector.broadcast %605 : vector<1x8xf32> to vector<2x8xf32>
    %607 = arith.addf %604, %606 : vector<2x8xf32>
    %cst_252 = arith.constant dense<0xFF800000> : vector<2xf32>
    %608 = vector.multi_reduction <maximumf>, %607, %cst_252 [1] : vector<2x8xf32> to vector<2xf32>
    %609 = vector.shape_cast %608 : vector<2xf32> to vector<2x1xf32>
    %610 = vector.broadcast %609 : vector<2x1xf32> to vector<2x8xf32>
    %611 = arith.subf %607, %610 : vector<2x8xf32>
    %612 = math.exp %611 : vector<2x8xf32>
    %cst_253 = arith.constant dense<0.000000e+00> : vector<2xf32>
    %613 = vector.multi_reduction <add>, %612, %cst_253 [1] : vector<2x8xf32> to vector<2xf32>
    %614 = vector.shape_cast %613 : vector<2xf32> to vector<2x1xf32>
    %615 = math.log %614 : vector<2x1xf32>
    %616 = vector.broadcast %615 : vector<2x1xf32> to vector<2x8xf32>
    %617 = arith.subf %611, %616 : vector<2x8xf32>
    %c0_254 = arith.constant 0 : index
    %c0_255 = arith.constant 0 : index
    %618 = vector.load %arg24[%c0_254, %c0_255] : memref<2x8xf32, #tpu.memory_space<vmem>>, vector<2x8xf32>
    tpu.vector_store %arg24[%c0_254, %c0_255], %617 {strides = array<i32>} : memref<2x8xf32, #tpu.memory_space<vmem>>, vector<2x8xf32>,
    return
  }
}

</mosaic_0001>

<llo_original>
// kernel: forward.1
$region0: #{forward.1}
  #allocation0 [shape = 'u32[]', space=smem, size = 0x4, offset = 0x4, fixed_abs, tag = 'smem constant byte address 0x4 - core index']
  #allocation1 [shape = 'u32[144,128]{1,0:T(1,128)}', space=vmem, size = 0x12000, scoped, tag = 'internal scratch']
  %s0 = inlined_call_operand.vmem [shape: f32[16,16], index: 0, kind: input, shape index: {}]
  %s1 = inlined_call_operand.vmem [shape: f32[2,8,8], index: 1, kind: input, shape index: {}]
  %s2 = inlined_call_operand.vmem [shape: f32[2,1,8], index: 2, kind: input, shape index: {}]
  %s3 = inlined_call_operand.vmem [shape: f32[16,32], index: 3, kind: input, shape index: {}]
  %s4 = inlined_call_operand.vmem [shape: f32[1,32], index: 4, kind: input, shape index: {}]
  %s5 = inlined_call_operand.hbm [shape: f32[16,32], index: 5, kind: input, shape index: {}]
  %s6 = inlined_call_operand.hbm [shape: f32[1,32], index: 6, kind: input, shape index: {}]
  %s7 = inlined_call_operand.vmem [shape: f32[2,32,96], index: 7, kind: input, shape index: {}]
  %s8 = inlined_call_operand.vmem [shape: f32[2,1,96], index: 8, kind: input, shape index: {}]
  %s9 = inlined_call_operand.vmem [shape: f32[2,32,32], index: 9, kind: input, shape index: {}]
  %s10 = inlined_call_operand.vmem [shape: f32[2,1,32], index: 10, kind: input, shape index: {}]
  %s11 = inlined_call_operand.vmem [shape: f32[2,32,64], index: 11, kind: input, shape index: {}]
  %s12 = inlined_call_operand.vmem [shape: f32[2,1,64], index: 12, kind: input, shape index: {}]
  %s13 = inlined_call_operand.vmem [shape: f32[2,64,32], index: 13, kind: input, shape index: {}]
  %s14 = inlined_call_operand.vmem [shape: f32[2,1,32], index: 14, kind: input, shape index: {}]
  %s15 = inlined_call_operand.vmem [shape: f32[2,1,32], index: 15, kind: input, shape index: {}]
  %s16 = inlined_call_operand.hbm [shape: f32[2,1,32], index: 16, kind: input, shape index: {}]
  %s17 = inlined_call_operand.vmem [shape: f32[2,1,32], index: 17, kind: input, shape index: {}]
  %s18 = inlined_call_operand.hbm [shape: f32[2,1,32], index: 18, kind: input, shape index: {}]
  %s19 = inlined_call_operand.vmem [shape: f32[1,32], index: 19, kind: input, shape index: {}]
  %s20 = inlined_call_operand.hbm [shape: f32[1,32], index: 20, kind: input, shape index: {}]
  %s21 = inlined_call_operand.vmem [shape: f32[32,8], index: 21, kind: input, shape index: {}]
  %s22 = inlined_call_operand.hbm [shape: f32[1,8], index: 22, kind: input, shape index: {}]
  %s23 = inlined_call_operand.vmem [shape: f32[2,4], index: 23, kind: input, shape index: {}]
  %s24 = inlined_call_operand.hbm [shape: f32[2,8], index: 24, kind: output, shape index: {}]
  %s25 = sld [smem:[#allocation0]]
  $region134: #{forward.1} parent=0
    _
  %s27 = ssub.s32 1, %s25
  %s28 = scalar_select 0, %s27, %s25
  $region1: #{forward.1} parent=0
    #allocation2 [shape = 'u8[8192]{0}', space=vmem, size = 0x2000, scoped, tag = 'input window, operand 5, single buffered']
    #allocation3 [shape = 's32[1]{0}', space=sflag, size = 0x4, scoped, tag = 'scoped memory for forward.1']
    #allocation4 [shape = 's32[1]{0}', space=sflag, size = 0x4, scoped, tag = 'scoped memory for forward.1']
    #allocation5 [shape = 's32[1]{0}', space=sflag, size = 0x4, scoped, tag = 'scoped memory for forward.1']
    #allocation6 [shape = 'u8[512]{0}', space=vmem, size = 0x400, scoped, tag = 'input window, operand 6, single buffered']
    #allocation7 [shape = 's32[1]{0}', space=sflag, size = 0x4, scoped, tag = 'scoped memory for forward.1']
    #allocation8 [shape = 'u8[1024]{0}', space=vmem, size = 0x400, scoped, tag = 'input window, operand 16, single buffered']
    #allocation9 [shape = 'u8[1024]{0}', space=vmem, size = 0x400, scoped, tag = 'input window, operand 18, single buffered']
    #allocation10 [shape = 's32[1]{0}', space=sflag, size = 0x4, scoped, tag = 'scoped memory for forward.1']
    #allocation11 [shape = 'u8[512]{0}', space=vmem, size = 0x400, scoped, tag = 'input window, operand 20, single buffered']
    #allocation12 [shape = 'u8[512]{0}', space=vmem, size = 0x400, scoped, tag = 'input window, operand 22, single buffered']
    #allocation13 [shape = 's32[1]{0}', space=sflag, size = 0x4, scoped, tag = 'scoped memory for forward.1']
    #allocation14 [shape = 'u8[1024]{0}', space=smem, size = 0x400, scoped, tag = 'input window, operand 23, single buffered']
    #allocation15 [shape = 'u8[1024]{0}', space=vmem, size = 0x400, scoped, tag = 'output window, operand 0, single buffered']
    %29 = vsyncpa [#allocation3], 0
    %30 = vsyncpa [#allocation7], 0
    %31 = vsyncpa [#allocation10], 0
    %32 = vsyncpa [#allocation13], 0
    %33 = vsyncpa [#allocation5], 0
    %34 = vsyncpa [#allocation4], 0
    // Predicated region
    $region2: #{forward.1} parent=1 // pred_check
      _
    $region3: #{forward.1} parent=1 // pred_check_branch
      %36 = sbr.rel (0) target = $region5
    $region4: #{forward.1} parent=1 // pred_region
      _
    $region5: #{forward.1} parent=1 // pred_fallthru
      _
    // Predicated region
    $region6: #{forward.1} parent=1 // pred_check
      _
    $region7: #{forward.1} parent=1 // pred_check_branch
      %38 = sbr.rel (0) target = $region9
    $region8: #{forward.1} parent=1 // pred_region
      _
    $region9: #{forward.1} parent=1 // pred_fallthru
      _
    // Predicated region
    $region10: #{forward.1} parent=1 // pred_check
      _
    $region11: #{forward.1} parent=1 // pred_check_branch
      %40 = sbr.rel (0) target = $region13
    $region12: #{forward.1} parent=1 // pred_region
      _
    $region13: #{forward.1} parent=1 // pred_fallthru
      _
    // Predicated region
    $region14: #{forward.1} parent=1 // pred_check
      _
    $region15: #{forward.1} parent=1 // pred_check_branch
      %42 = sbr.rel (0) target = $region17
    $region16: #{forward.1} parent=1 // pred_region
      _
    $region17: #{forward.1} parent=1 // pred_fallthru
      _
    // Predicated region
    $region18: #{forward.1} parent=1 // pred_check
      _
    $region19: #{forward.1} parent=1 // pred_check_branch
      %44 = sbr.rel (0) target = $region21
    $region20: #{forward.1} parent=1 // pred_region
      _
    $region21: #{forward.1} parent=1 // pred_fallthru
      _
    // Predicated region
    $region22: #{forward.1} parent=1 // pred_check
      _
    $region23: #{forward.1} parent=1 // pred_check_branch
      %46 = sbr.rel (0) target = $region25
    $region24: #{forward.1} parent=1 // pred_region
      %s48 = ssub.s32 256, 256
      %49 = vsyncadd [#allocation3], %s48
      %s50 = sshll.u32 [#allocation2], 4
      %s51 = int_to_ptr.vmem [resolvable:$true] %s50
      %56 = dma.hbm_to_vmem [thread:$0]  %s5, 256, %s51, [#allocation3], 128, 128, 8
    $region25: #{forward.1} parent=1 // pred_fallthru
      _
    // Predicated region
    $region26: #{forward.1} parent=1 // pred_check
      _
    $region27: #{forward.1} parent=1 // pred_check_branch
      %58 = sbr.rel (0) target = $region29
    $region28: #{forward.1} parent=1 // pred_region
      %s60 = ssub.s32 16, 16
      %61 = vsyncadd [#allocation7], %s60
      %s63 = sshll.u32 [#allocation6], 4
      %s64 = int_to_ptr.vmem [resolvable:$true] %s63
      %66 = dma.hbm_to_vmem [thread:$0]  %s6, 16, %s64, [#allocation7]
    $region29: #{forward.1} parent=1 // pred_fallthru
      _
    // Predicated region
    $region30: #{forward.1} parent=1 // pred_check
      _
    $region31: #{forward.1} parent=1 // pred_check_branch
      %68 = sbr.rel (0) target = $region33
    $region32: #{forward.1} parent=1 // pred_region
      _
    $region33: #{forward.1} parent=1 // pred_fallthru
      _
    // Predicated region
    $region34: #{forward.1} parent=1 // pred_check
      _
    $region35: #{forward.1} parent=1 // pred_check_branch
      %70 = sbr.rel (0) target = $region37
    $region36: #{forward.1} parent=1 // pred_region
      _
    $region37: #{forward.1} parent=1 // pred_fallthru
      _
    // Predicated region
    $region38: #{forward.1} parent=1 // pred_check
      _
    $region39: #{forward.1} parent=1 // pred_check_branch
      %72 = sbr.rel (0) target = $region41
    $region40: #{forward.1} parent=1 // pred_region
      _
    $region41: #{forward.1} parent=1 // pred_fallthru
      _
    // Predicated region
    $region42: #{forward.1} parent=1 // pred_check
      _
    $region43: #{forward.1} parent=1 // pred_check_branch
      %74 = sbr.rel (0) target = $region45
    $region44: #{forward.1} parent=1 // pred_region
      _
    $region45: #{forward.1} parent=1 // pred_fallthru
      _
    // Predicated region
    $region46: #{forward.1} parent=1 // pred_check
      _
    $region47: #{forward.1} parent=1 // pred_check_branch
      %76 = sbr.rel (0) target = $region49
    $region48: #{forward.1} parent=1 // pred_region
      _
    $region49: #{forward.1} parent=1 // pred_fallthru
      _
    // Predicated region
    $region50: #{forward.1} parent=1 // pred_check
      _
    $region51: #{forward.1} parent=1 // pred_check_branch
      %78 = sbr.rel (0) target = $region53
    $region52: #{forward.1} parent=1 // pred_region
      _
    $region53: #{forward.1} parent=1 // pred_fallthru
      _
    // Predicated region
    $region54: #{forward.1} parent=1 // pred_check
      _
    $region55: #{forward.1} parent=1 // pred_check_branch
      %80 = sbr.rel (0) target = $region57
    $region56: #{forward.1} parent=1 // pred_region
      _
    $region57: #{forward.1} parent=1 // pred_fallthru
      _
    // Predicated region
    $region58: #{forward.1} parent=1 // pred_check
      _
    $region59: #{forward.1} parent=1 // pred_check_branch
      %82 = sbr.rel (0) target = $region61
    $region60: #{forward.1} parent=1 // pred_region
      _
    $region61: #{forward.1} parent=1 // pred_fallthru
      _
    // Predicated region
    $region62: #{forward.1} parent=1 // pred_check
      _
    $region63: #{forward.1} parent=1 // pred_check_branch
      %84 = sbr.rel (0) target = $region65
    $region64: #{forward.1} parent=1 // pred_region
      _
    $region65: #{forward.1} parent=1 // pred_fallthru
      _
    // Predicated region
    $region66: #{forward.1} parent=1 // pred_check
      _
    $region67: #{forward.1} parent=1 // pred_check_branch
      %86 = sbr.rel (0) target = $region69
    $region68: #{forward.1} parent=1 // pred_region
      %s88 = ssub.s32 32, 32
      %89 = vsyncadd [#allocation7], %s88
      %s90 = sshll.u32 [#allocation8], 4
      %s91 = int_to_ptr.vmem [resolvable:$true] %s90
      %96 = dma.hbm_to_vmem [thread:$0]  %s16, 32, %s91, [#allocation7], 16, 16, 1
    $region69: #{forward.1} parent=1 // pred_fallthru
      _
    // Predicated region
    $region70: #{forward.1} parent=1 // pred_check
      _
    $region71: #{forward.1} parent=1 // pred_check_branch
      %98 = sbr.rel (0) target = $region73
    $region72: #{forward.1} parent=1 // pred_region
      _
    $region73: #{forward.1} parent=1 // pred_fallthru
      _
    // Predicated region
    $region74: #{forward.1} parent=1 // pred_check
      _
    $region75: #{forward.1} parent=1 // pred_check_branch
      %100 = sbr.rel (0) target = $region77
    $region76: #{forward.1} parent=1 // pred_region
      %s102 = ssub.s32 32, 32
      %103 = vsyncadd [#allocation10], %s102
      %s104 = sshll.u32 [#allocation9], 4
      %s105 = int_to_ptr.vmem [resolvable:$true] %s104
      %110 = dma.hbm_to_vmem [thread:$0]  %s18, 32, %s105, [#allocation10], 16, 16, 1
    $region77: #{forward.1} parent=1 // pred_fallthru
      _
    // Predicated region
    $region78: #{forward.1} parent=1 // pred_check
      _
    $region79: #{forward.1} parent=1 // pred_check_branch
      %112 = sbr.rel (0) target = $region81
    $region80: #{forward.1} parent=1 // pred_region
      _
    $region81: #{forward.1} parent=1 // pred_fallthru
      _
    // Predicated region
    $region82: #{forward.1} parent=1 // pred_check
      _
    $region83: #{forward.1} parent=1 // pred_check_branch
      %114 = sbr.rel (0) target = $region85
    $region84: #{forward.1} parent=1 // pred_region
      %s116 = ssub.s32 16, 16
      %117 = vsyncadd [#allocation10], %s116
      %s119 = sshll.u32 [#allocation11], 4
      %s120 = int_to_ptr.vmem [resolvable:$true] %s119
      %122 = dma.hbm_to_vmem [thread:$0]  %s20, 16, %s120, [#allocation10]
    $region85: #{forward.1} parent=1 // pred_fallthru
      _
    // Predicated region
    $region86: #{forward.1} parent=1 // pred_check
      _
    $region87: #{forward.1} parent=1 // pred_check_branch
      %124 = sbr.rel (0) target = $region89
    $region88: #{forward.1} parent=1 // pred_region
      _
    $region89: #{forward.1} parent=1 // pred_fallthru
      _
    // Predicated region
    $region90: #{forward.1} parent=1 // pred_check
      _
    $region91: #{forward.1} parent=1 // pred_check_branch
      %126 = sbr.rel (0) target = $region93
    $region92: #{forward.1} parent=1 // pred_region
      %s128 = ssub.s32 16, 16
      %129 = vsyncadd [#allocation13], %s128
      %s131 = sshll.u32 [#allocation12], 4
      %s132 = int_to_ptr.vmem [resolvable:$true] %s131
      %134 = dma.hbm_to_vmem [thread:$0]  %s22, 16, %s132, [#allocation13]
    $region93: #{forward.1} parent=1 // pred_fallthru
      _
    // Predicated region
    $region94: #{forward.1} parent=1 // pred_check
      _
    $region95: #{forward.1} parent=1 // pred_check_branch
      %136 = sbr.rel (0) target = $region97
    $region96: #{forward.1} parent=1 // pred_region
      %s138 = ssub.s32 32, 32
      %139 = vsyncadd [#allocation5], %s138
      %s141 = sshll.u32 %s23, 4
      %s142 = int_to_ptr.vmem [resolvable:$true] %s141
      %144 = dma.vmem_to_smem %s142, 32, [#allocation14], [#allocation5]
    $region97: #{forward.1} parent=1 // pred_fallthru
      _
    // Predicated region
    $region98: #{forward.1} parent=1 // pred_check
      _
    $region99: #{forward.1} parent=1 // pred_check_branch
      %146 = sbr.rel (0) target = $region101
    $region100: #{forward.1} parent=1 // pred_region
      %147 = dma.done [#allocation3], 256
    $region101: #{forward.1} parent=1 // pred_fallthru
      _
    // Predicated region
    $region102: #{forward.1} parent=1 // pred_check
      _
    $region103: #{forward.1} parent=1 // pred_check_branch
      %149 = sbr.rel (0) target = $region105
    $region104: #{forward.1} parent=1 // pred_region
      %150 = dma.done [#allocation7], 16
    $region105: #{forward.1} parent=1 // pred_fallthru
      _
    // Predicated region
    $region106: #{forward.1} parent=1 // pred_check
      _
    $region107: #{forward.1} parent=1 // pred_check_branch
      %152 = sbr.rel (0) target = $region109
    $region108: #{forward.1} parent=1 // pred_region
      %153 = dma.done [#allocation7], 32
    $region109: #{forward.1} parent=1 // pred_fallthru
      _
    // Predicated region
    $region110: #{forward.1} parent=1 // pred_check
      _
    $region111: #{forward.1} parent=1 // pred_check_branch
      %155 = sbr.rel (0) target = $region113
    $region112: #{forward.1} parent=1 // pred_region
      %156 = dma.done [#allocation10], 32
    $region113: #{forward.1} parent=1 // pred_fallthru
      _
    // Predicated region
    $region114: #{forward.1} parent=1 // pred_check
      _
    $region115: #{forward.1} parent=1 // pred_check_branch
      %158 = sbr.rel (0) target = $region117
    $region116: #{forward.1} parent=1 // pred_region
      %159 = dma.done [#allocation10], 16
    $region117: #{forward.1} parent=1 // pred_fallthru
      _
    // Predicated region
    $region118: #{forward.1} parent=1 // pred_check
      _
    $region119: #{forward.1} parent=1 // pred_check_branch
      %161 = sbr.rel (0) target = $region121
    $region120: #{forward.1} parent=1 // pred_region
      %162 = dma.done [#allocation13], 16
    $region121: #{forward.1} parent=1 // pred_fallthru
      _
    // Predicated region
    $region122: #{forward.1} parent=1 // pred_check
      _
    $region123: #{forward.1} parent=1 // pred_check_branch
      %164 = sbr.rel (0) target = $region125
    $region124: #{forward.1} parent=1 // pred_region
      %165 = dma.done [#allocation5], 32
    $region125: #{forward.1} parent=1 // pred_fallthru
      _
    %166 = sfence
    %v167 = vld [vmem:[%s0] sm:$0xff]
    %v168 = vld [vmem:[%s0 + $0x8] sm:$0xff]
    %v169 = vld [vmem:[%s3] sm:$0xff]
    %v170 = vld [vmem:[%s3 + $0x8] sm:$0xff]
    %v171 = vld [vmem:[#allocation2] sm:$0xff]
    %v172 = vld [vmem:[#allocation2 + $0x8] sm:$0xff]
    %v173 = vadd.f32 %v169, %v171
    %v174 = vadd.f32 %v170, %v172
    %v175 = vld [vmem:[%s4] sm:$0x1]
    %v176 = vld [vmem:[#allocation6] sm:$0x1]
    %v177 = vadd.f32 %v175, %v176
    %v179 = vlaneseq
    %v180 = vshrl.u32 %v179, 7
    %v181 = vsub.s32 0, %v180
    %v182 = vrot.slane %v177, %v181
    %vm184 = vcmask 130048
    %v186 = vsel %vm184, %v167, 0
    %v189 = vsel %vm184, %v168, 0
    %191 = vmatprep.subr.mxu0 0.0
    %192 = vmatpush1.msra.mxu0 0.0
    %193 = vmatprep.subr.mxu0 0.0
    %194 = vmatpush1.msra.mxu0 0.0
    %195 = vmatprep.subr.mxu0 0.0
    %196 = vmatpush1.msra.mxu0 0.0
    %197 = vmatprep.subr.mxu0 0.0
    %198 = vmatpush1.msra.mxu0 0.0
    %199 = vmatprep.subr.mxu0 0.0
    %200 = vmatpush1.msra.mxu0 0.0
    %201 = vmatprep.subr.mxu0 0.0
    %202 = vmatpush1.msra.mxu0 0.0
    %203 = vmatprep.subr.mxu0 0.0
    %204 = vmatpush1.msra.mxu0 0.0
    %205 = vmatprep.subr.mxu0 0.0
    %206 = vmatpush1.msra.mxu0 0.0
    %207 = vmatprep.subr.mxu0 0.0
    %208 = vmatpush1.msra.mxu0 0.0
    %209 = vmatprep.subr.mxu0 0.0
    %210 = vmatpush1.msra.mxu0 0.0
    %211 = vmatprep.subr.mxu0 0.0
    %212 = vmatpush1.msra.mxu0 0.0
    %213 = vmatprep.subr.mxu0 0.0
    %214 = vmatpush1.msra.mxu0 0.0
    %215 = vmatprep.subr.mxu0 0.0
    %216 = vmatpush1.msra.mxu0 0.0
    %217 = vmatprep.subr.mxu0 0.0
    %218 = vmatpush1.msra.mxu0 0.0
    %219 = vmatprep.subr.mxu0 0.0
    %220 = vmatpush1.msra.mxu0 %v174
    %221 = vmatprep.subr.mxu0 0.0
    %222 = vmatpush1.msra.mxu0 %v173
    %223 = vmatprep.subr.mxu0 0.0
    %224 = vmatpush2.msra.mxu0 0.0
    %225 = vmatprep.subr.mxu0 0.0
    %226 = vmatpush2.msra.mxu0 0.0
    %227 = vmatprep.subr.mxu0 0.0
    %228 = vmatpush2.msra.mxu0 0.0
    %229 = vmatprep.subr.mxu0 0.0
    %230 = vmatpush2.msra.mxu0 0.0
    %231 = vmatprep.subr.mxu0 0.0
    %232 = vmatpush2.msra.mxu0 0.0
    %233 = vmatprep.subr.mxu0 0.0
    %234 = vmatpush2.msra.mxu0 0.0
    %235 = vmatprep.subr.mxu0 0.0
    %236 = vmatpush2.msra.mxu0 0.0
    %237 = vmatprep.subr.mxu0 0.0
    %238 = vmatpush2.msra.mxu0 0.0
    %239 = vmatprep.subr.mxu0 0.0
    %240 = vmatpush2.msra.mxu0 0.0
    %241 = vmatprep.subr.mxu0 0.0
    %242 = vmatpush2.msra.mxu0 0.0
    %243 = vmatprep.subr.mxu0 0.0
    %244 = vmatpush2.msra.mxu0 0.0
    %245 = vmatprep.subr.mxu0 0.0
    %246 = vmatpush2.msra.mxu0 0.0
    %247 = vmatprep.subr.mxu0 0.0
    %248 = vmatpush2.msra.mxu0 0.0
    %249 = vmatprep.subr.mxu0 0.0
    %250 = vmatpush2.msra.mxu0 0.0
    %251 = vmatprep.subr.mxu0 0.0
    %252 = vmatpush2.msra.mxu0 0.0
    %253 = vmatprep.subr.mxu0 0.0
    %254 = vmatpush2.msra.mxu0 0.0
    %255 = vmatprep.mubr.f32.mxu0 0.0
    %256 = vmatmul.mubr.f32.gmra.mxu0 %v186
    %v257 = vpop.f32.mrf.mxu0
    %v258 = vadd.f32 %v182, %v257
    %v259 = vpop.f32.mrf.mxu0
    %260 = vmatprep.mubr.f32.mxu0 0.0
    %261 = vmatmul.mubr.f32.gmra.mxu0 %v189
    %v262 = vpop.f32.mrf.mxu0
    %v263 = vadd.f32 %v182, %v262
    %v264 = vpop.f32.mrf.mxu0
    %265 = vdwg.mxu0
    %v266 = vld [vmem:[%s1] sm:$0xff]
    %s267 = scalar_lea.vmem %s1, 8
    %v268 = vld [vmem:[%s267] sm:$0xff]
    %v269 = vld [vmem:[%s2] sm:$0x1]
    %vm270 = vcmp.gt.f32.partialorder %v269, 0.0
    %v271 = vsel %vm270, 0.0, -1e+09
    %s272 = scalar_lea.vmem %s2, 1
    %v273 = vld [vmem:[%s272] sm:$0x1]
    %vm274 = vcmp.gt.f32.partialorder %v273, 0.0
    %v275 = vsel %vm274, 0.0, -1e+09
    %v276 = vld [vmem:[%s7] sm:$0xff]
    %v277 = vld [vmem:[%s7 + $0x8] sm:$0xff]
    %v278 = vld [vmem:[%s7 + $0x10] sm:$0xff]
    %v279 = vld [vmem:[%s7 + $0x18] sm:$0xff]
    %v280 = vld [vmem:[%s8] sm:$0x1]
    %v282 = vlaneseq
    %v283 = vshrl.u32 %v282, 7
    %v284 = vsub.s32 0, %v283
    %v285 = vrot.slane %v280, %v284
    %vm287 = vcmask 261120
    %v289 = vsel %vm287, %v258, 0
    %v292 = vsel %vm287, %v263, 0
    %294 = vmatprep.subr.mxu0 0.0
    %295 = vmatpush1.msra.mxu0 0.0
    %296 = vmatprep.subr.mxu0 0.0
    %297 = vmatpush1.msra.mxu0 0.0
    %298 = vmatprep.subr.mxu0 0.0
    %299 = vmatpush1.msra.mxu0 0.0
    %300 = vmatprep.subr.mxu0 0.0
    %301 = vmatpush1.msra.mxu0 0.0
    %302 = vmatprep.subr.mxu0 0.0
    %303 = vmatpush1.msra.mxu0 0.0
    %304 = vmatprep.subr.mxu0 0.0
    %305 = vmatpush1.msra.mxu0 0.0
    %306 = vmatprep.subr.mxu0 0.0
    %307 = vmatpush1.msra.mxu0 0.0
    %308 = vmatprep.subr.mxu0 0.0
    %309 = vmatpush1.msra.mxu0 0.0
    %310 = vmatprep.subr.mxu0 0.0
    %311 = vmatpush1.msra.mxu0 0.0
    %312 = vmatprep.subr.mxu0 0.0
    %313 = vmatpush1.msra.mxu0 0.0
    %314 = vmatprep.subr.mxu0 0.0
    %315 = vmatpush1.msra.mxu0 0.0
    %316 = vmatprep.subr.mxu0 0.0
    %317 = vmatpush1.msra.mxu0 0.0
    %318 = vmatprep.subr.mxu0 0.0
    %319 = vmatpush1.msra.mxu0 %v279
    %320 = vmatprep.subr.mxu0 0.0
    %321 = vmatpush1.msra.mxu0 %v278
    %322 = vmatprep.subr.mxu0 0.0
    %323 = vmatpush1.msra.mxu0 %v277
    %324 = vmatprep.subr.mxu0 0.0
    %325 = vmatpush1.msra.mxu0 %v276
    %326 = vmatprep.subr.mxu0 0.0
    %327 = vmatpush2.msra.mxu0 0.0
    %328 = vmatprep.subr.mxu0 0.0
    %329 = vmatpush2.msra.mxu0 0.0
    %330 = vmatprep.subr.mxu0 0.0
    %331 = vmatpush2.msra.mxu0 0.0
    %332 = vmatprep.subr.mxu0 0.0
    %333 = vmatpush2.msra.mxu0 0.0
    %334 = vmatprep.subr.mxu0 0.0
    %335 = vmatpush2.msra.mxu0 0.0
    %336 = vmatprep.subr.mxu0 0.0
    %337 = vmatpush2.msra.mxu0 0.0
    %338 = vmatprep.subr.mxu0 0.0
    %339 = vmatpush2.msra.mxu0 0.0
    %340 = vmatprep.subr.mxu0 0.0
    %341 = vmatpush2.msra.mxu0 0.0
    %342 = vmatprep.subr.mxu0 0.0
    %343 = vmatpush2.msra.mxu0 0.0
    %344 = vmatprep.subr.mxu0 0.0
    %345 = vmatpush2.msra.mxu0 0.0
    %346 = vmatprep.subr.mxu0 0.0
    %347 = vmatpush2.msra.mxu0 0.0
    %348 = vmatprep.subr.mxu0 0.0
    %349 = vmatpush2.msra.mxu0 0.0
    %350 = vmatprep.subr.mxu0 0.0
    %351 = vmatpush2.msra.mxu0 0.0
    %352 = vmatprep.subr.mxu0 0.0
    %353 = vmatpush2.msra.mxu0 0.0
    %354 = vmatprep.subr.mxu0 0.0
    %355 = vmatpush2.msra.mxu0 0.0
    %356 = vmatprep.subr.mxu0 0.0
    %357 = vmatpush2.msra.mxu0 0.0
    %358 = vmatprep.mubr.f32.mxu0 0.0
    %359 = vmatmul.mubr.f32.gmra.mxu0 %v289
    %v360 = vpop.f32.mrf.mxu0
    %v361 = vadd.f32 %v285, %v360
    %v362 = vpop.f32.mrf.mxu0
    %363 = vmatprep.mubr.f32.mxu0 0.0
    %364 = vmatmul.mubr.f32.gmra.mxu0 %v292
    %v365 = vpop.f32.mrf.mxu0
    %v366 = vadd.f32 %v285, %v365
    %v367 = vpop.f32.mrf.mxu0
    %368 = vdwg.mxu0
    %370 = vrot.lane.b32.xlu0 %v361, 96
    %v371 = vpop.permute.xlu0 %370
    %vm372 = vcmask 64512
    %v373 = vsel %vm372, %v361, 0
    %v375 = vsel %vm372, %v371, 0
    %377 = vmatprep.subr.mxu0 0.0
    %378 = vmatpush1.xpose.msra.mxu0 0.0
    %379 = vmatprep.subr.mxu0 0.0
    %380 = vmatpush1.xpose.msra.mxu0 0.0
    %381 = vmatprep.subr.mxu0 0.0
    %382 = vmatpush1.xpose.msra.mxu0 0.0
    %383 = vmatprep.subr.mxu0 0.0
    %384 = vmatpush1.xpose.msra.mxu0 0.0
    %385 = vmatprep.subr.mxu0 0.0
    %386 = vmatpush1.xpose.msra.mxu0 0.0
    %387 = vmatprep.subr.mxu0 0.0
    %388 = vmatpush1.xpose.msra.mxu0 0.0
    %389 = vmatprep.subr.mxu0 0.0
    %390 = vmatpush1.xpose.msra.mxu0 0.0
    %391 = vmatprep.subr.mxu0 0.0
    %392 = vmatpush1.xpose.msra.mxu0 0.0
    %393 = vmatprep.subr.mxu0 0.0
    %394 = vmatpush1.xpose.msra.mxu0 0.0
    %395 = vmatprep.subr.mxu0 0.0
    %396 = vmatpush1.xpose.msra.mxu0 0.0
    %397 = vmatprep.subr.mxu0 0.0
    %398 = vmatpush1.xpose.msra.mxu0 0.0
    %399 = vmatprep.subr.mxu0 0.0
    %400 = vmatpush1.xpose.msra.mxu0 0.0
    %401 = vmatprep.subr.mxu0 0.0
    %402 = vmatpush1.xpose.msra.mxu0 0.0
    %403 = vmatprep.subr.mxu0 0.0
    %404 = vmatpush1.xpose.msra.mxu0 0.0
    %405 = vmatprep.subr.mxu0 0.0
    %406 = vmatpush1.xpose.msra.mxu0 0.0
    %407 = vmatprep.subr.mxu0 0.0
    %408 = vmatpush1.xpose.msra.mxu0 %v375
    %409 = vmatprep.subr.mxu0 0.0
    %410 = vmatpush2.xpose.msra.mxu0 0.0
    %411 = vmatprep.subr.mxu0 0.0
    %412 = vmatpush2.xpose.msra.mxu0 0.0
    %413 = vmatprep.subr.mxu0 0.0
    %414 = vmatpush2.xpose.msra.mxu0 0.0
    %415 = vmatprep.subr.mxu0 0.0
    %416 = vmatpush2.xpose.msra.mxu0 0.0
    %417 = vmatprep.subr.mxu0 0.0
    %418 = vmatpush2.xpose.msra.mxu0 0.0
    %419 = vmatprep.subr.mxu0 0.0
    %420 = vmatpush2.xpose.msra.mxu0 0.0
    %421 = vmatprep.subr.mxu0 0.0
    %422 = vmatpush2.xpose.msra.mxu0 0.0
    %423 = vmatprep.subr.mxu0 0.0
    %424 = vmatpush2.xpose.msra.mxu0 0.0
    %425 = vmatprep.subr.mxu0 0.0
    %426 = vmatpush2.xpose.msra.mxu0 0.0
    %427 = vmatprep.subr.mxu0 0.0
    %428 = vmatpush2.xpose.msra.mxu0 0.0
    %429 = vmatprep.subr.mxu0 0.0
    %430 = vmatpush2.xpose.msra.mxu0 0.0
    %431 = vmatprep.subr.mxu0 0.0
    %432 = vmatpush2.xpose.msra.mxu0 0.0
    %433 = vmatprep.subr.mxu0 0.0
    %434 = vmatpush2.xpose.msra.mxu0 0.0
    %435 = vmatprep.subr.mxu0 0.0
    %436 = vmatpush2.xpose.msra.mxu0 0.0
    %437 = vmatprep.subr.mxu0 0.0
    %438 = vmatpush2.xpose.msra.mxu0 0.0
    %439 = vmatprep.subr.mxu0 0.0
    %440 = vmatpush2.xpose.msra.mxu0 0.0
    %441 = vmatprep.mubr.f32.mxu0 0.0
    %442 = vmatmul.mubr.f32.gmra.mxu0 %v373
    %v443 = vpop.f32.mrf.mxu0
    %v444 = vadd.f32 0.0, %v443
    %v445 = vpop.f32.mrf.mxu0
    %446 = vdwg.mxu0
    %v447 = vmul.f32 %v444, 0.35355338
    %s448 = sld [smem:[#allocation14]]
    %v449 = vstv %s448
    %v450 = vmul.f32 %v266, %v449
    %v451 = vsub.f32 %v447, %v450
    %v453 = vlaneseq
    %v454 = vshrl.u32 %v453, 7
    %v455 = vsub.s32 0, %v454
    %v456 = vrot.slane %v271, %v455
    %v458 = vadd.f32 %v451, %v456
    %v459 = vsel %vm372, %v458, -inf
    %460 = vmax.xlane.f32.xlu0 %v459
    %v461 = vpop.xlane.xlu0 %460
    %v462 = vsub.f32 %v458, %v461
    %v463 = vmul.f32 %v462, 1.442695
    %v464 = vpow.pop %v463
    %v465 = vsel %vm372, %v464, 0.0
    %466 = vadd.xlane.f32.xlu0 %v465
    %v467 = vpop.xlane.xlu0 %466
    %v468 = vrcp.pop %v467
    %v469 = vmul.f32 %v464, %v468
    %470 = vrot.lane.b32.xlu0 %v361, 64
    %v471 = vpop.permute.xlu0 %470
    %v474 = vsel %vm372, %v469, 0
    %476 = vmatprep.subr.mxu0 0.0
    %477 = vmatpush1.msra.mxu0 0.0
    %478 = vmatprep.subr.mxu0 0.0
    %479 = vmatpush1.msra.mxu0 0.0
    %480 = vmatprep.subr.mxu0 0.0
    %481 = vmatpush1.msra.mxu0 0.0
    %482 = vmatprep.subr.mxu0 0.0
    %483 = vmatpush1.msra.mxu0 0.0
    %484 = vmatprep.subr.mxu0 0.0
    %485 = vmatpush1.msra.mxu0 0.0
    %486 = vmatprep.subr.mxu0 0.0
    %487 = vmatpush1.msra.mxu0 0.0
    %488 = vmatprep.subr.mxu0 0.0
    %489 = vmatpush1.msra.mxu0 0.0
    %490 = vmatprep.subr.mxu0 0.0
    %491 = vmatpush1.msra.mxu0 0.0
    %492 = vmatprep.subr.mxu0 0.0
    %493 = vmatpush1.msra.mxu0 0.0
    %494 = vmatprep.subr.mxu0 0.0
    %495 = vmatpush1.msra.mxu0 0.0
    %496 = vmatprep.subr.mxu0 0.0
    %497 = vmatpush1.msra.mxu0 0.0
    %498 = vmatprep.subr.mxu0 0.0
    %499 = vmatpush1.msra.mxu0 0.0
    %500 = vmatprep.subr.mxu0 0.0
    %501 = vmatpush1.msra.mxu0 0.0
    %502 = vmatprep.subr.mxu0 0.0
    %503 = vmatpush1.msra.mxu0 0.0
    %504 = vmatprep.subr.mxu0 0.0
    %505 = vmatpush1.msra.mxu0 0.0
    %506 = vmatprep.subr.mxu0 0.0
    %507 = vmatpush1.msra.mxu0 %v471
    %508 = vmatprep.subr.mxu0 0.0
    %509 = vmatpush2.msra.mxu0 0.0
    %510 = vmatprep.subr.mxu0 0.0
    %511 = vmatpush2.msra.mxu0 0.0
    %512 = vmatprep.subr.mxu0 0.0
    %513 = vmatpush2.msra.mxu0 0.0
    %514 = vmatprep.subr.mxu0 0.0
    %515 = vmatpush2.msra.mxu0 0.0
    %516 = vmatprep.subr.mxu0 0.0
    %517 = vmatpush2.msra.mxu0 0.0
    %518 = vmatprep.subr.mxu0 0.0
    %519 = vmatpush2.msra.mxu0 0.0
    %520 = vmatprep.subr.mxu0 0.0
    %521 = vmatpush2.msra.mxu0 0.0
    %522 = vmatprep.subr.mxu0 0.0
    %523 = vmatpush2.msra.mxu0 0.0
    %524 = vmatprep.subr.mxu0 0.0
    %525 = vmatpush2.msra.mxu0 0.0
    %526 = vmatprep.subr.mxu0 0.0
    %527 = vmatpush2.msra.mxu0 0.0
    %528 = vmatprep.subr.mxu0 0.0
    %529 = vmatpush2.msra.mxu0 0.0
    %530 = vmatprep.subr.mxu0 0.0
    %531 = vmatpush2.msra.mxu0 0.0
    %532 = vmatprep.subr.mxu0 0.0
    %533 = vmatpush2.msra.mxu0 0.0
    %534 = vmatprep.subr.mxu0 0.0
    %535 = vmatpush2.msra.mxu0 0.0
    %536 = vmatprep.subr.mxu0 0.0
    %537 = vmatpush2.msra.mxu0 0.0
    %538 = vmatprep.subr.mxu0 0.0
    %539 = vmatpush2.msra.mxu0 0.0
    %540 = vmatprep.mubr.f32.mxu0 0.0
    %541 = vmatmul.mubr.f32.gmra.mxu0 %v474
    %v542 = vpop.f32.mrf.mxu0
    %v543 = vadd.f32 0.0, %v542
    %v544 = vpop.f32.mrf.mxu0
    %545 = vdwg.mxu0
    %546 = vrot.lane.b32.xlu0 %v361, 120
    %v547 = vpop.permute.xlu0 %546
    %548 = vrot.lane.b32.xlu0 %v361, 88
    %v549 = vpop.permute.xlu0 %548
    %v550 = vsel %vm372, %v547, 0
    %v552 = vsel %vm372, %v549, 0
    %554 = vmatprep.subr.mxu0 0.0
    %555 = vmatpush1.xpose.msra.mxu0 0.0
    %556 = vmatprep.subr.mxu0 0.0
    %557 = vmatpush1.xpose.msra.mxu0 0.0
    %558 = vmatprep.subr.mxu0 0.0
    %559 = vmatpush1.xpose.msra.mxu0 0.0
    %560 = vmatprep.subr.mxu0 0.0
    %561 = vmatpush1.xpose.msra.mxu0 0.0
    %562 = vmatprep.subr.mxu0 0.0
    %563 = vmatpush1.xpose.msra.mxu0 0.0
    %564 = vmatprep.subr.mxu0 0.0
    %565 = vmatpush1.xpose.msra.mxu0 0.0
    %566 = vmatprep.subr.mxu0 0.0
    %567 = vmatpush1.xpose.msra.mxu0 0.0
    %568 = vmatprep.subr.mxu0 0.0
    %569 = vmatpush1.xpose.msra.mxu0 0.0
    %570 = vmatprep.subr.mxu0 0.0
    %571 = vmatpush1.xpose.msra.mxu0 0.0
    %572 = vmatprep.subr.mxu0 0.0
    %573 = vmatpush1.xpose.msra.mxu0 0.0
    %574 = vmatprep.subr.mxu0 0.0
    %575 = vmatpush1.xpose.msra.mxu0 0.0
    %576 = vmatprep.subr.mxu0 0.0
    %577 = vmatpush1.xpose.msra.mxu0 0.0
    %578 = vmatprep.subr.mxu0 0.0
    %579 = vmatpush1.xpose.msra.mxu0 0.0
    %580 = vmatprep.subr.mxu0 0.0
    %581 = vmatpush1.xpose.msra.mxu0 0.0
    %582 = vmatprep.subr.mxu0 0.0
    %583 = vmatpush1.xpose.msra.mxu0 0.0
    %584 = vmatprep.subr.mxu0 0.0
    %585 = vmatpush1.xpose.msra.mxu0 %v552
    %586 = vmatprep.subr.mxu0 0.0
    %587 = vmatpush2.xpose.msra.mxu0 0.0
    %588 = vmatprep.subr.mxu0 0.0
    %589 = vmatpush2.xpose.msra.mxu0 0.0
    %590 = vmatprep.subr.mxu0 0.0
    %591 = vmatpush2.xpose.msra.mxu0 0.0
    %592 = vmatprep.subr.mxu0 0.0
    %593 = vmatpush2.xpose.msra.mxu0 0.0
    %594 = vmatprep.subr.mxu0 0.0
    %595 = vmatpush2.xpose.msra.mxu0 0.0
    %596 = vmatprep.subr.mxu0 0.0
    %597 = vmatpush2.xpose.msra.mxu0 0.0
    %598 = vmatprep.subr.mxu0 0.0
    %599 = vmatpush2.xpose.msra.mxu0 0.0
    %600 = vmatprep.subr.mxu0 0.0
    %601 = vmatpush2.xpose.msra.mxu0 0.0
    %602 = vmatprep.subr.mxu0 0.0
    %603 = vmatpush2.xpose.msra.mxu0 0.0
    %604 = vmatprep.subr.mxu0 0.0
    %605 = vmatpush2.xpose.msra.mxu0 0.0
    %606 = vmatprep.subr.mxu0 0.0
    %607 = vmatpush2.xpose.msra.mxu0 0.0
    %608 = vmatprep.subr.mxu0 0.0
    %609 = vmatpush2.xpose.msra.mxu0 0.0
    %610 = vmatprep.subr.mxu0 0.0
    %611 = vmatpush2.xpose.msra.mxu0 0.0
    %612 = vmatprep.subr.mxu0 0.0
    %613 = vmatpush2.xpose.msra.mxu0 0.0
    %614 = vmatprep.subr.mxu0 0.0
    %615 = vmatpush2.xpose.msra.mxu0 0.0
    %616 = vmatprep.subr.mxu0 0.0
    %617 = vmatpush2.xpose.msra.mxu0 0.0
    %618 = vmatprep.mubr.f32.mxu0 0.0
    %619 = vmatmul.mubr.f32.gmra.mxu0 %v550
    %v620 = vpop.f32.mrf.mxu0
    %v621 = vadd.f32 0.0, %v620
    %v622 = vpop.f32.mrf.mxu0
    %623 = vdwg.mxu0
    %v624 = vmul.f32 %v621, 0.35355338
    %s625 = sld [smem:[#allocation14 + $0x1]]
    %v626 = vstv %s625
    %v627 = vmul.f32 %v266, %v626
    %v628 = vsub.f32 %v624, %v627
    %v629 = vadd.f32 %v628, %v456
    %v630 = vsel %vm372, %v629, -inf
    %631 = vmax.xlane.f32.xlu0 %v630
    %v632 = vpop.xlane.xlu0 %631
    %v633 = vsub.f32 %v629, %v632
    %v634 = vmul.f32 %v633, 1.442695
    %v635 = vpow.pop %v634
    %v636 = vsel %vm372, %v635, 0.0
    %637 = vadd.xlane.f32.xlu0 %v636
    %v638 = vpop.xlane.xlu0 %637
    %v639 = vrcp.pop %v638
    %v640 = vmul.f32 %v635, %v639
    %641 = vrot.lane.b32.xlu0 %v361, 56
    %v642 = vpop.permute.xlu0 %641
    %v645 = vsel %vm372, %v640, 0
    %647 = vmatprep.subr.mxu0 0.0
    %648 = vmatpush1.msra.mxu0 0.0
    %649 = vmatprep.subr.mxu0 0.0
    %650 = vmatpush1.msra.mxu0 0.0
    %651 = vmatprep.subr.mxu0 0.0
    %652 = vmatpush1.msra.mxu0 0.0
    %653 = vmatprep.subr.mxu0 0.0
    %654 = vmatpush1.msra.mxu0 0.0
    %655 = vmatprep.subr.mxu0 0.0
    %656 = vmatpush1.msra.mxu0 0.0
    %657 = vmatprep.subr.mxu0 0.0
    %658 = vmatpush1.msra.mxu0 0.0
    %659 = vmatprep.subr.mxu0 0.0
    %660 = vmatpush1.msra.mxu0 0.0
    %661 = vmatprep.subr.mxu0 0.0
    %662 = vmatpush1.msra.mxu0 0.0
    %663 = vmatprep.subr.mxu0 0.0
    %664 = vmatpush1.msra.mxu0 0.0
    %665 = vmatprep.subr.mxu0 0.0
    %666 = vmatpush1.msra.mxu0 0.0
    %667 = vmatprep.subr.mxu0 0.0
    %668 = vmatpush1.msra.mxu0 0.0
    %669 = vmatprep.subr.mxu0 0.0
    %670 = vmatpush1.msra.mxu0 0.0
    %671 = vmatprep.subr.mxu0 0.0
    %672 = vmatpush1.msra.mxu0 0.0
    %673 = vmatprep.subr.mxu0 0.0
    %674 = vmatpush1.msra.mxu0 0.0
    %675 = vmatprep.subr.mxu0 0.0
    %676 = vmatpush1.msra.mxu0 0.0
    %677 = vmatprep.subr.mxu0 0.0
    %678 = vmatpush1.msra.mxu0 %v642
    %679 = vmatprep.subr.mxu0 0.0
    %680 = vmatpush2.msra.mxu0 0.0
    %681 = vmatprep.subr.mxu0 0.0
    %682 = vmatpush2.msra.mxu0 0.0
    %683 = vmatprep.subr.mxu0 0.0
    %684 = vmatpush2.msra.mxu0 0.0
    %685 = vmatprep.subr.mxu0 0.0
    %686 = vmatpush2.msra.mxu0 0.0
    %687 = vmatprep.subr.mxu0 0.0
    %688 = vmatpush2.msra.mxu0 0.0
    %689 = vmatprep.subr.mxu0 0.0
    %690 = vmatpush2.msra.mxu0 0.0
    %691 = vmatprep.subr.mxu0 0.0
    %692 = vmatpush2.msra.mxu0 0.0
    %693 = vmatprep.subr.mxu0 0.0
    %694 = vmatpush2.msra.mxu0 0.0
    %695 = vmatprep.subr.mxu0 0.0
    %696 = vmatpush2.msra.mxu0 0.0
    %697 = vmatprep.subr.mxu0 0.0
    %698 = vmatpush2.msra.mxu0 0.0
    %699 = vmatprep.subr.mxu0 0.0
    %700 = vmatpush2.msra.mxu0 0.0
    %701 = vmatprep.subr.mxu0 0.0
    %702 = vmatpush2.msra.mxu0 0.0
    %703 = vmatprep.subr.mxu0 0.0
    %704 = vmatpush2.msra.mxu0 0.0
    %705 = vmatprep.subr.mxu0 0.0
    %706 = vmatpush2.msra.mxu0 0.0
    %707 = vmatprep.subr.mxu0 0.0
    %708 = vmatpush2.msra.mxu0 0.0
    %709 = vmatprep.subr.mxu0 0.0
    %710 = vmatpush2.msra.mxu0 0.0
    %711 = vmatprep.mubr.f32.mxu0 0.0
    %712 = vmatmul.mubr.f32.gmra.mxu0 %v645
    %v713 = vpop.f32.mrf.mxu0
    %v714 = vadd.f32 0.0, %v713
    %v715 = vpop.f32.mrf.mxu0
    %716 = vdwg.mxu0
    %717 = vrot.lane.b32.xlu0 %v361, 112
    %v718 = vpop.permute.xlu0 %717
    %719 = vrot.lane.b32.xlu0 %v361, 80
    %v720 = vpop.permute.xlu0 %719
    %v721 = vsel %vm372, %v718, 0
    %v723 = vsel %vm372, %v720, 0
    %725 = vmatprep.subr.mxu0 0.0
    %726 = vmatpush1.xpose.msra.mxu0 0.0
    %727 = vmatprep.subr.mxu0 0.0
    %728 = vmatpush1.xpose.msra.mxu0 0.0
    %729 = vmatprep.subr.mxu0 0.0
    %730 = vmatpush1.xpose.msra.mxu0 0.0
    %731 = vmatprep.subr.mxu0 0.0
    %732 = vmatpush1.xpose.msra.mxu0 0.0
    %733 = vmatprep.subr.mxu0 0.0
    %734 = vmatpush1.xpose.msra.mxu0 0.0
    %735 = vmatprep.subr.mxu0 0.0
    %736 = vmatpush1.xpose.msra.mxu0 0.0
    %737 = vmatprep.subr.mxu0 0.0
    %738 = vmatpush1.xpose.msra.mxu0 0.0
    %739 = vmatprep.subr.mxu0 0.0
    %740 = vmatpush1.xpose.msra.mxu0 0.0
    %741 = vmatprep.subr.mxu0 0.0
    %742 = vmatpush1.xpose.msra.mxu0 0.0
    %743 = vmatprep.subr.mxu0 0.0
    %744 = vmatpush1.xpose.msra.mxu0 0.0
    %745 = vmatprep.subr.mxu0 0.0
    %746 = vmatpush1.xpose.msra.mxu0 0.0
    %747 = vmatprep.subr.mxu0 0.0
    %748 = vmatpush1.xpose.msra.mxu0 0.0
    %749 = vmatprep.subr.mxu0 0.0
    %750 = vmatpush1.xpose.msra.mxu0 0.0
    %751 = vmatprep.subr.mxu0 0.0
    %752 = vmatpush1.xpose.msra.mxu0 0.0
    %753 = vmatprep.subr.mxu0 0.0
    %754 = vmatpush1.xpose.msra.mxu0 0.0
    %755 = vmatprep.subr.mxu0 0.0
    %756 = vmatpush1.xpose.msra.mxu0 %v723
    %757 = vmatprep.subr.mxu0 0.0
    %758 = vmatpush2.xpose.msra.mxu0 0.0
    %759 = vmatprep.subr.mxu0 0.0
    %760 = vmatpush2.xpose.msra.mxu0 0.0
    %761 = vmatprep.subr.mxu0 0.0
    %762 = vmatpush2.xpose.msra.mxu0 0.0
    %763 = vmatprep.subr.mxu0 0.0
    %764 = vmatpush2.xpose.msra.mxu0 0.0
    %765 = vmatprep.subr.mxu0 0.0
    %766 = vmatpush2.xpose.msra.mxu0 0.0
    %767 = vmatprep.subr.mxu0 0.0
    %768 = vmatpush2.xpose.msra.mxu0 0.0
    %769 = vmatprep.subr.mxu0 0.0
    %770 = vmatpush2.xpose.msra.mxu0 0.0
    %771 = vmatprep.subr.mxu0 0.0
    %772 = vmatpush2.xpose.msra.mxu0 0.0
    %773 = vmatprep.subr.mxu0 0.0
    %774 = vmatpush2.xpose.msra.mxu0 0.0
    %775 = vmatprep.subr.mxu0 0.0
    %776 = vmatpush2.xpose.msra.mxu0 0.0
    %777 = vmatprep.subr.mxu0 0.0
    %778 = vmatpush2.xpose.msra.mxu0 0.0
    %779 = vmatprep.subr.mxu0 0.0
    %780 = vmatpush2.xpose.msra.mxu0 0.0
    %781 = vmatprep.subr.mxu0 0.0
    %782 = vmatpush2.xpose.msra.mxu0 0.0
    %783 = vmatprep.subr.mxu0 0.0
    %784 = vmatpush2.xpose.msra.mxu0 0.0
    %785 = vmatprep.subr.mxu0 0.0
    %786 = vmatpush2.xpose.msra.mxu0 0.0
    %787 = vmatprep.subr.mxu0 0.0
    %788 = vmatpush2.xpose.msra.mxu0 0.0
    %789 = vmatprep.mubr.f32.mxu0 0.0
    %790 = vmatmul.mubr.f32.gmra.mxu0 %v721
    %v791 = vpop.f32.mrf.mxu0
    %v792 = vadd.f32 0.0, %v791
    %v793 = vpop.f32.mrf.mxu0
    %794 = vdwg.mxu0
    %v795 = vmul.f32 %v792, 0.35355338
    %s796 = sld [smem:[#allocation14 + $0x2]]
    %v797 = vstv %s796
    %v798 = vmul.f32 %v266, %v797
    %v799 = vsub.f32 %v795, %v798
    %v800 = vadd.f32 %v799, %v456
    %v801 = vsel %vm372, %v800, -inf
    %802 = vmax.xlane.f32.xlu0 %v801
    %v803 = vpop.xlane.xlu0 %802
    %v804 = vsub.f32 %v800, %v803
    %v805 = vmul.f32 %v804, 1.442695
    %v806 = vpow.pop %v805
    %v807 = vsel %vm372, %v806, 0.0
    %808 = vadd.xlane.f32.xlu0 %v807
    %v809 = vpop.xlane.xlu0 %808
    %v810 = vrcp.pop %v809
    %v811 = vmul.f32 %v806, %v810
    %812 = vrot.lane.b32.xlu0 %v361, 48
    %v813 = vpop.permute.xlu0 %812
    %v816 = vsel %vm372, %v811, 0
    %818 = vmatprep.subr.mxu0 0.0
    %819 = vmatpush1.msra.mxu0 0.0
    %820 = vmatprep.subr.mxu0 0.0
    %821 = vmatpush1.msra.mxu0 0.0
    %822 = vmatprep.subr.mxu0 0.0
    %823 = vmatpush1.msra.mxu0 0.0
    %824 = vmatprep.subr.mxu0 0.0
    %825 = vmatpush1.msra.mxu0 0.0
    %826 = vmatprep.subr.mxu0 0.0
    %827 = vmatpush1.msra.mxu0 0.0
    %828 = vmatprep.subr.mxu0 0.0
    %829 = vmatpush1.msra.mxu0 0.0
    %830 = vmatprep.subr.mxu0 0.0
    %831 = vmatpush1.msra.mxu0 0.0
    %832 = vmatprep.subr.mxu0 0.0
    %833 = vmatpush1.msra.mxu0 0.0
    %834 = vmatprep.subr.mxu0 0.0
    %835 = vmatpush1.msra.mxu0 0.0
    %836 = vmatprep.subr.mxu0 0.0
    %837 = vmatpush1.msra.mxu0 0.0
    %838 = vmatprep.subr.mxu0 0.0
    %839 = vmatpush1.msra.mxu0 0.0
    %840 = vmatprep.subr.mxu0 0.0
    %841 = vmatpush1.msra.mxu0 0.0
    %842 = vmatprep.subr.mxu0 0.0
    %843 = vmatpush1.msra.mxu0 0.0
    %844 = vmatprep.subr.mxu0 0.0
    %845 = vmatpush1.msra.mxu0 0.0
    %846 = vmatprep.subr.mxu0 0.0
    %847 = vmatpush1.msra.mxu0 0.0
    %848 = vmatprep.subr.mxu0 0.0
    %849 = vmatpush1.msra.mxu0 %v813
    %850 = vmatprep.subr.mxu0 0.0
    %851 = vmatpush2.msra.mxu0 0.0
    %852 = vmatprep.subr.mxu0 0.0
    %853 = vmatpush2.msra.mxu0 0.0
    %854 = vmatprep.subr.mxu0 0.0
    %855 = vmatpush2.msra.mxu0 0.0
    %856 = vmatprep.subr.mxu0 0.0
    %857 = vmatpush2.msra.mxu0 0.0
    %858 = vmatprep.subr.mxu0 0.0
    %859 = vmatpush2.msra.mxu0 0.0
    %860 = vmatprep.subr.mxu0 0.0
    %861 = vmatpush2.msra.mxu0 0.0
    %862 = vmatprep.subr.mxu0 0.0
    %863 = vmatpush2.msra.mxu0 0.0
    %864 = vmatprep.subr.mxu0 0.0
    %865 = vmatpush2.msra.mxu0 0.0
    %866 = vmatprep.subr.mxu0 0.0
    %867 = vmatpush2.msra.mxu0 0.0
    %868 = vmatprep.subr.mxu0 0.0
    %869 = vmatpush2.msra.mxu0 0.0
    %870 = vmatprep.subr.mxu0 0.0
    %871 = vmatpush2.msra.mxu0 0.0
    %872 = vmatprep.subr.mxu0 0.0
    %873 = vmatpush2.msra.mxu0 0.0
    %874 = vmatprep.subr.mxu0 0.0
    %875 = vmatpush2.msra.mxu0 0.0
    %876 = vmatprep.subr.mxu0 0.0
    %877 = vmatpush2.msra.mxu0 0.0
    %878 = vmatprep.subr.mxu0 0.0
    %879 = vmatpush2.msra.mxu0 0.0
    %880 = vmatprep.subr.mxu0 0.0
    %881 = vmatpush2.msra.mxu0 0.0
    %882 = vmatprep.mubr.f32.mxu0 0.0
    %883 = vmatmul.mubr.f32.gmra.mxu0 %v816
    %v884 = vpop.f32.mrf.mxu0
    %v885 = vadd.f32 0.0, %v884
    %v886 = vpop.f32.mrf.mxu0
    %887 = vdwg.mxu0
    %888 = vrot.lane.b32.xlu0 %v361, 104
    %v889 = vpop.permute.xlu0 %888
    %890 = vrot.lane.b32.xlu0 %v361, 72
    %v891 = vpop.permute.xlu0 %890
    %v892 = vsel %vm372, %v889, 0
    %v894 = vsel %vm372, %v891, 0
    %896 = vmatprep.subr.mxu0 0.0
    %897 = vmatpush1.xpose.msra.mxu0 0.0
    %898 = vmatprep.subr.mxu0 0.0
    %899 = vmatpush1.xpose.msra.mxu0 0.0
    %900 = vmatprep.subr.mxu0 0.0
    %901 = vmatpush1.xpose.msra.mxu0 0.0
    %902 = vmatprep.subr.mxu0 0.0
    %903 = vmatpush1.xpose.msra.mxu0 0.0
    %904 = vmatprep.subr.mxu0 0.0
    %905 = vmatpush1.xpose.msra.mxu0 0.0
    %906 = vmatprep.subr.mxu0 0.0
    %907 = vmatpush1.xpose.msra.mxu0 0.0
    %908 = vmatprep.subr.mxu0 0.0
    %909 = vmatpush1.xpose.msra.mxu0 0.0
    %910 = vmatprep.subr.mxu0 0.0
    %911 = vmatpush1.xpose.msra.mxu0 0.0
    %912 = vmatprep.subr.mxu0 0.0
    %913 = vmatpush1.xpose.msra.mxu0 0.0
    %914 = vmatprep.subr.mxu0 0.0
    %915 = vmatpush1.xpose.msra.mxu0 0.0
    %916 = vmatprep.subr.mxu0 0.0
    %917 = vmatpush1.xpose.msra.mxu0 0.0
    %918 = vmatprep.subr.mxu0 0.0
    %919 = vmatpush1.xpose.msra.mxu0 0.0
    %920 = vmatprep.subr.mxu0 0.0
    %921 = vmatpush1.xpose.msra.mxu0 0.0
    %922 = vmatprep.subr.mxu0 0.0
    %923 = vmatpush1.xpose.msra.mxu0 0.0
    %924 = vmatprep.subr.mxu0 0.0
    %925 = vmatpush1.xpose.msra.mxu0 0.0
    %926 = vmatprep.subr.mxu0 0.0
    %927 = vmatpush1.xpose.msra.mxu0 %v894
    %928 = vmatprep.subr.mxu0 0.0
    %929 = vmatpush2.xpose.msra.mxu0 0.0
    %930 = vmatprep.subr.mxu0 0.0
    %931 = vmatpush2.xpose.msra.mxu0 0.0
    %932 = vmatprep.subr.mxu0 0.0
    %933 = vmatpush2.xpose.msra.mxu0 0.0
    %934 = vmatprep.subr.mxu0 0.0
    %935 = vmatpush2.xpose.msra.mxu0 0.0
    %936 = vmatprep.subr.mxu0 0.0
    %937 = vmatpush2.xpose.msra.mxu0 0.0
    %938 = vmatprep.subr.mxu0 0.0
    %939 = vmatpush2.xpose.msra.mxu0 0.0
    %940 = vmatprep.subr.mxu0 0.0
    %941 = vmatpush2.xpose.msra.mxu0 0.0
    %942 = vmatprep.subr.mxu0 0.0
    %943 = vmatpush2.xpose.msra.mxu0 0.0
    %944 = vmatprep.subr.mxu0 0.0
    %945 = vmatpush2.xpose.msra.mxu0 0.0
    %946 = vmatprep.subr.mxu0 0.0
    %947 = vmatpush2.xpose.msra.mxu0 0.0
    %948 = vmatprep.subr.mxu0 0.0
    %949 = vmatpush2.xpose.msra.mxu0 0.0
    %950 = vmatprep.subr.mxu0 0.0
    %951 = vmatpush2.xpose.msra.mxu0 0.0
    %952 = vmatprep.subr.mxu0 0.0
    %953 = vmatpush2.xpose.msra.mxu0 0.0
    %954 = vmatprep.subr.mxu0 0.0
    %955 = vmatpush2.xpose.msra.mxu0 0.0
    %956 = vmatprep.subr.mxu0 0.0
    %957 = vmatpush2.xpose.msra.mxu0 0.0
    %958 = vmatprep.subr.mxu0 0.0
    %959 = vmatpush2.xpose.msra.mxu0 0.0
    %960 = vmatprep.mubr.f32.mxu0 0.0
    %961 = vmatmul.mubr.f32.gmra.mxu0 %v892
    %v962 = vpop.f32.mrf.mxu0
    %v963 = vadd.f32 0.0, %v962
    %v964 = vpop.f32.mrf.mxu0
    %965 = vdwg.mxu0
    %v966 = vmul.f32 %v963, 0.35355338
    %s967 = sld [smem:[#allocation14 + $0x3]]
    %v968 = vstv %s967
    %v969 = vmul.f32 %v266, %v968
    %v970 = vsub.f32 %v966, %v969
    %v971 = vadd.f32 %v970, %v456
    %v972 = vsel %vm372, %v971, -inf
    %973 = vmax.xlane.f32.xlu0 %v972
    %v974 = vpop.xlane.xlu0 %973
    %v975 = vsub.f32 %v971, %v974
    %v976 = vmul.f32 %v975, 1.442695
    %v977 = vpow.pop %v976
    %v978 = vsel %vm372, %v977, 0.0
    %979 = vadd.xlane.f32.xlu0 %v978
    %v980 = vpop.xlane.xlu0 %979
    %v981 = vrcp.pop %v980
    %v982 = vmul.f32 %v977, %v981
    %983 = vrot.lane.b32.xlu0 %v361, 40
    %v984 = vpop.permute.xlu0 %983
    %v987 = vsel %vm372, %v982, 0
    %989 = vmatprep.subr.mxu0 0.0
    %990 = vmatpush1.msra.mxu0 0.0
    %991 = vmatprep.subr.mxu0 0.0
    %992 = vmatpush1.msra.mxu0 0.0
    %993 = vmatprep.subr.mxu0 0.0
    %994 = vmatpush1.msra.mxu0 0.0
    %995 = vmatprep.subr.mxu0 0.0
    %996 = vmatpush1.msra.mxu0 0.0
    %997 = vmatprep.subr.mxu0 0.0
    %998 = vmatpush1.msra.mxu0 0.0
    %999 = vmatprep.subr.mxu0 0.0
    %1000 = vmatpush1.msra.mxu0 0.0
    %1001 = vmatprep.subr.mxu0 0.0
    %1002 = vmatpush1.msra.mxu0 0.0
    %1003 = vmatprep.subr.mxu0 0.0
    %1004 = vmatpush1.msra.mxu0 0.0
    %1005 = vmatprep.subr.mxu0 0.0
    %1006 = vmatpush1.msra.mxu0 0.0
    %1007 = vmatprep.subr.mxu0 0.0
    %1008 = vmatpush1.msra.mxu0 0.0
    %1009 = vmatprep.subr.mxu0 0.0
    %1010 = vmatpush1.msra.mxu0 0.0
    %1011 = vmatprep.subr.mxu0 0.0
    %1012 = vmatpush1.msra.mxu0 0.0
    %1013 = vmatprep.subr.mxu0 0.0
    %1014 = vmatpush1.msra.mxu0 0.0
    %1015 = vmatprep.subr.mxu0 0.0
    %1016 = vmatpush1.msra.mxu0 0.0
    %1017 = vmatprep.subr.mxu0 0.0
    %1018 = vmatpush1.msra.mxu0 0.0
    %1019 = vmatprep.subr.mxu0 0.0
    %1020 = vmatpush1.msra.mxu0 %v984
    %1021 = vmatprep.subr.mxu0 0.0
    %1022 = vmatpush2.msra.mxu0 0.0
    %1023 = vmatprep.subr.mxu0 0.0
    %1024 = vmatpush2.msra.mxu0 0.0
    %1025 = vmatprep.subr.mxu0 0.0
    %1026 = vmatpush2.msra.mxu0 0.0
    %1027 = vmatprep.subr.mxu0 0.0
    %1028 = vmatpush2.msra.mxu0 0.0
    %1029 = vmatprep.subr.mxu0 0.0
    %1030 = vmatpush2.msra.mxu0 0.0
    %1031 = vmatprep.subr.mxu0 0.0
    %1032 = vmatpush2.msra.mxu0 0.0
    %1033 = vmatprep.subr.mxu0 0.0
    %1034 = vmatpush2.msra.mxu0 0.0
    %1035 = vmatprep.subr.mxu0 0.0
    %1036 = vmatpush2.msra.mxu0 0.0
    %1037 = vmatprep.subr.mxu0 0.0
    %1038 = vmatpush2.msra.mxu0 0.0
    %1039 = vmatprep.subr.mxu0 0.0
    %1040 = vmatpush2.msra.mxu0 0.0
    %1041 = vmatprep.subr.mxu0 0.0
    %1042 = vmatpush2.msra.mxu0 0.0
    %1043 = vmatprep.subr.mxu0 0.0
    %1044 = vmatpush2.msra.mxu0 0.0
    %1045 = vmatprep.subr.mxu0 0.0
    %1046 = vmatpush2.msra.mxu0 0.0
    %1047 = vmatprep.subr.mxu0 0.0
    %1048 = vmatpush2.msra.mxu0 0.0
    %1049 = vmatprep.subr.mxu0 0.0
    %1050 = vmatpush2.msra.mxu0 0.0
    %1051 = vmatprep.subr.mxu0 0.0
    %1052 = vmatpush2.msra.mxu0 0.0
    %1053 = vmatprep.mubr.f32.mxu0 0.0
    %1054 = vmatmul.mubr.f32.gmra.mxu0 %v987
    %v1055 = vpop.f32.mrf.mxu0
    %v1056 = vadd.f32 0.0, %v1055
    %v1057 = vpop.f32.mrf.mxu0
    %1058 = vdwg.mxu0
    %1060 = vrot.lane.b32.xlu0 %v714, 8
    %v1061 = vpop.permute.xlu0 %1060
    %1064 = vrot.lane.b32.xlu0 %v885, 16
    %v1065 = vpop.permute.xlu0 %1064
    %1068 = vrot.lane.b32.xlu0 %v1056, 24
    %v1069 = vpop.permute.xlu0 %1068
    %v1071 = vsel %vm372, %v543, %v1061
    %v1072 = vsel %vm184, %v1071, %v1065
    %vm1073 = vcmask 195584
    %v1074 = vsel %vm1073, %v1072, %v1069
    %1076 = vrot.lane.b32.xlu0 %v366, 96
    %v1077 = vpop.permute.xlu0 %1076
    %v1078 = vsel %vm372, %v366, 0
    %v1080 = vsel %vm372, %v1077, 0
    %1082 = vmatprep.subr.mxu0 0.0
    %1083 = vmatpush1.xpose.msra.mxu0 0.0
    %1084 = vmatprep.subr.mxu0 0.0
    %1085 = vmatpush1.xpose.msra.mxu0 0.0
    %1086 = vmatprep.subr.mxu0 0.0
    %1087 = vmatpush1.xpose.msra.mxu0 0.0
    %1088 = vmatprep.subr.mxu0 0.0
    %1089 = vmatpush1.xpose.msra.mxu0 0.0
    %1090 = vmatprep.subr.mxu0 0.0
    %1091 = vmatpush1.xpose.msra.mxu0 0.0
    %1092 = vmatprep.subr.mxu0 0.0
    %1093 = vmatpush1.xpose.msra.mxu0 0.0
    %1094 = vmatprep.subr.mxu0 0.0
    %1095 = vmatpush1.xpose.msra.mxu0 0.0
    %1096 = vmatprep.subr.mxu0 0.0
    %1097 = vmatpush1.xpose.msra.mxu0 0.0
    %1098 = vmatprep.subr.mxu0 0.0
    %1099 = vmatpush1.xpose.msra.mxu0 0.0
    %1100 = vmatprep.subr.mxu0 0.0
    %1101 = vmatpush1.xpose.msra.mxu0 0.0
    %1102 = vmatprep.subr.mxu0 0.0
    %1103 = vmatpush1.xpose.msra.mxu0 0.0
    %1104 = vmatprep.subr.mxu0 0.0
    %1105 = vmatpush1.xpose.msra.mxu0 0.0
    %1106 = vmatprep.subr.mxu0 0.0
    %1107 = vmatpush1.xpose.msra.mxu0 0.0
    %1108 = vmatprep.subr.mxu0 0.0
    %1109 = vmatpush1.xpose.msra.mxu0 0.0
    %1110 = vmatprep.subr.mxu0 0.0
    %1111 = vmatpush1.xpose.msra.mxu0 0.0
    %1112 = vmatprep.subr.mxu0 0.0
    %1113 = vmatpush1.xpose.msra.mxu0 %v1080
    %1114 = vmatprep.subr.mxu0 0.0
    %1115 = vmatpush2.xpose.msra.mxu0 0.0
    %1116 = vmatprep.subr.mxu0 0.0
    %1117 = vmatpush2.xpose.msra.mxu0 0.0
    %1118 = vmatprep.subr.mxu0 0.0
    %1119 = vmatpush2.xpose.msra.mxu0 0.0
    %1120 = vmatprep.subr.mxu0 0.0
    %1121 = vmatpush2.xpose.msra.mxu0 0.0
    %1122 = vmatprep.subr.mxu0 0.0
    %1123 = vmatpush2.xpose.msra.mxu0 0.0
    %1124 = vmatprep.subr.mxu0 0.0
    %1125 = vmatpush2.xpose.msra.mxu0 0.0
    %1126 = vmatprep.subr.mxu0 0.0
    %1127 = vmatpush2.xpose.msra.mxu0 0.0
    %1128 = vmatprep.subr.mxu0 0.0
    %1129 = vmatpush2.xpose.msra.mxu0 0.0
    %1130 = vmatprep.subr.mxu0 0.0
    %1131 = vmatpush2.xpose.msra.mxu0 0.0
    %1132 = vmatprep.subr.mxu0 0.0
    %1133 = vmatpush2.xpose.msra.mxu0 0.0
    %1134 = vmatprep.subr.mxu0 0.0
    %1135 = vmatpush2.xpose.msra.mxu0 0.0
    %1136 = vmatprep.subr.mxu0 0.0
    %1137 = vmatpush2.xpose.msra.mxu0 0.0
    %1138 = vmatprep.subr.mxu0 0.0
    %1139 = vmatpush2.xpose.msra.mxu0 0.0
    %1140 = vmatprep.subr.mxu0 0.0
    %1141 = vmatpush2.xpose.msra.mxu0 0.0
    %1142 = vmatprep.subr.mxu0 0.0
    %1143 = vmatpush2.xpose.msra.mxu0 0.0
    %1144 = vmatprep.subr.mxu0 0.0
    %1145 = vmatpush2.xpose.msra.mxu0 0.0
    %1146 = vmatprep.mubr.f32.mxu0 0.0
    %1147 = vmatmul.mubr.f32.gmra.mxu0 %v1078
    %v1148 = vpop.f32.mrf.mxu0
    %v1149 = vadd.f32 0.0, %v1148
    %v1150 = vpop.f32.mrf.mxu0
    %1151 = vdwg.mxu0
    %v1152 = vmul.f32 %v1149, 0.35355338
    %v1153 = vmul.f32 %v268, %v449
    %v1154 = vsub.f32 %v1152, %v1153
    %v1156 = vlaneseq
    %v1157 = vshrl.u32 %v1156, 7
    %v1158 = vsub.s32 0, %v1157
    %v1159 = vrot.slane %v275, %v1158
    %v1161 = vadd.f32 %v1154, %v1159
    %v1162 = vsel %vm372, %v1161, -inf
    %1163 = vmax.xlane.f32.xlu0 %v1162
    %v1164 = vpop.xlane.xlu0 %1163
    %v1165 = vsub.f32 %v1161, %v1164
    %v1166 = vmul.f32 %v1165, 1.442695
    %v1167 = vpow.pop %v1166
    %v1168 = vsel %vm372, %v1167, 0.0
    %1169 = vadd.xlane.f32.xlu0 %v1168
    %v1170 = vpop.xlane.xlu0 %1169
    %v1171 = vrcp.pop %v1170
    %v1172 = vmul.f32 %v1167, %v1171
    %1173 = vrot.lane.b32.xlu0 %v366, 64
    %v1174 = vpop.permute.xlu0 %1173
    %v1177 = vsel %vm372, %v1172, 0
    %1179 = vmatprep.subr.mxu0 0.0
    %1180 = vmatpush1.msra.mxu0 0.0
    %1181 = vmatprep.subr.mxu0 0.0
    %1182 = vmatpush1.msra.mxu0 0.0
    %1183 = vmatprep.subr.mxu0 0.0
    %1184 = vmatpush1.msra.mxu0 0.0
    %1185 = vmatprep.subr.mxu0 0.0
    %1186 = vmatpush1.msra.mxu0 0.0
    %1187 = vmatprep.subr.mxu0 0.0
    %1188 = vmatpush1.msra.mxu0 0.0
    %1189 = vmatprep.subr.mxu0 0.0
    %1190 = vmatpush1.msra.mxu0 0.0
    %1191 = vmatprep.subr.mxu0 0.0
    %1192 = vmatpush1.msra.mxu0 0.0
    %1193 = vmatprep.subr.mxu0 0.0
    %1194 = vmatpush1.msra.mxu0 0.0
    %1195 = vmatprep.subr.mxu0 0.0
    %1196 = vmatpush1.msra.mxu0 0.0
    %1197 = vmatprep.subr.mxu0 0.0
    %1198 = vmatpush1.msra.mxu0 0.0
    %1199 = vmatprep.subr.mxu0 0.0
    %1200 = vmatpush1.msra.mxu0 0.0
    %1201 = vmatprep.subr.mxu0 0.0
    %1202 = vmatpush1.msra.mxu0 0.0
    %1203 = vmatprep.subr.mxu0 0.0
    %1204 = vmatpush1.msra.mxu0 0.0
    %1205 = vmatprep.subr.mxu0 0.0
    %1206 = vmatpush1.msra.mxu0 0.0
    %1207 = vmatprep.subr.mxu0 0.0
    %1208 = vmatpush1.msra.mxu0 0.0
    %1209 = vmatprep.subr.mxu0 0.0
    %1210 = vmatpush1.msra.mxu0 %v1174
    %1211 = vmatprep.subr.mxu0 0.0
    %1212 = vmatpush2.msra.mxu0 0.0
    %1213 = vmatprep.subr.mxu0 0.0
    %1214 = vmatpush2.msra.mxu0 0.0
    %1215 = vmatprep.subr.mxu0 0.0
    %1216 = vmatpush2.msra.mxu0 0.0
    %1217 = vmatprep.subr.mxu0 0.0
    %1218 = vmatpush2.msra.mxu0 0.0
    %1219 = vmatprep.subr.mxu0 0.0
    %1220 = vmatpush2.msra.mxu0 0.0
    %1221 = vmatprep.subr.mxu0 0.0
    %1222 = vmatpush2.msra.mxu0 0.0
    %1223 = vmatprep.subr.mxu0 0.0
    %1224 = vmatpush2.msra.mxu0 0.0
    %1225 = vmatprep.subr.mxu0 0.0
    %1226 = vmatpush2.msra.mxu0 0.0
    %1227 = vmatprep.subr.mxu0 0.0
    %1228 = vmatpush2.msra.mxu0 0.0
    %1229 = vmatprep.subr.mxu0 0.0
    %1230 = vmatpush2.msra.mxu0 0.0
    %1231 = vmatprep.subr.mxu0 0.0
    %1232 = vmatpush2.msra.mxu0 0.0
    %1233 = vmatprep.subr.mxu0 0.0
    %1234 = vmatpush2.msra.mxu0 0.0
    %1235 = vmatprep.subr.mxu0 0.0
    %1236 = vmatpush2.msra.mxu0 0.0
    %1237 = vmatprep.subr.mxu0 0.0
    %1238 = vmatpush2.msra.mxu0 0.0
    %1239 = vmatprep.subr.mxu0 0.0
    %1240 = vmatpush2.msra.mxu0 0.0
    %1241 = vmatprep.subr.mxu0 0.0
    %1242 = vmatpush2.msra.mxu0 0.0
    %1243 = vmatprep.mubr.f32.mxu0 0.0
    %1244 = vmatmul.mubr.f32.gmra.mxu0 %v1177
    %v1245 = vpop.f32.mrf.mxu0
    %v1246 = vadd.f32 0.0, %v1245
    %v1247 = vpop.f32.mrf.mxu0
    %1248 = vdwg.mxu0
    %1249 = vrot.lane.b32.xlu0 %v366, 120
    %v1250 = vpop.permute.xlu0 %1249
    %1251 = vrot.lane.b32.xlu0 %v366, 88
    %v1252 = vpop.permute.xlu0 %1251
    %v1253 = vsel %vm372, %v1250, 0
    %v1255 = vsel %vm372, %v1252, 0
    %1257 = vmatprep.subr.mxu0 0.0
    %1258 = vmatpush1.xpose.msra.mxu0 0.0
    %1259 = vmatprep.subr.mxu0 0.0
    %1260 = vmatpush1.xpose.msra.mxu0 0.0
    %1261 = vmatprep.subr.mxu0 0.0
    %1262 = vmatpush1.xpose.msra.mxu0 0.0
    %1263 = vmatprep.subr.mxu0 0.0
    %1264 = vmatpush1.xpose.msra.mxu0 0.0
    %1265 = vmatprep.subr.mxu0 0.0
    %1266 = vmatpush1.xpose.msra.mxu0 0.0
    %1267 = vmatprep.subr.mxu0 0.0
    %1268 = vmatpush1.xpose.msra.mxu0 0.0
    %1269 = vmatprep.subr.mxu0 0.0
    %1270 = vmatpush1.xpose.msra.mxu0 0.0
    %1271 = vmatprep.subr.mxu0 0.0
    %1272 = vmatpush1.xpose.msra.mxu0 0.0
    %1273 = vmatprep.subr.mxu0 0.0
    %1274 = vmatpush1.xpose.msra.mxu0 0.0
    %1275 = vmatprep.subr.mxu0 0.0
    %1276 = vmatpush1.xpose.msra.mxu0 0.0
    %1277 = vmatprep.subr.mxu0 0.0
    %1278 = vmatpush1.xpose.msra.mxu0 0.0
    %1279 = vmatprep.subr.mxu0 0.0
    %1280 = vmatpush1.xpose.msra.mxu0 0.0
    %1281 = vmatprep.subr.mxu0 0.0
    %1282 = vmatpush1.xpose.msra.mxu0 0.0
    %1283 = vmatprep.subr.mxu0 0.0
    %1284 = vmatpush1.xpose.msra.mxu0 0.0
    %1285 = vmatprep.subr.mxu0 0.0
    %1286 = vmatpush1.xpose.msra.mxu0 0.0
    %1287 = vmatprep.subr.mxu0 0.0
    %1288 = vmatpush1.xpose.msra.mxu0 %v1255
    %1289 = vmatprep.subr.mxu0 0.0
    %1290 = vmatpush2.xpose.msra.mxu0 0.0
    %1291 = vmatprep.subr.mxu0 0.0
    %1292 = vmatpush2.xpose.msra.mxu0 0.0
    %1293 = vmatprep.subr.mxu0 0.0
    %1294 = vmatpush2.xpose.msra.mxu0 0.0
    %1295 = vmatprep.subr.mxu0 0.0
    %1296 = vmatpush2.xpose.msra.mxu0 0.0
    %1297 = vmatprep.subr.mxu0 0.0
    %1298 = vmatpush2.xpose.msra.mxu0 0.0
    %1299 = vmatprep.subr.mxu0 0.0
    %1300 = vmatpush2.xpose.msra.mxu0 0.0
    %1301 = vmatprep.subr.mxu0 0.0
    %1302 = vmatpush2.xpose.msra.mxu0 0.0
    %1303 = vmatprep.subr.mxu0 0.0
    %1304 = vmatpush2.xpose.msra.mxu0 0.0
    %1305 = vmatprep.subr.mxu0 0.0
    %1306 = vmatpush2.xpose.msra.mxu0 0.0
    %1307 = vmatprep.subr.mxu0 0.0
    %1308 = vmatpush2.xpose.msra.mxu0 0.0
    %1309 = vmatprep.subr.mxu0 0.0
    %1310 = vmatpush2.xpose.msra.mxu0 0.0
    %1311 = vmatprep.subr.mxu0 0.0
    %1312 = vmatpush2.xpose.msra.mxu0 0.0
    %1313 = vmatprep.subr.mxu0 0.0
    %1314 = vmatpush2.xpose.msra.mxu0 0.0
    %1315 = vmatprep.subr.mxu0 0.0
    %1316 = vmatpush2.xpose.msra.mxu0 0.0
    %1317 = vmatprep.subr.mxu0 0.0
    %1318 = vmatpush2.xpose.msra.mxu0 0.0
    %1319 = vmatprep.subr.mxu0 0.0
    %1320 = vmatpush2.xpose.msra.mxu0 0.0
    %1321 = vmatprep.mubr.f32.mxu0 0.0
    %1322 = vmatmul.mubr.f32.gmra.mxu0 %v1253
    %v1323 = vpop.f32.mrf.mxu0
    %v1324 = vadd.f32 0.0, %v1323
    %v1325 = vpop.f32.mrf.mxu0
    %1326 = vdwg.mxu0
    %v1327 = vmul.f32 %v1324, 0.35355338
    %v1328 = vmul.f32 %v268, %v626
    %v1329 = vsub.f32 %v1327, %v1328
    %v1330 = vadd.f32 %v1329, %v1159
    %v1331 = vsel %vm372, %v1330, -inf
    %1332 = vmax.xlane.f32.xlu0 %v1331
    %v1333 = vpop.xlane.xlu0 %1332
    %v1334 = vsub.f32 %v1330, %v1333
    %v1335 = vmul.f32 %v1334, 1.442695
    %v1336 = vpow.pop %v1335
    %v1337 = vsel %vm372, %v1336, 0.0
    %1338 = vadd.xlane.f32.xlu0 %v1337
    %v1339 = vpop.xlane.xlu0 %1338
    %v1340 = vrcp.pop %v1339
    %v1341 = vmul.f32 %v1336, %v1340
    %1342 = vrot.lane.b32.xlu0 %v366, 56
    %v1343 = vpop.permute.xlu0 %1342
    %v1346 = vsel %vm372, %v1341, 0
    %1348 = vmatprep.subr.mxu0 0.0
    %1349 = vmatpush1.msra.mxu0 0.0
    %1350 = vmatprep.subr.mxu0 0.0
    %1351 = vmatpush1.msra.mxu0 0.0
    %1352 = vmatprep.subr.mxu0 0.0
    %1353 = vmatpush1.msra.mxu0 0.0
    %1354 = vmatprep.subr.mxu0 0.0
    %1355 = vmatpush1.msra.mxu0 0.0
    %1356 = vmatprep.subr.mxu0 0.0
    %1357 = vmatpush1.msra.mxu0 0.0
    %1358 = vmatprep.subr.mxu0 0.0
    %1359 = vmatpush1.msra.mxu0 0.0
    %1360 = vmatprep.subr.mxu0 0.0
    %1361 = vmatpush1.msra.mxu0 0.0
    %1362 = vmatprep.subr.mxu0 0.0
    %1363 = vmatpush1.msra.mxu0 0.0
    %1364 = vmatprep.subr.mxu0 0.0
    %1365 = vmatpush1.msra.mxu0 0.0
    %1366 = vmatprep.subr.mxu0 0.0
    %1367 = vmatpush1.msra.mxu0 0.0
    %1368 = vmatprep.subr.mxu0 0.0
    %1369 = vmatpush1.msra.mxu0 0.0
    %1370 = vmatprep.subr.mxu0 0.0
    %1371 = vmatpush1.msra.mxu0 0.0
    %1372 = vmatprep.subr.mxu0 0.0
    %1373 = vmatpush1.msra.mxu0 0.0
    %1374 = vmatprep.subr.mxu0 0.0
    %1375 = vmatpush1.msra.mxu0 0.0
    %1376 = vmatprep.subr.mxu0 0.0
    %1377 = vmatpush1.msra.mxu0 0.0
    %1378 = vmatprep.subr.mxu0 0.0
    %1379 = vmatpush1.msra.mxu0 %v1343
    %1380 = vmatprep.subr.mxu0 0.0
    %1381 = vmatpush2.msra.mxu0 0.0
    %1382 = vmatprep.subr.mxu0 0.0
    %1383 = vmatpush2.msra.mxu0 0.0
    %1384 = vmatprep.subr.mxu0 0.0
    %1385 = vmatpush2.msra.mxu0 0.0
    %1386 = vmatprep.subr.mxu0 0.0
    %1387 = vmatpush2.msra.mxu0 0.0
    %1388 = vmatprep.subr.mxu0 0.0
    %1389 = vmatpush2.msra.mxu0 0.0
    %1390 = vmatprep.subr.mxu0 0.0
    %1391 = vmatpush2.msra.mxu0 0.0
    %1392 = vmatprep.subr.mxu0 0.0
    %1393 = vmatpush2.msra.mxu0 0.0
    %1394 = vmatprep.subr.mxu0 0.0
    %1395 = vmatpush2.msra.mxu0 0.0
    %1396 = vmatprep.subr.mxu0 0.0
    %1397 = vmatpush2.msra.mxu0 0.0
    %1398 = vmatprep.subr.mxu0 0.0
    %1399 = vmatpush2.msra.mxu0 0.0
    %1400 = vmatprep.subr.mxu0 0.0
    %1401 = vmatpush2.msra.mxu0 0.0
    %1402 = vmatprep.subr.mxu0 0.0
    %1403 = vmatpush2.msra.mxu0 0.0
    %1404 = vmatprep.subr.mxu0 0.0
    %1405 = vmatpush2.msra.mxu0 0.0
    %1406 = vmatprep.subr.mxu0 0.0
    %1407 = vmatpush2.msra.mxu0 0.0
    %1408 = vmatprep.subr.mxu0 0.0
    %1409 = vmatpush2.msra.mxu0 0.0
    %1410 = vmatprep.subr.mxu0 0.0
    %1411 = vmatpush2.msra.mxu0 0.0
    %1412 = vmatprep.mubr.f32.mxu0 0.0
    %1413 = vmatmul.mubr.f32.gmra.mxu0 %v1346
    %v1414 = vpop.f32.mrf.mxu0
    %v1415 = vadd.f32 0.0, %v1414
    %v1416 = vpop.f32.mrf.mxu0
    %1417 = vdwg.mxu0
    %1418 = vrot.lane.b32.xlu0 %v366, 112
    %v1419 = vpop.permute.xlu0 %1418
    %1420 = vrot.lane.b32.xlu0 %v366, 80
    %v1421 = vpop.permute.xlu0 %1420
    %v1422 = vsel %vm372, %v1419, 0
    %v1424 = vsel %vm372, %v1421, 0
    %1426 = vmatprep.subr.mxu0 0.0
    %1427 = vmatpush1.xpose.msra.mxu0 0.0
    %1428 = vmatprep.subr.mxu0 0.0
    %1429 = vmatpush1.xpose.msra.mxu0 0.0
    %1430 = vmatprep.subr.mxu0 0.0
    %1431 = vmatpush1.xpose.msra.mxu0 0.0
    %1432 = vmatprep.subr.mxu0 0.0
    %1433 = vmatpush1.xpose.msra.mxu0 0.0
    %1434 = vmatprep.subr.mxu0 0.0
    %1435 = vmatpush1.xpose.msra.mxu0 0.0
    %1436 = vmatprep.subr.mxu0 0.0
    %1437 = vmatpush1.xpose.msra.mxu0 0.0
    %1438 = vmatprep.subr.mxu0 0.0
    %1439 = vmatpush1.xpose.msra.mxu0 0.0
    %1440 = vmatprep.subr.mxu0 0.0
    %1441 = vmatpush1.xpose.msra.mxu0 0.0
    %1442 = vmatprep.subr.mxu0 0.0
    %1443 = vmatpush1.xpose.msra.mxu0 0.0
    %1444 = vmatprep.subr.mxu0 0.0
    %1445 = vmatpush1.xpose.msra.mxu0 0.0
    %1446 = vmatprep.subr.mxu0 0.0
    %1447 = vmatpush1.xpose.msra.mxu0 0.0
    %1448 = vmatprep.subr.mxu0 0.0
    %1449 = vmatpush1.xpose.msra.mxu0 0.0
    %1450 = vmatprep.subr.mxu0 0.0
    %1451 = vmatpush1.xpose.msra.mxu0 0.0
    %1452 = vmatprep.subr.mxu0 0.0
    %1453 = vmatpush1.xpose.msra.mxu0 0.0
    %1454 = vmatprep.subr.mxu0 0.0
    %1455 = vmatpush1.xpose.msra.mxu0 0.0
    %1456 = vmatprep.subr.mxu0 0.0
    %1457 = vmatpush1.xpose.msra.mxu0 %v1424
    %1458 = vmatprep.subr.mxu0 0.0
    %1459 = vmatpush2.xpose.msra.mxu0 0.0
    %1460 = vmatprep.subr.mxu0 0.0
    %1461 = vmatpush2.xpose.msra.mxu0 0.0
    %1462 = vmatprep.subr.mxu0 0.0
    %1463 = vmatpush2.xpose.msra.mxu0 0.0
    %1464 = vmatprep.subr.mxu0 0.0
    %1465 = vmatpush2.xpose.msra.mxu0 0.0
    %1466 = vmatprep.subr.mxu0 0.0
    %1467 = vmatpush2.xpose.msra.mxu0 0.0
    %1468 = vmatprep.subr.mxu0 0.0
    %1469 = vmatpush2.xpose.msra.mxu0 0.0
    %1470 = vmatprep.subr.mxu0 0.0
    %1471 = vmatpush2.xpose.msra.mxu0 0.0
    %1472 = vmatprep.subr.mxu0 0.0
    %1473 = vmatpush2.xpose.msra.mxu0 0.0
    %1474 = vmatprep.subr.mxu0 0.0
    %1475 = vmatpush2.xpose.msra.mxu0 0.0
    %1476 = vmatprep.subr.mxu0 0.0
    %1477 = vmatpush2.xpose.msra.mxu0 0.0
    %1478 = vmatprep.subr.mxu0 0.0
    %1479 = vmatpush2.xpose.msra.mxu0 0.0
    %1480 = vmatprep.subr.mxu0 0.0
    %1481 = vmatpush2.xpose.msra.mxu0 0.0
    %1482 = vmatprep.subr.mxu0 0.0
    %1483 = vmatpush2.xpose.msra.mxu0 0.0
    %1484 = vmatprep.subr.mxu0 0.0
    %1485 = vmatpush2.xpose.msra.mxu0 0.0
    %1486 = vmatprep.subr.mxu0 0.0
    %1487 = vmatpush2.xpose.msra.mxu0 0.0
    %1488 = vmatprep.subr.mxu0 0.0
    %1489 = vmatpush2.xpose.msra.mxu0 0.0
    %1490 = vmatprep.mubr.f32.mxu0 0.0
    %1491 = vmatmul.mubr.f32.gmra.mxu0 %v1422
    %v1492 = vpop.f32.mrf.mxu0
    %v1493 = vadd.f32 0.0, %v1492
    %v1494 = vpop.f32.mrf.mxu0
    %1495 = vdwg.mxu0
    %v1496 = vmul.f32 %v1493, 0.35355338
    %v1497 = vmul.f32 %v268, %v797
    %v1498 = vsub.f32 %v1496, %v1497
    %v1499 = vadd.f32 %v1498, %v1159
    %v1500 = vsel %vm372, %v1499, -inf
    %1501 = vmax.xlane.f32.xlu0 %v1500
    %v1502 = vpop.xlane.xlu0 %1501
    %v1503 = vsub.f32 %v1499, %v1502
    %v1504 = vmul.f32 %v1503, 1.442695
    %v1505 = vpow.pop %v1504
    %v1506 = vsel %vm372, %v1505, 0.0
    %1507 = vadd.xlane.f32.xlu0 %v1506
    %v1508 = vpop.xlane.xlu0 %1507
    %v1509 = vrcp.pop %v1508
    %v1510 = vmul.f32 %v1505, %v1509
    %1511 = vrot.lane.b32.xlu0 %v366, 48
    %v1512 = vpop.permute.xlu0 %1511
    %v1515 = vsel %vm372, %v1510, 0
    %1517 = vmatprep.subr.mxu0 0.0
    %1518 = vmatpush1.msra.mxu0 0.0
    %1519 = vmatprep.subr.mxu0 0.0
    %1520 = vmatpush1.msra.mxu0 0.0
    %1521 = vmatprep.subr.mxu0 0.0
    %1522 = vmatpush1.msra.mxu0 0.0
    %1523 = vmatprep.subr.mxu0 0.0
    %1524 = vmatpush1.msra.mxu0 0.0
    %1525 = vmatprep.subr.mxu0 0.0
    %1526 = vmatpush1.msra.mxu0 0.0
    %1527 = vmatprep.subr.mxu0 0.0
    %1528 = vmatpush1.msra.mxu0 0.0
    %1529 = vmatprep.subr.mxu0 0.0
    %1530 = vmatpush1.msra.mxu0 0.0
    %1531 = vmatprep.subr.mxu0 0.0
    %1532 = vmatpush1.msra.mxu0 0.0
    %1533 = vmatprep.subr.mxu0 0.0
    %1534 = vmatpush1.msra.mxu0 0.0
    %1535 = vmatprep.subr.mxu0 0.0
    %1536 = vmatpush1.msra.mxu0 0.0
    %1537 = vmatprep.subr.mxu0 0.0
    %1538 = vmatpush1.msra.mxu0 0.0
    %1539 = vmatprep.subr.mxu0 0.0
    %1540 = vmatpush1.msra.mxu0 0.0
    %1541 = vmatprep.subr.mxu0 0.0
    %1542 = vmatpush1.msra.mxu0 0.0
    %1543 = vmatprep.subr.mxu0 0.0
    %1544 = vmatpush1.msra.mxu0 0.0
    %1545 = vmatprep.subr.mxu0 0.0
    %1546 = vmatpush1.msra.mxu0 0.0
    %1547 = vmatprep.subr.mxu0 0.0
    %1548 = vmatpush1.msra.mxu0 %v1512
    %1549 = vmatprep.subr.mxu0 0.0
    %1550 = vmatpush2.msra.mxu0 0.0
    %1551 = vmatprep.subr.mxu0 0.0
    %1552 = vmatpush2.msra.mxu0 0.0
    %1553 = vmatprep.subr.mxu0 0.0
    %1554 = vmatpush2.msra.mxu0 0.0
    %1555 = vmatprep.subr.mxu0 0.0
    %1556 = vmatpush2.msra.mxu0 0.0
    %1557 = vmatprep.subr.mxu0 0.0
    %1558 = vmatpush2.msra.mxu0 0.0
    %1559 = vmatprep.subr.mxu0 0.0
    %1560 = vmatpush2.msra.mxu0 0.0
    %1561 = vmatprep.subr.mxu0 0.0
    %1562 = vmatpush2.msra.mxu0 0.0
    %1563 = vmatprep.subr.mxu0 0.0
    %1564 = vmatpush2.msra.mxu0 0.0
    %1565 = vmatprep.subr.mxu0 0.0
    %1566 = vmatpush2.msra.mxu0 0.0
    %1567 = vmatprep.subr.mxu0 0.0
    %1568 = vmatpush2.msra.mxu0 0.0
    %1569 = vmatprep.subr.mxu0 0.0
    %1570 = vmatpush2.msra.mxu0 0.0
    %1571 = vmatprep.subr.mxu0 0.0
    %1572 = vmatpush2.msra.mxu0 0.0
    %1573 = vmatprep.subr.mxu0 0.0
    %1574 = vmatpush2.msra.mxu0 0.0
    %1575 = vmatprep.subr.mxu0 0.0
    %1576 = vmatpush2.msra.mxu0 0.0
    %1577 = vmatprep.subr.mxu0 0.0
    %1578 = vmatpush2.msra.mxu0 0.0
    %1579 = vmatprep.subr.mxu0 0.0
    %1580 = vmatpush2.msra.mxu0 0.0
    %1581 = vmatprep.mubr.f32.mxu0 0.0
    %1582 = vmatmul.mubr.f32.gmra.mxu0 %v1515
    %v1583 = vpop.f32.mrf.mxu0
    %v1584 = vadd.f32 0.0, %v1583
    %v1585 = vpop.f32.mrf.mxu0
    %1586 = vdwg.mxu0
    %1587 = vrot.lane.b32.xlu0 %v366, 104
    %v1588 = vpop.permute.xlu0 %1587
    %1589 = vrot.lane.b32.xlu0 %v366, 72
    %v1590 = vpop.permute.xlu0 %1589
    %v1591 = vsel %vm372, %v1588, 0
    %v1593 = vsel %vm372, %v1590, 0
    %1595 = vmatprep.subr.mxu0 0.0
    %1596 = vmatpush1.xpose.msra.mxu0 0.0
    %1597 = vmatprep.subr.mxu0 0.0
    %1598 = vmatpush1.xpose.msra.mxu0 0.0
    %1599 = vmatprep.subr.mxu0 0.0
    %1600 = vmatpush1.xpose.msra.mxu0 0.0
    %1601 = vmatprep.subr.mxu0 0.0
    %1602 = vmatpush1.xpose.msra.mxu0 0.0
    %1603 = vmatprep.subr.mxu0 0.0
    %1604 = vmatpush1.xpose.msra.mxu0 0.0
    %1605 = vmatprep.subr.mxu0 0.0
    %1606 = vmatpush1.xpose.msra.mxu0 0.0
    %1607 = vmatprep.subr.mxu0 0.0
    %1608 = vmatpush1.xpose.msra.mxu0 0.0
    %1609 = vmatprep.subr.mxu0 0.0
    %1610 = vmatpush1.xpose.msra.mxu0 0.0
    %1611 = vmatprep.subr.mxu0 0.0
    %1612 = vmatpush1.xpose.msra.mxu0 0.0
    %1613 = vmatprep.subr.mxu0 0.0
    %1614 = vmatpush1.xpose.msra.mxu0 0.0
    %1615 = vmatprep.subr.mxu0 0.0
    %1616 = vmatpush1.xpose.msra.mxu0 0.0
    %1617 = vmatprep.subr.mxu0 0.0
    %1618 = vmatpush1.xpose.msra.mxu0 0.0
    %1619 = vmatprep.subr.mxu0 0.0
    %1620 = vmatpush1.xpose.msra.mxu0 0.0
    %1621 = vmatprep.subr.mxu0 0.0
    %1622 = vmatpush1.xpose.msra.mxu0 0.0
    %1623 = vmatprep.subr.mxu0 0.0
    %1624 = vmatpush1.xpose.msra.mxu0 0.0
    %1625 = vmatprep.subr.mxu0 0.0
    %1626 = vmatpush1.xpose.msra.mxu0 %v1593
    %1627 = vmatprep.subr.mxu0 0.0
    %1628 = vmatpush2.xpose.msra.mxu0 0.0
    %1629 = vmatprep.subr.mxu0 0.0
    %1630 = vmatpush2.xpose.msra.mxu0 0.0
    %1631 = vmatprep.subr.mxu0 0.0
    %1632 = vmatpush2.xpose.msra.mxu0 0.0
    %1633 = vmatprep.subr.mxu0 0.0
    %1634 = vmatpush2.xpose.msra.mxu0 0.0
    %1635 = vmatprep.subr.mxu0 0.0
    %1636 = vmatpush2.xpose.msra.mxu0 0.0
    %1637 = vmatprep.subr.mxu0 0.0
    %1638 = vmatpush2.xpose.msra.mxu0 0.0
    %1639 = vmatprep.subr.mxu0 0.0
    %1640 = vmatpush2.xpose.msra.mxu0 0.0
    %1641 = vmatprep.subr.mxu0 0.0
    %1642 = vmatpush2.xpose.msra.mxu0 0.0
    %1643 = vmatprep.subr.mxu0 0.0
    %1644 = vmatpush2.xpose.msra.mxu0 0.0
    %1645 = vmatprep.subr.mxu0 0.0
    %1646 = vmatpush2.xpose.msra.mxu0 0.0
    %1647 = vmatprep.subr.mxu0 0.0
    %1648 = vmatpush2.xpose.msra.mxu0 0.0
    %1649 = vmatprep.subr.mxu0 0.0
    %1650 = vmatpush2.xpose.msra.mxu0 0.0
    %1651 = vmatprep.subr.mxu0 0.0
    %1652 = vmatpush2.xpose.msra.mxu0 0.0
    %1653 = vmatprep.subr.mxu0 0.0
    %1654 = vmatpush2.xpose.msra.mxu0 0.0
    %1655 = vmatprep.subr.mxu0 0.0
    %1656 = vmatpush2.xpose.msra.mxu0 0.0
    %1657 = vmatprep.subr.mxu0 0.0
    %1658 = vmatpush2.xpose.msra.mxu0 0.0
    %1659 = vmatprep.mubr.f32.mxu0 0.0
    %1660 = vmatmul.mubr.f32.gmra.mxu0 %v1591
    %v1661 = vpop.f32.mrf.mxu0
    %v1662 = vadd.f32 0.0, %v1661
    %v1663 = vpop.f32.mrf.mxu0
    %1664 = vdwg.mxu0
    %v1665 = vmul.f32 %v1662, 0.35355338
    %v1666 = vmul.f32 %v268, %v968
    %v1667 = vsub.f32 %v1665, %v1666
    %v1668 = vadd.f32 %v1667, %v1159
    %v1669 = vsel %vm372, %v1668, -inf
    %1670 = vmax.xlane.f32.xlu0 %v1669
    %v1671 = vpop.xlane.xlu0 %1670
    %v1672 = vsub.f32 %v1668, %v1671
    %v1673 = vmul.f32 %v1672, 1.442695
    %v1674 = vpow.pop %v1673
    %v1675 = vsel %vm372, %v1674, 0.0
    %1676 = vadd.xlane.f32.xlu0 %v1675
    %v1677 = vpop.xlane.xlu0 %1676
    %v1678 = vrcp.pop %v1677
    %v1679 = vmul.f32 %v1674, %v1678
    %1680 = vrot.lane.b32.xlu0 %v366, 40
    %v1681 = vpop.permute.xlu0 %1680
    %v1684 = vsel %vm372, %v1679, 0
    %1686 = vmatprep.subr.mxu0 0.0
    %1687 = vmatpush1.msra.mxu0 0.0
    %1688 = vmatprep.subr.mxu0 0.0
    %1689 = vmatpush1.msra.mxu0 0.0
    %1690 = vmatprep.subr.mxu0 0.0
    %1691 = vmatpush1.msra.mxu0 0.0
    %1692 = vmatprep.subr.mxu0 0.0
    %1693 = vmatpush1.msra.mxu0 0.0
    %1694 = vmatprep.subr.mxu0 0.0
    %1695 = vmatpush1.msra.mxu0 0.0
    %1696 = vmatprep.subr.mxu0 0.0
    %1697 = vmatpush1.msra.mxu0 0.0
    %1698 = vmatprep.subr.mxu0 0.0
    %1699 = vmatpush1.msra.mxu0 0.0
    %1700 = vmatprep.subr.mxu0 0.0
    %1701 = vmatpush1.msra.mxu0 0.0
    %1702 = vmatprep.subr.mxu0 0.0
    %1703 = vmatpush1.msra.mxu0 0.0
    %1704 = vmatprep.subr.mxu0 0.0
    %1705 = vmatpush1.msra.mxu0 0.0
    %1706 = vmatprep.subr.mxu0 0.0
    %1707 = vmatpush1.msra.mxu0 0.0
    %1708 = vmatprep.subr.mxu0 0.0
    %1709 = vmatpush1.msra.mxu0 0.0
    %1710 = vmatprep.subr.mxu0 0.0
    %1711 = vmatpush1.msra.mxu0 0.0
    %1712 = vmatprep.subr.mxu0 0.0
    %1713 = vmatpush1.msra.mxu0 0.0
    %1714 = vmatprep.subr.mxu0 0.0
    %1715 = vmatpush1.msra.mxu0 0.0
    %1716 = vmatprep.subr.mxu0 0.0
    %1717 = vmatpush1.msra.mxu0 %v1681
    %1718 = vmatprep.subr.mxu0 0.0
    %1719 = vmatpush2.msra.mxu0 0.0
    %1720 = vmatprep.subr.mxu0 0.0
    %1721 = vmatpush2.msra.mxu0 0.0
    %1722 = vmatprep.subr.mxu0 0.0
    %1723 = vmatpush2.msra.mxu0 0.0
    %1724 = vmatprep.subr.mxu0 0.0
    %1725 = vmatpush2.msra.mxu0 0.0
    %1726 = vmatprep.subr.mxu0 0.0
    %1727 = vmatpush2.msra.mxu0 0.0
    %1728 = vmatprep.subr.mxu0 0.0
    %1729 = vmatpush2.msra.mxu0 0.0
    %1730 = vmatprep.subr.mxu0 0.0
    %1731 = vmatpush2.msra.mxu0 0.0
    %1732 = vmatprep.subr.mxu0 0.0
    %1733 = vmatpush2.msra.mxu0 0.0
    %1734 = vmatprep.subr.mxu0 0.0
    %1735 = vmatpush2.msra.mxu0 0.0
    %1736 = vmatprep.subr.mxu0 0.0
    %1737 = vmatpush2.msra.mxu0 0.0
    %1738 = vmatprep.subr.mxu0 0.0
    %1739 = vmatpush2.msra.mxu0 0.0
    %1740 = vmatprep.subr.mxu0 0.0
    %1741 = vmatpush2.msra.mxu0 0.0
    %1742 = vmatprep.subr.mxu0 0.0
    %1743 = vmatpush2.msra.mxu0 0.0
    %1744 = vmatprep.subr.mxu0 0.0
    %1745 = vmatpush2.msra.mxu0 0.0
    %1746 = vmatprep.subr.mxu0 0.0
    %1747 = vmatpush2.msra.mxu0 0.0
    %1748 = vmatprep.subr.mxu0 0.0
    %1749 = vmatpush2.msra.mxu0 0.0
    %1750 = vmatprep.mubr.f32.mxu0 0.0
    %1751 = vmatmul.mubr.f32.gmra.mxu0 %v1684
    %v1752 = vpop.f32.mrf.mxu0
    %v1753 = vadd.f32 0.0, %v1752
    %v1754 = vpop.f32.mrf.mxu0
    %1755 = vdwg.mxu0
    %1757 = vrot.lane.b32.xlu0 %v1415, 8
    %v1758 = vpop.permute.xlu0 %1757
    %1761 = vrot.lane.b32.xlu0 %v1584, 16
    %v1762 = vpop.permute.xlu0 %1761
    %1765 = vrot.lane.b32.xlu0 %v1753, 24
    %v1766 = vpop.permute.xlu0 %1765
    %v1768 = vsel %vm372, %v1246, %v1758
    %v1769 = vsel %vm184, %v1768, %v1762
    %v1770 = vsel %vm1073, %v1769, %v1766
    %v1771 = vld [vmem:[%s9] sm:$0xff]
    %v1772 = vld [vmem:[%s9 + $0x8] sm:$0xff]
    %v1773 = vld [vmem:[%s9 + $0x10] sm:$0xff]
    %v1774 = vld [vmem:[%s9 + $0x18] sm:$0xff]
    %v1775 = vld [vmem:[%s10] sm:$0x1]
    %v1777 = vlaneseq
    %v1778 = vshrl.u32 %v1777, 7
    %v1779 = vsub.s32 0, %v1778
    %v1780 = vrot.slane %v1775, %v1779
    %v1783 = vsel %vm287, %v1074, 0
    %v1786 = vsel %vm287, %v1770, 0
    %1788 = vmatprep.subr.mxu0 0.0
    %1789 = vmatpush1.msra.mxu0 0.0
    %1790 = vmatprep.subr.mxu0 0.0
    %1791 = vmatpush1.msra.mxu0 0.0
    %1792 = vmatprep.subr.mxu0 0.0
    %1793 = vmatpush1.msra.mxu0 0.0
    %1794 = vmatprep.subr.mxu0 0.0
    %1795 = vmatpush1.msra.mxu0 0.0
    %1796 = vmatprep.subr.mxu0 0.0
    %1797 = vmatpush1.msra.mxu0 0.0
    %1798 = vmatprep.subr.mxu0 0.0
    %1799 = vmatpush1.msra.mxu0 0.0
    %1800 = vmatprep.subr.mxu0 0.0
    %1801 = vmatpush1.msra.mxu0 0.0
    %1802 = vmatprep.subr.mxu0 0.0
    %1803 = vmatpush1.msra.mxu0 0.0
    %1804 = vmatprep.subr.mxu0 0.0
    %1805 = vmatpush1.msra.mxu0 0.0
    %1806 = vmatprep.subr.mxu0 0.0
    %1807 = vmatpush1.msra.mxu0 0.0
    %1808 = vmatprep.subr.mxu0 0.0
    %1809 = vmatpush1.msra.mxu0 0.0
    %1810 = vmatprep.subr.mxu0 0.0
    %1811 = vmatpush1.msra.mxu0 0.0
    %1812 = vmatprep.subr.mxu0 0.0
    %1813 = vmatpush1.msra.mxu0 %v1774
    %1814 = vmatprep.subr.mxu0 0.0
    %1815 = vmatpush1.msra.mxu0 %v1773
    %1816 = vmatprep.subr.mxu0 0.0
    %1817 = vmatpush1.msra.mxu0 %v1772
    %1818 = vmatprep.subr.mxu0 0.0
    %1819 = vmatpush1.msra.mxu0 %v1771
    %1820 = vmatprep.subr.mxu0 0.0
    %1821 = vmatpush2.msra.mxu0 0.0
    %1822 = vmatprep.subr.mxu0 0.0
    %1823 = vmatpush2.msra.mxu0 0.0
    %1824 = vmatprep.subr.mxu0 0.0
    %1825 = vmatpush2.msra.mxu0 0.0
    %1826 = vmatprep.subr.mxu0 0.0
    %1827 = vmatpush2.msra.mxu0 0.0
    %1828 = vmatprep.subr.mxu0 0.0
    %1829 = vmatpush2.msra.mxu0 0.0
    %1830 = vmatprep.subr.mxu0 0.0
    %1831 = vmatpush2.msra.mxu0 0.0
    %1832 = vmatprep.subr.mxu0 0.0
    %1833 = vmatpush2.msra.mxu0 0.0
    %1834 = vmatprep.subr.mxu0 0.0
    %1835 = vmatpush2.msra.mxu0 0.0
    %1836 = vmatprep.subr.mxu0 0.0
    %1837 = vmatpush2.msra.mxu0 0.0
    %1838 = vmatprep.subr.mxu0 0.0
    %1839 = vmatpush2.msra.mxu0 0.0
    %1840 = vmatprep.subr.mxu0 0.0
    %1841 = vmatpush2.msra.mxu0 0.0
    %1842 = vmatprep.subr.mxu0 0.0
    %1843 = vmatpush2.msra.mxu0 0.0
    %1844 = vmatprep.subr.mxu0 0.0
    %1845 = vmatpush2.msra.mxu0 0.0
    %1846 = vmatprep.subr.mxu0 0.0
    %1847 = vmatpush2.msra.mxu0 0.0
    %1848 = vmatprep.subr.mxu0 0.0
    %1849 = vmatpush2.msra.mxu0 0.0
    %1850 = vmatprep.subr.mxu0 0.0
    %1851 = vmatpush2.msra.mxu0 0.0
    %1852 = vmatprep.mubr.f32.mxu0 0.0
    %1853 = vmatmul.mubr.f32.gmra.mxu0 %v1783
    %v1854 = vpop.f32.mrf.mxu0
    %v1855 = vadd.f32 %v1780, %v1854
    %v1856 = vpop.f32.mrf.mxu0
    %1857 = vmatprep.mubr.f32.mxu0 0.0
    %1858 = vmatmul.mubr.f32.gmra.mxu0 %v1786
    %v1859 = vpop.f32.mrf.mxu0
    %v1860 = vadd.f32 %v1780, %v1859
    %v1861 = vpop.f32.mrf.mxu0
    %1862 = vdwg.mxu0
    %v1863 = vadd.f32 %v258, %v1855
    %v1864 = vadd.f32 %v263, %v1860
    %v1865 = vld [vmem:[%s15] sm:$0x1]
    %v1866 = vld [vmem:[#allocation8] sm:$0x1]
    %v1867 = vsel %vm287, %v1863, 0.0
    %1868 = vadd.xlane.f32.xlu0 %v1867
    %v1869 = vpop.xlane.xlu0 %1868
    %v1870 = vsel %vm287, %v1864, 0.0
    %1871 = vadd.xlane.f32.xlu0 %v1870
    %v1872 = vpop.xlane.xlu0 %1871
    %v1873 = vrcp.pop 32.0
    %v1874 = vmul.f32 %v1869, %v1873
    %v1875 = vmul.f32 %v1872, %v1873
    %v1876 = vsub.f32 %v1863, %v1874
    %v1877 = vsub.f32 %v1864, %v1875
    %v1878 = vmul.f32 %v1876, %v1876
    %v1879 = vmul.f32 %v1877, %v1877
    %v1880 = vsel %vm287, %v1878, 0.0
    %1881 = vadd.xlane.f32.xlu0 %v1880
    %v1882 = vpop.xlane.xlu0 %1881
    %v1883 = vsel %vm287, %v1879, 0.0
    %1884 = vadd.xlane.f32.xlu0 %v1883
    %v1885 = vpop.xlane.xlu0 %1884
    %v1886 = vmul.f32 %v1882, %v1873
    %v1887 = vmul.f32 %v1885, %v1873
    %v1888 = vadd.f32 %v1886, 1e-05
    %v1889 = vadd.f32 %v1887, 1e-05
    %v1890 = vrsqrt.pop %v1888
    %v1891 = vrsqrt.pop %v1889
    %v1892 = vmul.f32 %v1876, %v1890
    %v1893 = vmul.f32 %v1877, %v1891
    %v1895 = vlaneseq
    %v1896 = vshrl.u32 %v1895, 7
    %v1897 = vsub.s32 0, %v1896
    %v1898 = vrot.slane %v1865, %v1897
    %v1900 = vmul.f32 %v1892, %v1898
    %v1901 = vmul.f32 %v1893, %v1898
    %v1903 = vlaneseq
    %v1904 = vshrl.u32 %v1903, 7
    %v1905 = vsub.s32 0, %v1904
    %v1906 = vrot.slane %v1866, %v1905
    %v1908 = vadd.f32 %v1900, %v1906
    %v1909 = vadd.f32 %v1901, %v1906
    %v1910 = vld [vmem:[%s11] sm:$0xff]
    %v1911 = vld [vmem:[%s11 + $0x8] sm:$0xff]
    %v1912 = vld [vmem:[%s11 + $0x10] sm:$0xff]
    %v1913 = vld [vmem:[%s11 + $0x18] sm:$0xff]
    %v1914 = vld [vmem:[%s12] sm:$0x1]
    %v1916 = vlaneseq
    %v1917 = vshrl.u32 %v1916, 7
    %v1918 = vsub.s32 0, %v1917
    %v1919 = vrot.slane %v1914, %v1918
    %v1922 = vsel %vm287, %v1908, 0
    %v1925 = vsel %vm287, %v1909, 0
    %1927 = vmatprep.subr.mxu0 0.0
    %1928 = vmatpush1.msra.mxu0 0.0
    %1929 = vmatprep.subr.mxu0 0.0
    %1930 = vmatpush1.msra.mxu0 0.0
    %1931 = vmatprep.subr.mxu0 0.0
    %1932 = vmatpush1.msra.mxu0 0.0
    %1933 = vmatprep.subr.mxu0 0.0
    %1934 = vmatpush1.msra.mxu0 0.0
    %1935 = vmatprep.subr.mxu0 0.0
    %1936 = vmatpush1.msra.mxu0 0.0
    %1937 = vmatprep.subr.mxu0 0.0
    %1938 = vmatpush1.msra.mxu0 0.0
    %1939 = vmatprep.subr.mxu0 0.0
    %1940 = vmatpush1.msra.mxu0 0.0
    %1941 = vmatprep.subr.mxu0 0.0
    %1942 = vmatpush1.msra.mxu0 0.0
    %1943 = vmatprep.subr.mxu0 0.0
    %1944 = vmatpush1.msra.mxu0 0.0
    %1945 = vmatprep.subr.mxu0 0.0
    %1946 = vmatpush1.msra.mxu0 0.0
    %1947 = vmatprep.subr.mxu0 0.0
    %1948 = vmatpush1.msra.mxu0 0.0
    %1949 = vmatprep.subr.mxu0 0.0
    %1950 = vmatpush1.msra.mxu0 0.0
    %1951 = vmatprep.subr.mxu0 0.0
    %1952 = vmatpush1.msra.mxu0 %v1913
    %1953 = vmatprep.subr.mxu0 0.0
    %1954 = vmatpush1.msra.mxu0 %v1912
    %1955 = vmatprep.subr.mxu0 0.0
    %1956 = vmatpush1.msra.mxu0 %v1911
    %1957 = vmatprep.subr.mxu0 0.0
    %1958 = vmatpush1.msra.mxu0 %v1910
    %1959 = vmatprep.subr.mxu0 0.0
    %1960 = vmatpush2.msra.mxu0 0.0
    %1961 = vmatprep.subr.mxu0 0.0
    %1962 = vmatpush2.msra.mxu0 0.0
    %1963 = vmatprep.subr.mxu0 0.0
    %1964 = vmatpush2.msra.mxu0 0.0
    %1965 = vmatprep.subr.mxu0 0.0
    %1966 = vmatpush2.msra.mxu0 0.0
    %1967 = vmatprep.subr.mxu0 0.0
    %1968 = vmatpush2.msra.mxu0 0.0
    %1969 = vmatprep.subr.mxu0 0.0
    %1970 = vmatpush2.msra.mxu0 0.0
    %1971 = vmatprep.subr.mxu0 0.0
    %1972 = vmatpush2.msra.mxu0 0.0
    %1973 = vmatprep.subr.mxu0 0.0
    %1974 = vmatpush2.msra.mxu0 0.0
    %1975 = vmatprep.subr.mxu0 0.0
    %1976 = vmatpush2.msra.mxu0 0.0
    %1977 = vmatprep.subr.mxu0 0.0
    %1978 = vmatpush2.msra.mxu0 0.0
    %1979 = vmatprep.subr.mxu0 0.0
    %1980 = vmatpush2.msra.mxu0 0.0
    %1981 = vmatprep.subr.mxu0 0.0
    %1982 = vmatpush2.msra.mxu0 0.0
    %1983 = vmatprep.subr.mxu0 0.0
    %1984 = vmatpush2.msra.mxu0 0.0
    %1985 = vmatprep.subr.mxu0 0.0
    %1986 = vmatpush2.msra.mxu0 0.0
    %1987 = vmatprep.subr.mxu0 0.0
    %1988 = vmatpush2.msra.mxu0 0.0
    %1989 = vmatprep.subr.mxu0 0.0
    %1990 = vmatpush2.msra.mxu0 0.0
    %1991 = vmatprep.mubr.f32.mxu0 0.0
    %1992 = vmatmul.mubr.f32.gmra.mxu0 %v1922
    %v1993 = vpop.f32.mrf.mxu0
    %v1994 = vadd.f32 %v1919, %v1993
    %v1995 = vpop.f32.mrf.mxu0
    %1996 = vmatprep.mubr.f32.mxu0 0.0
    %1997 = vmatmul.mubr.f32.gmra.mxu0 %v1925
    %v1998 = vpop.f32.mrf.mxu0
    %v1999 = vadd.f32 %v1919, %v1998
    %v2000 = vpop.f32.mrf.mxu0
    %2001 = vdwg.mxu0
    %v2002 = vmax.f32 %v1994, 0.0
    %v2003 = vmax.f32 %v1999, 0.0
    %v2004 = vld [vmem:[%s13] sm:$0xff]
    %v2005 = vld [vmem:[%s13 + $0x8] sm:$0xff]
    %v2006 = vld [vmem:[%s13 + $0x10] sm:$0xff]
    %v2007 = vld [vmem:[%s13 + $0x18] sm:$0xff]
    %v2008 = vld [vmem:[%s13 + $0x20] sm:$0xff]
    %v2009 = vld [vmem:[%s13 + $0x28] sm:$0xff]
    %v2010 = vld [vmem:[%s13 + $0x30] sm:$0xff]
    %v2011 = vld [vmem:[%s13 + $0x38] sm:$0xff]
    %v2012 = vld [vmem:[%s14] sm:$0x1]
    %v2014 = vlaneseq
    %v2015 = vshrl.u32 %v2014, 7
    %v2016 = vsub.s32 0, %v2015
    %v2017 = vrot.slane %v2012, %v2016
    %vm2019 = vcmask 523264
    %v2021 = vsel %vm2019, %v2002, 0
    %v2024 = vsel %vm2019, %v2003, 0
    %2026 = vmatprep.subr.mxu0 0.0
    %2027 = vmatpush1.msra.mxu0 0.0
    %2028 = vmatprep.subr.mxu0 0.0
    %2029 = vmatpush1.msra.mxu0 0.0
    %2030 = vmatprep.subr.mxu0 0.0
    %2031 = vmatpush1.msra.mxu0 0.0
    %2032 = vmatprep.subr.mxu0 0.0
    %2033 = vmatpush1.msra.mxu0 0.0
    %2034 = vmatprep.subr.mxu0 0.0
    %2035 = vmatpush1.msra.mxu0 0.0
    %2036 = vmatprep.subr.mxu0 0.0
    %2037 = vmatpush1.msra.mxu0 0.0
    %2038 = vmatprep.subr.mxu0 0.0
    %2039 = vmatpush1.msra.mxu0 0.0
    %2040 = vmatprep.subr.mxu0 0.0
    %2041 = vmatpush1.msra.mxu0 0.0
    %2042 = vmatprep.subr.mxu0 0.0
    %2043 = vmatpush1.msra.mxu0 %v2011
    %2044 = vmatprep.subr.mxu0 0.0
    %2045 = vmatpush1.msra.mxu0 %v2010
    %2046 = vmatprep.subr.mxu0 0.0
    %2047 = vmatpush1.msra.mxu0 %v2009
    %2048 = vmatprep.subr.mxu0 0.0
    %2049 = vmatpush1.msra.mxu0 %v2008
    %2050 = vmatprep.subr.mxu0 0.0
    %2051 = vmatpush1.msra.mxu0 %v2007
    %2052 = vmatprep.subr.mxu0 0.0
    %2053 = vmatpush1.msra.mxu0 %v2006
    %2054 = vmatprep.subr.mxu0 0.0
    %2055 = vmatpush1.msra.mxu0 %v2005
    %2056 = vmatprep.subr.mxu0 0.0
    %2057 = vmatpush1.msra.mxu0 %v2004
    %2058 = vmatprep.subr.mxu0 0.0
    %2059 = vmatpush2.msra.mxu0 0.0
    %2060 = vmatprep.subr.mxu0 0.0
    %2061 = vmatpush2.msra.mxu0 0.0
    %2062 = vmatprep.subr.mxu0 0.0
    %2063 = vmatpush2.msra.mxu0 0.0
    %2064 = vmatprep.subr.mxu0 0.0
    %2065 = vmatpush2.msra.mxu0 0.0
    %2066 = vmatprep.subr.mxu0 0.0
    %2067 = vmatpush2.msra.mxu0 0.0
    %2068 = vmatprep.subr.mxu0 0.0
    %2069 = vmatpush2.msra.mxu0 0.0
    %2070 = vmatprep.subr.mxu0 0.0
    %2071 = vmatpush2.msra.mxu0 0.0
    %2072 = vmatprep.subr.mxu0 0.0
    %2073 = vmatpush2.msra.mxu0 0.0
    %2074 = vmatprep.subr.mxu0 0.0
    %2075 = vmatpush2.msra.mxu0 0.0
    %2076 = vmatprep.subr.mxu0 0.0
    %2077 = vmatpush2.msra.mxu0 0.0
    %2078 = vmatprep.subr.mxu0 0.0
    %2079 = vmatpush2.msra.mxu0 0.0
    %2080 = vmatprep.subr.mxu0 0.0
    %2081 = vmatpush2.msra.mxu0 0.0
    %2082 = vmatprep.subr.mxu0 0.0
    %2083 = vmatpush2.msra.mxu0 0.0
    %2084 = vmatprep.subr.mxu0 0.0
    %2085 = vmatpush2.msra.mxu0 0.0
    %2086 = vmatprep.subr.mxu0 0.0
    %2087 = vmatpush2.msra.mxu0 0.0
    %2088 = vmatprep.subr.mxu0 0.0
    %2089 = vmatpush2.msra.mxu0 0.0
    %2090 = vmatprep.mubr.f32.mxu0 0.0
    %2091 = vmatmul.mubr.f32.gmra.mxu0 %v2021
    %v2092 = vpop.f32.mrf.mxu0
    %v2093 = vadd.f32 %v2017, %v2092
    %v2094 = vpop.f32.mrf.mxu0
    %2095 = vmatprep.mubr.f32.mxu0 0.0
    %2096 = vmatmul.mubr.f32.gmra.mxu0 %v2024
    %v2097 = vpop.f32.mrf.mxu0
    %v2098 = vadd.f32 %v2017, %v2097
    %v2099 = vpop.f32.mrf.mxu0
    %2100 = vdwg.mxu0
    %v2101 = vadd.f32 %v1908, %v2093
    %v2102 = vadd.f32 %v1909, %v2098
    %v2103 = vld [vmem:[%s17] sm:$0x1]
    %v2104 = vld [vmem:[#allocation9] sm:$0x1]
    %v2105 = vsel %vm287, %v2101, 0.0
    %2106 = vadd.xlane.f32.xlu0 %v2105
    %v2107 = vpop.xlane.xlu0 %2106
    %v2108 = vsel %vm287, %v2102, 0.0
    %2109 = vadd.xlane.f32.xlu0 %v2108
    %v2110 = vpop.xlane.xlu0 %2109
    %v2111 = vmul.f32 %v2107, %v1873
    %v2112 = vmul.f32 %v2110, %v1873
    %v2113 = vsub.f32 %v2101, %v2111
    %v2114 = vsub.f32 %v2102, %v2112
    %v2115 = vmul.f32 %v2113, %v2113
    %v2116 = vmul.f32 %v2114, %v2114
    %v2117 = vsel %vm287, %v2115, 0.0
    %2118 = vadd.xlane.f32.xlu0 %v2117
    %v2119 = vpop.xlane.xlu0 %2118
    %v2120 = vsel %vm287, %v2116, 0.0
    %2121 = vadd.xlane.f32.xlu0 %v2120
    %v2122 = vpop.xlane.xlu0 %2121
    %v2123 = vmul.f32 %v2119, %v1873
    %v2124 = vmul.f32 %v2122, %v1873
    %v2125 = vadd.f32 %v2123, 1e-05
    %v2126 = vadd.f32 %v2124, 1e-05
    %v2127 = vrsqrt.pop %v2125
    %v2128 = vrsqrt.pop %v2126
    %v2129 = vmul.f32 %v2113, %v2127
    %v2130 = vmul.f32 %v2114, %v2128
    %v2132 = vlaneseq
    %v2133 = vshrl.u32 %v2132, 7
    %v2134 = vsub.s32 0, %v2133
    %v2135 = vrot.slane %v2103, %v2134
    %v2137 = vmul.f32 %v2129, %v2135
    %v2138 = vmul.f32 %v2130, %v2135
    %v2140 = vlaneseq
    %v2141 = vshrl.u32 %v2140, 7
    %v2142 = vsub.s32 0, %v2141
    %v2143 = vrot.slane %v2104, %v2142
    %v2145 = vadd.f32 %v2137, %v2143
    %v2146 = vadd.f32 %v2138, %v2143
    %s2147 = scalar_lea.vmem %s7, 32
    %v2148 = vld [vmem:[%s2147] sm:$0xff]
    %v2149 = vld [vmem:[%s2147 + $0x8] sm:$0xff]
    %v2150 = vld [vmem:[%s2147 + $0x10] sm:$0xff]
    %v2151 = vld [vmem:[%s2147 + $0x18] sm:$0xff]
    %s2152 = scalar_lea.vmem %s8, 1
    %v2153 = vld [vmem:[%s2152] sm:$0x1]
    %v2155 = vlaneseq
    %v2156 = vshrl.u32 %v2155, 7
    %v2157 = vsub.s32 0, %v2156
    %v2158 = vrot.slane %v2153, %v2157
    %v2161 = vsel %vm287, %v2145, 0
    %v2164 = vsel %vm287, %v2146, 0
    %2166 = vmatprep.subr.mxu0 0.0
    %2167 = vmatpush1.msra.mxu0 0.0
    %2168 = vmatprep.subr.mxu0 0.0
    %2169 = vmatpush1.msra.mxu0 0.0
    %2170 = vmatprep.subr.mxu0 0.0
    %2171 = vmatpush1.msra.mxu0 0.0
    %2172 = vmatprep.subr.mxu0 0.0
    %2173 = vmatpush1.msra.mxu0 0.0
    %2174 = vmatprep.subr.mxu0 0.0
    %2175 = vmatpush1.msra.mxu0 0.0
    %2176 = vmatprep.subr.mxu0 0.0
    %2177 = vmatpush1.msra.mxu0 0.0
    %2178 = vmatprep.subr.mxu0 0.0
    %2179 = vmatpush1.msra.mxu0 0.0
    %2180 = vmatprep.subr.mxu0 0.0
    %2181 = vmatpush1.msra.mxu0 0.0
    %2182 = vmatprep.subr.mxu0 0.0
    %2183 = vmatpush1.msra.mxu0 0.0
    %2184 = vmatprep.subr.mxu0 0.0
    %2185 = vmatpush1.msra.mxu0 0.0
    %2186 = vmatprep.subr.mxu0 0.0
    %2187 = vmatpush1.msra.mxu0 0.0
    %2188 = vmatprep.subr.mxu0 0.0
    %2189 = vmatpush1.msra.mxu0 0.0
    %2190 = vmatprep.subr.mxu0 0.0
    %2191 = vmatpush1.msra.mxu0 %v2151
    %2192 = vmatprep.subr.mxu0 0.0
    %2193 = vmatpush1.msra.mxu0 %v2150
    %2194 = vmatprep.subr.mxu0 0.0
    %2195 = vmatpush1.msra.mxu0 %v2149
    %2196 = vmatprep.subr.mxu0 0.0
    %2197 = vmatpush1.msra.mxu0 %v2148
    %2198 = vmatprep.subr.mxu0 0.0
    %2199 = vmatpush2.msra.mxu0 0.0
    %2200 = vmatprep.subr.mxu0 0.0
    %2201 = vmatpush2.msra.mxu0 0.0
    %2202 = vmatprep.subr.mxu0 0.0
    %2203 = vmatpush2.msra.mxu0 0.0
    %2204 = vmatprep.subr.mxu0 0.0
    %2205 = vmatpush2.msra.mxu0 0.0
    %2206 = vmatprep.subr.mxu0 0.0
    %2207 = vmatpush2.msra.mxu0 0.0
    %2208 = vmatprep.subr.mxu0 0.0
    %2209 = vmatpush2.msra.mxu0 0.0
    %2210 = vmatprep.subr.mxu0 0.0
    %2211 = vmatpush2.msra.mxu0 0.0
    %2212 = vmatprep.subr.mxu0 0.0
    %2213 = vmatpush2.msra.mxu0 0.0
    %2214 = vmatprep.subr.mxu0 0.0
    %2215 = vmatpush2.msra.mxu0 0.0
    %2216 = vmatprep.subr.mxu0 0.0
    %2217 = vmatpush2.msra.mxu0 0.0
    %2218 = vmatprep.subr.mxu0 0.0
    %2219 = vmatpush2.msra.mxu0 0.0
    %2220 = vmatprep.subr.mxu0 0.0
    %2221 = vmatpush2.msra.mxu0 0.0
    %2222 = vmatprep.subr.mxu0 0.0
    %2223 = vmatpush2.msra.mxu0 0.0
    %2224 = vmatprep.subr.mxu0 0.0
    %2225 = vmatpush2.msra.mxu0 0.0
    %2226 = vmatprep.subr.mxu0 0.0
    %2227 = vmatpush2.msra.mxu0 0.0
    %2228 = vmatprep.subr.mxu0 0.0
    %2229 = vmatpush2.msra.mxu0 0.0
    %2230 = vmatprep.mubr.f32.mxu0 0.0
    %2231 = vmatmul.mubr.f32.gmra.mxu0 %v2161
    %v2232 = vpop.f32.mrf.mxu0
    %v2233 = vadd.f32 %v2158, %v2232
    %v2234 = vpop.f32.mrf.mxu0
    %2235 = vmatprep.mubr.f32.mxu0 0.0
    %2236 = vmatmul.mubr.f32.gmra.mxu0 %v2164
    %v2237 = vpop.f32.mrf.mxu0
    %v2238 = vadd.f32 %v2158, %v2237
    %v2239 = vpop.f32.mrf.mxu0
    %2240 = vdwg.mxu0
    %2242 = vrot.lane.b32.xlu0 %v2233, 96
    %v2243 = vpop.permute.xlu0 %2242
    %v2244 = vsel %vm372, %v2233, 0
    %v2246 = vsel %vm372, %v2243, 0
    %2248 = vmatprep.subr.mxu0 0.0
    %2249 = vmatpush1.xpose.msra.mxu0 0.0
    %2250 = vmatprep.subr.mxu0 0.0
    %2251 = vmatpush1.xpose.msra.mxu0 0.0
    %2252 = vmatprep.subr.mxu0 0.0
    %2253 = vmatpush1.xpose.msra.mxu0 0.0
    %2254 = vmatprep.subr.mxu0 0.0
    %2255 = vmatpush1.xpose.msra.mxu0 0.0
    %2256 = vmatprep.subr.mxu0 0.0
    %2257 = vmatpush1.xpose.msra.mxu0 0.0
    %2258 = vmatprep.subr.mxu0 0.0
    %2259 = vmatpush1.xpose.msra.mxu0 0.0
    %2260 = vmatprep.subr.mxu0 0.0
    %2261 = vmatpush1.xpose.msra.mxu0 0.0
    %2262 = vmatprep.subr.mxu0 0.0
    %2263 = vmatpush1.xpose.msra.mxu0 0.0
    %2264 = vmatprep.subr.mxu0 0.0
    %2265 = vmatpush1.xpose.msra.mxu0 0.0
    %2266 = vmatprep.subr.mxu0 0.0
    %2267 = vmatpush1.xpose.msra.mxu0 0.0
    %2268 = vmatprep.subr.mxu0 0.0
    %2269 = vmatpush1.xpose.msra.mxu0 0.0
    %2270 = vmatprep.subr.mxu0 0.0
    %2271 = vmatpush1.xpose.msra.mxu0 0.0
    %2272 = vmatprep.subr.mxu0 0.0
    %2273 = vmatpush1.xpose.msra.mxu0 0.0
    %2274 = vmatprep.subr.mxu0 0.0
    %2275 = vmatpush1.xpose.msra.mxu0 0.0
    %2276 = vmatprep.subr.mxu0 0.0
    %2277 = vmatpush1.xpose.msra.mxu0 0.0
    %2278 = vmatprep.subr.mxu0 0.0
    %2279 = vmatpush1.xpose.msra.mxu0 %v2246
    %2280 = vmatprep.subr.mxu0 0.0
    %2281 = vmatpush2.xpose.msra.mxu0 0.0
    %2282 = vmatprep.subr.mxu0 0.0
    %2283 = vmatpush2.xpose.msra.mxu0 0.0
    %2284 = vmatprep.subr.mxu0 0.0
    %2285 = vmatpush2.xpose.msra.mxu0 0.0
    %2286 = vmatprep.subr.mxu0 0.0
    %2287 = vmatpush2.xpose.msra.mxu0 0.0
    %2288 = vmatprep.subr.mxu0 0.0
    %2289 = vmatpush2.xpose.msra.mxu0 0.0
    %2290 = vmatprep.subr.mxu0 0.0
    %2291 = vmatpush2.xpose.msra.mxu0 0.0
    %2292 = vmatprep.subr.mxu0 0.0
    %2293 = vmatpush2.xpose.msra.mxu0 0.0
    %2294 = vmatprep.subr.mxu0 0.0
    %2295 = vmatpush2.xpose.msra.mxu0 0.0
    %2296 = vmatprep.subr.mxu0 0.0
    %2297 = vmatpush2.xpose.msra.mxu0 0.0
    %2298 = vmatprep.subr.mxu0 0.0
    %2299 = vmatpush2.xpose.msra.mxu0 0.0
    %2300 = vmatprep.subr.mxu0 0.0
    %2301 = vmatpush2.xpose.msra.mxu0 0.0
    %2302 = vmatprep.subr.mxu0 0.0
    %2303 = vmatpush2.xpose.msra.mxu0 0.0
    %2304 = vmatprep.subr.mxu0 0.0
    %2305 = vmatpush2.xpose.msra.mxu0 0.0
    %2306 = vmatprep.subr.mxu0 0.0
    %2307 = vmatpush2.xpose.msra.mxu0 0.0
    %2308 = vmatprep.subr.mxu0 0.0
    %2309 = vmatpush2.xpose.msra.mxu0 0.0
    %2310 = vmatprep.subr.mxu0 0.0
    %2311 = vmatpush2.xpose.msra.mxu0 0.0
    %2312 = vmatprep.mubr.f32.mxu0 0.0
    %2313 = vmatmul.mubr.f32.gmra.mxu0 %v2244
    %v2314 = vpop.f32.mrf.mxu0
    %v2315 = vadd.f32 0.0, %v2314
    %v2316 = vpop.f32.mrf.mxu0
    %2317 = vdwg.mxu0
    %v2318 = vmul.f32 %v2315, 0.35355338
    %s2319 = sld [smem:[#allocation14 + $0x80]]
    %v2320 = vstv %s2319
    %v2321 = vmul.f32 %v266, %v2320
    %v2322 = vsub.f32 %v2318, %v2321
    %v2323 = vadd.f32 %v2322, %v456
    %v2324 = vsel %vm372, %v2323, -inf
    %2325 = vmax.xlane.f32.xlu0 %v2324
    %v2326 = vpop.xlane.xlu0 %2325
    %v2327 = vsub.f32 %v2323, %v2326
    %v2328 = vmul.f32 %v2327, 1.442695
    %v2329 = vpow.pop %v2328
    %v2330 = vsel %vm372, %v2329, 0.0
    %2331 = vadd.xlane.f32.xlu0 %v2330
    %v2332 = vpop.xlane.xlu0 %2331
    %v2333 = vrcp.pop %v2332
    %v2334 = vmul.f32 %v2329, %v2333
    %2335 = vrot.lane.b32.xlu0 %v2233, 64
    %v2336 = vpop.permute.xlu0 %2335
    %v2339 = vsel %vm372, %v2334, 0
    %2341 = vmatprep.subr.mxu0 0.0
    %2342 = vmatpush1.msra.mxu0 0.0
    %2343 = vmatprep.subr.mxu0 0.0
    %2344 = vmatpush1.msra.mxu0 0.0
    %2345 = vmatprep.subr.mxu0 0.0
    %2346 = vmatpush1.msra.mxu0 0.0
    %2347 = vmatprep.subr.mxu0 0.0
    %2348 = vmatpush1.msra.mxu0 0.0
    %2349 = vmatprep.subr.mxu0 0.0
    %2350 = vmatpush1.msra.mxu0 0.0
    %2351 = vmatprep.subr.mxu0 0.0
    %2352 = vmatpush1.msra.mxu0 0.0
    %2353 = vmatprep.subr.mxu0 0.0
    %2354 = vmatpush1.msra.mxu0 0.0
    %2355 = vmatprep.subr.mxu0 0.0
    %2356 = vmatpush1.msra.mxu0 0.0
    %2357 = vmatprep.subr.mxu0 0.0
    %2358 = vmatpush1.msra.mxu0 0.0
    %2359 = vmatprep.subr.mxu0 0.0
    %2360 = vmatpush1.msra.mxu0 0.0
    %2361 = vmatprep.subr.mxu0 0.0
    %2362 = vmatpush1.msra.mxu0 0.0
    %2363 = vmatprep.subr.mxu0 0.0
    %2364 = vmatpush1.msra.mxu0 0.0
    %2365 = vmatprep.subr.mxu0 0.0
    %2366 = vmatpush1.msra.mxu0 0.0
    %2367 = vmatprep.subr.mxu0 0.0
    %2368 = vmatpush1.msra.mxu0 0.0
    %2369 = vmatprep.subr.mxu0 0.0
    %2370 = vmatpush1.msra.mxu0 0.0
    %2371 = vmatprep.subr.mxu0 0.0
    %2372 = vmatpush1.msra.mxu0 %v2336
    %2373 = vmatprep.subr.mxu0 0.0
    %2374 = vmatpush2.msra.mxu0 0.0
    %2375 = vmatprep.subr.mxu0 0.0
    %2376 = vmatpush2.msra.mxu0 0.0
    %2377 = vmatprep.subr.mxu0 0.0
    %2378 = vmatpush2.msra.mxu0 0.0
    %2379 = vmatprep.subr.mxu0 0.0
    %2380 = vmatpush2.msra.mxu0 0.0
    %2381 = vmatprep.subr.mxu0 0.0
    %2382 = vmatpush2.msra.mxu0 0.0
    %2383 = vmatprep.subr.mxu0 0.0
    %2384 = vmatpush2.msra.mxu0 0.0
    %2385 = vmatprep.subr.mxu0 0.0
    %2386 = vmatpush2.msra.mxu0 0.0
    %2387 = vmatprep.subr.mxu0 0.0
    %2388 = vmatpush2.msra.mxu0 0.0
    %2389 = vmatprep.subr.mxu0 0.0
    %2390 = vmatpush2.msra.mxu0 0.0
    %2391 = vmatprep.subr.mxu0 0.0
    %2392 = vmatpush2.msra.mxu0 0.0
    %2393 = vmatprep.subr.mxu0 0.0
    %2394 = vmatpush2.msra.mxu0 0.0
    %2395 = vmatprep.subr.mxu0 0.0
    %2396 = vmatpush2.msra.mxu0 0.0
    %2397 = vmatprep.subr.mxu0 0.0
    %2398 = vmatpush2.msra.mxu0 0.0
    %2399 = vmatprep.subr.mxu0 0.0
    %2400 = vmatpush2.msra.mxu0 0.0
    %2401 = vmatprep.subr.mxu0 0.0
    %2402 = vmatpush2.msra.mxu0 0.0
    %2403 = vmatprep.subr.mxu0 0.0
    %2404 = vmatpush2.msra.mxu0 0.0
    %2405 = vmatprep.mubr.f32.mxu0 0.0
    %2406 = vmatmul.mubr.f32.gmra.mxu0 %v2339
    %v2407 = vpop.f32.mrf.mxu0
    %v2408 = vadd.f32 0.0, %v2407
    %v2409 = vpop.f32.mrf.mxu0
    %2410 = vdwg.mxu0
    %2411 = vrot.lane.b32.xlu0 %v2233, 120
    %v2412 = vpop.permute.xlu0 %2411
    %2413 = vrot.lane.b32.xlu0 %v2233, 88
    %v2414 = vpop.permute.xlu0 %2413
    %v2415 = vsel %vm372, %v2412, 0
    %v2417 = vsel %vm372, %v2414, 0
    %2419 = vmatprep.subr.mxu0 0.0
    %2420 = vmatpush1.xpose.msra.mxu0 0.0
    %2421 = vmatprep.subr.mxu0 0.0
    %2422 = vmatpush1.xpose.msra.mxu0 0.0
    %2423 = vmatprep.subr.mxu0 0.0
    %2424 = vmatpush1.xpose.msra.mxu0 0.0
    %2425 = vmatprep.subr.mxu0 0.0
    %2426 = vmatpush1.xpose.msra.mxu0 0.0
    %2427 = vmatprep.subr.mxu0 0.0
    %2428 = vmatpush1.xpose.msra.mxu0 0.0
    %2429 = vmatprep.subr.mxu0 0.0
    %2430 = vmatpush1.xpose.msra.mxu0 0.0
    %2431 = vmatprep.subr.mxu0 0.0
    %2432 = vmatpush1.xpose.msra.mxu0 0.0
    %2433 = vmatprep.subr.mxu0 0.0
    %2434 = vmatpush1.xpose.msra.mxu0 0.0
    %2435 = vmatprep.subr.mxu0 0.0
    %2436 = vmatpush1.xpose.msra.mxu0 0.0
    %2437 = vmatprep.subr.mxu0 0.0
    %2438 = vmatpush1.xpose.msra.mxu0 0.0
    %2439 = vmatprep.subr.mxu0 0.0
    %2440 = vmatpush1.xpose.msra.mxu0 0.0
    %2441 = vmatprep.subr.mxu0 0.0
    %2442 = vmatpush1.xpose.msra.mxu0 0.0
    %2443 = vmatprep.subr.mxu0 0.0
    %2444 = vmatpush1.xpose.msra.mxu0 0.0
    %2445 = vmatprep.subr.mxu0 0.0
    %2446 = vmatpush1.xpose.msra.mxu0 0.0
    %2447 = vmatprep.subr.mxu0 0.0
    %2448 = vmatpush1.xpose.msra.mxu0 0.0
    %2449 = vmatprep.subr.mxu0 0.0
    %2450 = vmatpush1.xpose.msra.mxu0 %v2417
    %2451 = vmatprep.subr.mxu0 0.0
    %2452 = vmatpush2.xpose.msra.mxu0 0.0
    %2453 = vmatprep.subr.mxu0 0.0
    %2454 = vmatpush2.xpose.msra.mxu0 0.0
    %2455 = vmatprep.subr.mxu0 0.0
    %2456 = vmatpush2.xpose.msra.mxu0 0.0
    %2457 = vmatprep.subr.mxu0 0.0
    %2458 = vmatpush2.xpose.msra.mxu0 0.0
    %2459 = vmatprep.subr.mxu0 0.0
    %2460 = vmatpush2.xpose.msra.mxu0 0.0
    %2461 = vmatprep.subr.mxu0 0.0
    %2462 = vmatpush2.xpose.msra.mxu0 0.0
    %2463 = vmatprep.subr.mxu0 0.0
    %2464 = vmatpush2.xpose.msra.mxu0 0.0
    %2465 = vmatprep.subr.mxu0 0.0
    %2466 = vmatpush2.xpose.msra.mxu0 0.0
    %2467 = vmatprep.subr.mxu0 0.0
    %2468 = vmatpush2.xpose.msra.mxu0 0.0
    %2469 = vmatprep.subr.mxu0 0.0
    %2470 = vmatpush2.xpose.msra.mxu0 0.0
    %2471 = vmatprep.subr.mxu0 0.0
    %2472 = vmatpush2.xpose.msra.mxu0 0.0
    %2473 = vmatprep.subr.mxu0 0.0
    %2474 = vmatpush2.xpose.msra.mxu0 0.0
    %2475 = vmatprep.subr.mxu0 0.0
    %2476 = vmatpush2.xpose.msra.mxu0 0.0
    %2477 = vmatprep.subr.mxu0 0.0
    %2478 = vmatpush2.xpose.msra.mxu0 0.0
    %2479 = vmatprep.subr.mxu0 0.0
    %2480 = vmatpush2.xpose.msra.mxu0 0.0
    %2481 = vmatprep.subr.mxu0 0.0
    %2482 = vmatpush2.xpose.msra.mxu0 0.0
    %2483 = vmatprep.mubr.f32.mxu0 0.0
    %2484 = vmatmul.mubr.f32.gmra.mxu0 %v2415
    %v2485 = vpop.f32.mrf.mxu0
    %v2486 = vadd.f32 0.0, %v2485
    %v2487 = vpop.f32.mrf.mxu0
    %2488 = vdwg.mxu0
    %v2489 = vmul.f32 %v2486, 0.35355338
    %s2490 = sld [smem:[#allocation14 + $0x81]]
    %v2491 = vstv %s2490
    %v2492 = vmul.f32 %v266, %v2491
    %v2493 = vsub.f32 %v2489, %v2492
    %v2494 = vadd.f32 %v2493, %v456
    %v2495 = vsel %vm372, %v2494, -inf
    %2496 = vmax.xlane.f32.xlu0 %v2495
    %v2497 = vpop.xlane.xlu0 %2496
    %v2498 = vsub.f32 %v2494, %v2497
    %v2499 = vmul.f32 %v2498, 1.442695
    %v2500 = vpow.pop %v2499
    %v2501 = vsel %vm372, %v2500, 0.0
    %2502 = vadd.xlane.f32.xlu0 %v2501
    %v2503 = vpop.xlane.xlu0 %2502
    %v2504 = vrcp.pop %v2503
    %v2505 = vmul.f32 %v2500, %v2504
    %2506 = vrot.lane.b32.xlu0 %v2233, 56
    %v2507 = vpop.permute.xlu0 %2506
    %v2510 = vsel %vm372, %v2505, 0
    %2512 = vmatprep.subr.mxu0 0.0
    %2513 = vmatpush1.msra.mxu0 0.0
    %2514 = vmatprep.subr.mxu0 0.0
    %2515 = vmatpush1.msra.mxu0 0.0
    %2516 = vmatprep.subr.mxu0 0.0
    %2517 = vmatpush1.msra.mxu0 0.0
    %2518 = vmatprep.subr.mxu0 0.0
    %2519 = vmatpush1.msra.mxu0 0.0
    %2520 = vmatprep.subr.mxu0 0.0
    %2521 = vmatpush1.msra.mxu0 0.0
    %2522 = vmatprep.subr.mxu0 0.0
    %2523 = vmatpush1.msra.mxu0 0.0
    %2524 = vmatprep.subr.mxu0 0.0
    %2525 = vmatpush1.msra.mxu0 0.0
    %2526 = vmatprep.subr.mxu0 0.0
    %2527 = vmatpush1.msra.mxu0 0.0
    %2528 = vmatprep.subr.mxu0 0.0
    %2529 = vmatpush1.msra.mxu0 0.0
    %2530 = vmatprep.subr.mxu0 0.0
    %2531 = vmatpush1.msra.mxu0 0.0
    %2532 = vmatprep.subr.mxu0 0.0
    %2533 = vmatpush1.msra.mxu0 0.0
    %2534 = vmatprep.subr.mxu0 0.0
    %2535 = vmatpush1.msra.mxu0 0.0
    %2536 = vmatprep.subr.mxu0 0.0
    %2537 = vmatpush1.msra.mxu0 0.0
    %2538 = vmatprep.subr.mxu0 0.0
    %2539 = vmatpush1.msra.mxu0 0.0
    %2540 = vmatprep.subr.mxu0 0.0
    %2541 = vmatpush1.msra.mxu0 0.0
    %2542 = vmatprep.subr.mxu0 0.0
    %2543 = vmatpush1.msra.mxu0 %v2507
    %2544 = vmatprep.subr.mxu0 0.0
    %2545 = vmatpush2.msra.mxu0 0.0
    %2546 = vmatprep.subr.mxu0 0.0
    %2547 = vmatpush2.msra.mxu0 0.0
    %2548 = vmatprep.subr.mxu0 0.0
    %2549 = vmatpush2.msra.mxu0 0.0
    %2550 = vmatprep.subr.mxu0 0.0
    %2551 = vmatpush2.msra.mxu0 0.0
    %2552 = vmatprep.subr.mxu0 0.0
    %2553 = vmatpush2.msra.mxu0 0.0
    %2554 = vmatprep.subr.mxu0 0.0
    %2555 = vmatpush2.msra.mxu0 0.0
    %2556 = vmatprep.subr.mxu0 0.0
    %2557 = vmatpush2.msra.mxu0 0.0
    %2558 = vmatprep.subr.mxu0 0.0
    %2559 = vmatpush2.msra.mxu0 0.0
    %2560 = vmatprep.subr.mxu0 0.0
    %2561 = vmatpush2.msra.mxu0 0.0
    %2562 = vmatprep.subr.mxu0 0.0
    %2563 = vmatpush2.msra.mxu0 0.0
    %2564 = vmatprep.subr.mxu0 0.0
    %2565 = vmatpush2.msra.mxu0 0.0
    %2566 = vmatprep.subr.mxu0 0.0
    %2567 = vmatpush2.msra.mxu0 0.0
    %2568 = vmatprep.subr.mxu0 0.0
    %2569 = vmatpush2.msra.mxu0 0.0
    %2570 = vmatprep.subr.mxu0 0.0
    %2571 = vmatpush2.msra.mxu0 0.0
    %2572 = vmatprep.subr.mxu0 0.0
    %2573 = vmatpush2.msra.mxu0 0.0
    %2574 = vmatprep.subr.mxu0 0.0
    %2575 = vmatpush2.msra.mxu0 0.0
    %2576 = vmatprep.mubr.f32.mxu0 0.0
    %2577 = vmatmul.mubr.f32.gmra.mxu0 %v2510
    %v2578 = vpop.f32.mrf.mxu0
    %v2579 = vadd.f32 0.0, %v2578
    %v2580 = vpop.f32.mrf.mxu0
    %2581 = vdwg.mxu0
    %2582 = vrot.lane.b32.xlu0 %v2233, 112
    %v2583 = vpop.permute.xlu0 %2582
    %2584 = vrot.lane.b32.xlu0 %v2233, 80
    %v2585 = vpop.permute.xlu0 %2584
    %v2586 = vsel %vm372, %v2583, 0
    %v2588 = vsel %vm372, %v2585, 0
    %2590 = vmatprep.subr.mxu0 0.0
    %2591 = vmatpush1.xpose.msra.mxu0 0.0
    %2592 = vmatprep.subr.mxu0 0.0
    %2593 = vmatpush1.xpose.msra.mxu0 0.0
    %2594 = vmatprep.subr.mxu0 0.0
    %2595 = vmatpush1.xpose.msra.mxu0 0.0
    %2596 = vmatprep.subr.mxu0 0.0
    %2597 = vmatpush1.xpose.msra.mxu0 0.0
    %2598 = vmatprep.subr.mxu0 0.0
    %2599 = vmatpush1.xpose.msra.mxu0 0.0
    %2600 = vmatprep.subr.mxu0 0.0
    %2601 = vmatpush1.xpose.msra.mxu0 0.0
    %2602 = vmatprep.subr.mxu0 0.0
    %2603 = vmatpush1.xpose.msra.mxu0 0.0
    %2604 = vmatprep.subr.mxu0 0.0
    %2605 = vmatpush1.xpose.msra.mxu0 0.0
    %2606 = vmatprep.subr.mxu0 0.0
    %2607 = vmatpush1.xpose.msra.mxu0 0.0
    %2608 = vmatprep.subr.mxu0 0.0
    %2609 = vmatpush1.xpose.msra.mxu0 0.0
    %2610 = vmatprep.subr.mxu0 0.0
    %2611 = vmatpush1.xpose.msra.mxu0 0.0
    %2612 = vmatprep.subr.mxu0 0.0
    %2613 = vmatpush1.xpose.msra.mxu0 0.0
    %2614 = vmatprep.subr.mxu0 0.0
    %2615 = vmatpush1.xpose.msra.mxu0 0.0
    %2616 = vmatprep.subr.mxu0 0.0
    %2617 = vmatpush1.xpose.msra.mxu0 0.0
    %2618 = vmatprep.subr.mxu0 0.0
    %2619 = vmatpush1.xpose.msra.mxu0 0.0
    %2620 = vmatprep.subr.mxu0 0.0
    %2621 = vmatpush1.xpose.msra.mxu0 %v2588
    %2622 = vmatprep.subr.mxu0 0.0
    %2623 = vmatpush2.xpose.msra.mxu0 0.0
    %2624 = vmatprep.subr.mxu0 0.0
    %2625 = vmatpush2.xpose.msra.mxu0 0.0
    %2626 = vmatprep.subr.mxu0 0.0
    %2627 = vmatpush2.xpose.msra.mxu0 0.0
    %2628 = vmatprep.subr.mxu0 0.0
    %2629 = vmatpush2.xpose.msra.mxu0 0.0
    %2630 = vmatprep.subr.mxu0 0.0
    %2631 = vmatpush2.xpose.msra.mxu0 0.0
    %2632 = vmatprep.subr.mxu0 0.0
    %2633 = vmatpush2.xpose.msra.mxu0 0.0
    %2634 = vmatprep.subr.mxu0 0.0
    %2635 = vmatpush2.xpose.msra.mxu0 0.0
    %2636 = vmatprep.subr.mxu0 0.0
    %2637 = vmatpush2.xpose.msra.mxu0 0.0
    %2638 = vmatprep.subr.mxu0 0.0
    %2639 = vmatpush2.xpose.msra.mxu0 0.0
    %2640 = vmatprep.subr.mxu0 0.0
    %2641 = vmatpush2.xpose.msra.mxu0 0.0
    %2642 = vmatprep.subr.mxu0 0.0
    %2643 = vmatpush2.xpose.msra.mxu0 0.0
    %2644 = vmatprep.subr.mxu0 0.0
    %2645 = vmatpush2.xpose.msra.mxu0 0.0
    %2646 = vmatprep.subr.mxu0 0.0
    %2647 = vmatpush2.xpose.msra.mxu0 0.0
    %2648 = vmatprep.subr.mxu0 0.0
    %2649 = vmatpush2.xpose.msra.mxu0 0.0
    %2650 = vmatprep.subr.mxu0 0.0
    %2651 = vmatpush2.xpose.msra.mxu0 0.0
    %2652 = vmatprep.subr.mxu0 0.0
    %2653 = vmatpush2.xpose.msra.mxu0 0.0
    %2654 = vmatprep.mubr.f32.mxu0 0.0
    %2655 = vmatmul.mubr.f32.gmra.mxu0 %v2586
    %v2656 = vpop.f32.mrf.mxu0
    %v2657 = vadd.f32 0.0, %v2656
    %v2658 = vpop.f32.mrf.mxu0
    %2659 = vdwg.mxu0
    %v2660 = vmul.f32 %v2657, 0.35355338
    %s2661 = sld [smem:[#allocation14 + $0x82]]
    %v2662 = vstv %s2661
    %v2663 = vmul.f32 %v266, %v2662
    %v2664 = vsub.f32 %v2660, %v2663
    %v2665 = vadd.f32 %v2664, %v456
    %v2666 = vsel %vm372, %v2665, -inf
    %2667 = vmax.xlane.f32.xlu0 %v2666
    %v2668 = vpop.xlane.xlu0 %2667
    %v2669 = vsub.f32 %v2665, %v2668
    %v2670 = vmul.f32 %v2669, 1.442695
    %v2671 = vpow.pop %v2670
    %v2672 = vsel %vm372, %v2671, 0.0
    %2673 = vadd.xlane.f32.xlu0 %v2672
    %v2674 = vpop.xlane.xlu0 %2673
    %v2675 = vrcp.pop %v2674
    %v2676 = vmul.f32 %v2671, %v2675
    %2677 = vrot.lane.b32.xlu0 %v2233, 48
    %v2678 = vpop.permute.xlu0 %2677
    %v2681 = vsel %vm372, %v2676, 0
    %2683 = vmatprep.subr.mxu0 0.0
    %2684 = vmatpush1.msra.mxu0 0.0
    %2685 = vmatprep.subr.mxu0 0.0
    %2686 = vmatpush1.msra.mxu0 0.0
    %2687 = vmatprep.subr.mxu0 0.0
    %2688 = vmatpush1.msra.mxu0 0.0
    %2689 = vmatprep.subr.mxu0 0.0
    %2690 = vmatpush1.msra.mxu0 0.0
    %2691 = vmatprep.subr.mxu0 0.0
    %2692 = vmatpush1.msra.mxu0 0.0
    %2693 = vmatprep.subr.mxu0 0.0
    %2694 = vmatpush1.msra.mxu0 0.0
    %2695 = vmatprep.subr.mxu0 0.0
    %2696 = vmatpush1.msra.mxu0 0.0
    %2697 = vmatprep.subr.mxu0 0.0
    %2698 = vmatpush1.msra.mxu0 0.0
    %2699 = vmatprep.subr.mxu0 0.0
    %2700 = vmatpush1.msra.mxu0 0.0
    %2701 = vmatprep.subr.mxu0 0.0
    %2702 = vmatpush1.msra.mxu0 0.0
    %2703 = vmatprep.subr.mxu0 0.0
    %2704 = vmatpush1.msra.mxu0 0.0
    %2705 = vmatprep.subr.mxu0 0.0
    %2706 = vmatpush1.msra.mxu0 0.0
    %2707 = vmatprep.subr.mxu0 0.0
    %2708 = vmatpush1.msra.mxu0 0.0
    %2709 = vmatprep.subr.mxu0 0.0
    %2710 = vmatpush1.msra.mxu0 0.0
    %2711 = vmatprep.subr.mxu0 0.0
    %2712 = vmatpush1.msra.mxu0 0.0
    %2713 = vmatprep.subr.mxu0 0.0
    %2714 = vmatpush1.msra.mxu0 %v2678
    %2715 = vmatprep.subr.mxu0 0.0
    %2716 = vmatpush2.msra.mxu0 0.0
    %2717 = vmatprep.subr.mxu0 0.0
    %2718 = vmatpush2.msra.mxu0 0.0
    %2719 = vmatprep.subr.mxu0 0.0
    %2720 = vmatpush2.msra.mxu0 0.0
    %2721 = vmatprep.subr.mxu0 0.0
    %2722 = vmatpush2.msra.mxu0 0.0
    %2723 = vmatprep.subr.mxu0 0.0
    %2724 = vmatpush2.msra.mxu0 0.0
    %2725 = vmatprep.subr.mxu0 0.0
    %2726 = vmatpush2.msra.mxu0 0.0
    %2727 = vmatprep.subr.mxu0 0.0
    %2728 = vmatpush2.msra.mxu0 0.0
    %2729 = vmatprep.subr.mxu0 0.0
    %2730 = vmatpush2.msra.mxu0 0.0
    %2731 = vmatprep.subr.mxu0 0.0
    %2732 = vmatpush2.msra.mxu0 0.0
    %2733 = vmatprep.subr.mxu0 0.0
    %2734 = vmatpush2.msra.mxu0 0.0
    %2735 = vmatprep.subr.mxu0 0.0
    %2736 = vmatpush2.msra.mxu0 0.0
    %2737 = vmatprep.subr.mxu0 0.0
    %2738 = vmatpush2.msra.mxu0 0.0
    %2739 = vmatprep.subr.mxu0 0.0
    %2740 = vmatpush2.msra.mxu0 0.0
    %2741 = vmatprep.subr.mxu0 0.0
    %2742 = vmatpush2.msra.mxu0 0.0
    %2743 = vmatprep.subr.mxu0 0.0
    %2744 = vmatpush2.msra.mxu0 0.0
    %2745 = vmatprep.subr.mxu0 0.0
    %2746 = vmatpush2.msra.mxu0 0.0
    %2747 = vmatprep.mubr.f32.mxu0 0.0
    %2748 = vmatmul.mubr.f32.gmra.mxu0 %v2681
    %v2749 = vpop.f32.mrf.mxu0
    %v2750 = vadd.f32 0.0, %v2749
    %v2751 = vpop.f32.mrf.mxu0
    %2752 = vdwg.mxu0
    %2753 = vrot.lane.b32.xlu0 %v2233, 104
    %v2754 = vpop.permute.xlu0 %2753
    %2755 = vrot.lane.b32.xlu0 %v2233, 72
    %v2756 = vpop.permute.xlu0 %2755
    %v2757 = vsel %vm372, %v2754, 0
    %v2759 = vsel %vm372, %v2756, 0
    %2761 = vmatprep.subr.mxu0 0.0
    %2762 = vmatpush1.xpose.msra.mxu0 0.0
    %2763 = vmatprep.subr.mxu0 0.0
    %2764 = vmatpush1.xpose.msra.mxu0 0.0
    %2765 = vmatprep.subr.mxu0 0.0
    %2766 = vmatpush1.xpose.msra.mxu0 0.0
    %2767 = vmatprep.subr.mxu0 0.0
    %2768 = vmatpush1.xpose.msra.mxu0 0.0
    %2769 = vmatprep.subr.mxu0 0.0
    %2770 = vmatpush1.xpose.msra.mxu0 0.0
    %2771 = vmatprep.subr.mxu0 0.0
    %2772 = vmatpush1.xpose.msra.mxu0 0.0
    %2773 = vmatprep.subr.mxu0 0.0
    %2774 = vmatpush1.xpose.msra.mxu0 0.0
    %2775 = vmatprep.subr.mxu0 0.0
    %2776 = vmatpush1.xpose.msra.mxu0 0.0
    %2777 = vmatprep.subr.mxu0 0.0
    %2778 = vmatpush1.xpose.msra.mxu0 0.0
    %2779 = vmatprep.subr.mxu0 0.0
    %2780 = vmatpush1.xpose.msra.mxu0 0.0
    %2781 = vmatprep.subr.mxu0 0.0
    %2782 = vmatpush1.xpose.msra.mxu0 0.0
    %2783 = vmatprep.subr.mxu0 0.0
    %2784 = vmatpush1.xpose.msra.mxu0 0.0
    %2785 = vmatprep.subr.mxu0 0.0
    %2786 = vmatpush1.xpose.msra.mxu0 0.0
    %2787 = vmatprep.subr.mxu0 0.0
    %2788 = vmatpush1.xpose.msra.mxu0 0.0
    %2789 = vmatprep.subr.mxu0 0.0
    %2790 = vmatpush1.xpose.msra.mxu0 0.0
    %2791 = vmatprep.subr.mxu0 0.0
    %2792 = vmatpush1.xpose.msra.mxu0 %v2759
    %2793 = vmatprep.subr.mxu0 0.0
    %2794 = vmatpush2.xpose.msra.mxu0 0.0
    %2795 = vmatprep.subr.mxu0 0.0
    %2796 = vmatpush2.xpose.msra.mxu0 0.0
    %2797 = vmatprep.subr.mxu0 0.0
    %2798 = vmatpush2.xpose.msra.mxu0 0.0
    %2799 = vmatprep.subr.mxu0 0.0
    %2800 = vmatpush2.xpose.msra.mxu0 0.0
    %2801 = vmatprep.subr.mxu0 0.0
    %2802 = vmatpush2.xpose.msra.mxu0 0.0
    %2803 = vmatprep.subr.mxu0 0.0
    %2804 = vmatpush2.xpose.msra.mxu0 0.0
    %2805 = vmatprep.subr.mxu0 0.0
    %2806 = vmatpush2.xpose.msra.mxu0 0.0
    %2807 = vmatprep.subr.mxu0 0.0
    %2808 = vmatpush2.xpose.msra.mxu0 0.0
    %2809 = vmatprep.subr.mxu0 0.0
    %2810 = vmatpush2.xpose.msra.mxu0 0.0
    %2811 = vmatprep.subr.mxu0 0.0
    %2812 = vmatpush2.xpose.msra.mxu0 0.0
    %2813 = vmatprep.subr.mxu0 0.0
    %2814 = vmatpush2.xpose.msra.mxu0 0.0
    %2815 = vmatprep.subr.mxu0 0.0
    %2816 = vmatpush2.xpose.msra.mxu0 0.0
    %2817 = vmatprep.subr.mxu0 0.0
    %2818 = vmatpush2.xpose.msra.mxu0 0.0
    %2819 = vmatprep.subr.mxu0 0.0
    %2820 = vmatpush2.xpose.msra.mxu0 0.0
    %2821 = vmatprep.subr.mxu0 0.0
    %2822 = vmatpush2.xpose.msra.mxu0 0.0
    %2823 = vmatprep.subr.mxu0 0.0
    %2824 = vmatpush2.xpose.msra.mxu0 0.0
    %2825 = vmatprep.mubr.f32.mxu0 0.0
    %2826 = vmatmul.mubr.f32.gmra.mxu0 %v2757
    %v2827 = vpop.f32.mrf.mxu0
    %v2828 = vadd.f32 0.0, %v2827
    %v2829 = vpop.f32.mrf.mxu0
    %2830 = vdwg.mxu0
    %v2831 = vmul.f32 %v2828, 0.35355338
    %s2832 = sld [smem:[#allocation14 + $0x83]]
    %v2833 = vstv %s2832
    %v2834 = vmul.f32 %v266, %v2833
    %v2835 = vsub.f32 %v2831, %v2834
    %v2836 = vadd.f32 %v2835, %v456
    %v2837 = vsel %vm372, %v2836, -inf
    %2838 = vmax.xlane.f32.xlu0 %v2837
    %v2839 = vpop.xlane.xlu0 %2838
    %v2840 = vsub.f32 %v2836, %v2839
    %v2841 = vmul.f32 %v2840, 1.442695
    %v2842 = vpow.pop %v2841
    %v2843 = vsel %vm372, %v2842, 0.0
    %2844 = vadd.xlane.f32.xlu0 %v2843
    %v2845 = vpop.xlane.xlu0 %2844
    %v2846 = vrcp.pop %v2845
    %v2847 = vmul.f32 %v2842, %v2846
    %2848 = vrot.lane.b32.xlu0 %v2233, 40
    %v2849 = vpop.permute.xlu0 %2848
    %v2852 = vsel %vm372, %v2847, 0
    %2854 = vmatprep.subr.mxu0 0.0
    %2855 = vmatpush1.msra.mxu0 0.0
    %2856 = vmatprep.subr.mxu0 0.0
    %2857 = vmatpush1.msra.mxu0 0.0
    %2858 = vmatprep.subr.mxu0 0.0
    %2859 = vmatpush1.msra.mxu0 0.0
    %2860 = vmatprep.subr.mxu0 0.0
    %2861 = vmatpush1.msra.mxu0 0.0
    %2862 = vmatprep.subr.mxu0 0.0
    %2863 = vmatpush1.msra.mxu0 0.0
    %2864 = vmatprep.subr.mxu0 0.0
    %2865 = vmatpush1.msra.mxu0 0.0
    %2866 = vmatprep.subr.mxu0 0.0
    %2867 = vmatpush1.msra.mxu0 0.0
    %2868 = vmatprep.subr.mxu0 0.0
    %2869 = vmatpush1.msra.mxu0 0.0
    %2870 = vmatprep.subr.mxu0 0.0
    %2871 = vmatpush1.msra.mxu0 0.0
    %2872 = vmatprep.subr.mxu0 0.0
    %2873 = vmatpush1.msra.mxu0 0.0
    %2874 = vmatprep.subr.mxu0 0.0
    %2875 = vmatpush1.msra.mxu0 0.0
    %2876 = vmatprep.subr.mxu0 0.0
    %2877 = vmatpush1.msra.mxu0 0.0
    %2878 = vmatprep.subr.mxu0 0.0
    %2879 = vmatpush1.msra.mxu0 0.0
    %2880 = vmatprep.subr.mxu0 0.0
    %2881 = vmatpush1.msra.mxu0 0.0
    %2882 = vmatprep.subr.mxu0 0.0
    %2883 = vmatpush1.msra.mxu0 0.0
    %2884 = vmatprep.subr.mxu0 0.0
    %2885 = vmatpush1.msra.mxu0 %v2849
    %2886 = vmatprep.subr.mxu0 0.0
    %2887 = vmatpush2.msra.mxu0 0.0
    %2888 = vmatprep.subr.mxu0 0.0
    %2889 = vmatpush2.msra.mxu0 0.0
    %2890 = vmatprep.subr.mxu0 0.0
    %2891 = vmatpush2.msra.mxu0 0.0
    %2892 = vmatprep.subr.mxu0 0.0
    %2893 = vmatpush2.msra.mxu0 0.0
    %2894 = vmatprep.subr.mxu0 0.0
    %2895 = vmatpush2.msra.mxu0 0.0
    %2896 = vmatprep.subr.mxu0 0.0
    %2897 = vmatpush2.msra.mxu0 0.0
    %2898 = vmatprep.subr.mxu0 0.0
    %2899 = vmatpush2.msra.mxu0 0.0
    %2900 = vmatprep.subr.mxu0 0.0
    %2901 = vmatpush2.msra.mxu0 0.0
    %2902 = vmatprep.subr.mxu0 0.0
    %2903 = vmatpush2.msra.mxu0 0.0
    %2904 = vmatprep.subr.mxu0 0.0
    %2905 = vmatpush2.msra.mxu0 0.0
    %2906 = vmatprep.subr.mxu0 0.0
    %2907 = vmatpush2.msra.mxu0 0.0
    %2908 = vmatprep.subr.mxu0 0.0
    %2909 = vmatpush2.msra.mxu0 0.0
    %2910 = vmatprep.subr.mxu0 0.0
    %2911 = vmatpush2.msra.mxu0 0.0
    %2912 = vmatprep.subr.mxu0 0.0
    %2913 = vmatpush2.msra.mxu0 0.0
    %2914 = vmatprep.subr.mxu0 0.0
    %2915 = vmatpush2.msra.mxu0 0.0
    %2916 = vmatprep.subr.mxu0 0.0
    %2917 = vmatpush2.msra.mxu0 0.0
    %2918 = vmatprep.mubr.f32.mxu0 0.0
    %2919 = vmatmul.mubr.f32.gmra.mxu0 %v2852
    %v2920 = vpop.f32.mrf.mxu0
    %v2921 = vadd.f32 0.0, %v2920
    %v2922 = vpop.f32.mrf.mxu0
    %2923 = vdwg.mxu0
    %2925 = vrot.lane.b32.xlu0 %v2579, 8
    %v2926 = vpop.permute.xlu0 %2925
    %2929 = vrot.lane.b32.xlu0 %v2750, 16
    %v2930 = vpop.permute.xlu0 %2929
    %2933 = vrot.lane.b32.xlu0 %v2921, 24
    %v2934 = vpop.permute.xlu0 %2933
    %v2936 = vsel %vm372, %v2408, %v2926
    %v2937 = vsel %vm184, %v2936, %v2930
    %v2938 = vsel %vm1073, %v2937, %v2934
    %2940 = vrot.lane.b32.xlu0 %v2238, 96
    %v2941 = vpop.permute.xlu0 %2940
    %v2942 = vsel %vm372, %v2238, 0
    %v2944 = vsel %vm372, %v2941, 0
    %2946 = vmatprep.subr.mxu0 0.0
    %2947 = vmatpush1.xpose.msra.mxu0 0.0
    %2948 = vmatprep.subr.mxu0 0.0
    %2949 = vmatpush1.xpose.msra.mxu0 0.0
    %2950 = vmatprep.subr.mxu0 0.0
    %2951 = vmatpush1.xpose.msra.mxu0 0.0
    %2952 = vmatprep.subr.mxu0 0.0
    %2953 = vmatpush1.xpose.msra.mxu0 0.0
    %2954 = vmatprep.subr.mxu0 0.0
    %2955 = vmatpush1.xpose.msra.mxu0 0.0
    %2956 = vmatprep.subr.mxu0 0.0
    %2957 = vmatpush1.xpose.msra.mxu0 0.0
    %2958 = vmatprep.subr.mxu0 0.0
    %2959 = vmatpush1.xpose.msra.mxu0 0.0
    %2960 = vmatprep.subr.mxu0 0.0
    %2961 = vmatpush1.xpose.msra.mxu0 0.0
    %2962 = vmatprep.subr.mxu0 0.0
    %2963 = vmatpush1.xpose.msra.mxu0 0.0
    %2964 = vmatprep.subr.mxu0 0.0
    %2965 = vmatpush1.xpose.msra.mxu0 0.0
    %2966 = vmatprep.subr.mxu0 0.0
    %2967 = vmatpush1.xpose.msra.mxu0 0.0
    %2968 = vmatprep.subr.mxu0 0.0
    %2969 = vmatpush1.xpose.msra.mxu0 0.0
    %2970 = vmatprep.subr.mxu0 0.0
    %2971 = vmatpush1.xpose.msra.mxu0 0.0
    %2972 = vmatprep.subr.mxu0 0.0
    %2973 = vmatpush1.xpose.msra.mxu0 0.0
    %2974 = vmatprep.subr.mxu0 0.0
    %2975 = vmatpush1.xpose.msra.mxu0 0.0
    %2976 = vmatprep.subr.mxu0 0.0
    %2977 = vmatpush1.xpose.msra.mxu0 %v2944
    %2978 = vmatprep.subr.mxu0 0.0
    %2979 = vmatpush2.xpose.msra.mxu0 0.0
    %2980 = vmatprep.subr.mxu0 0.0
    %2981 = vmatpush2.xpose.msra.mxu0 0.0
    %2982 = vmatprep.subr.mxu0 0.0
    %2983 = vmatpush2.xpose.msra.mxu0 0.0
    %2984 = vmatprep.subr.mxu0 0.0
    %2985 = vmatpush2.xpose.msra.mxu0 0.0
    %2986 = vmatprep.subr.mxu0 0.0
    %2987 = vmatpush2.xpose.msra.mxu0 0.0
    %2988 = vmatprep.subr.mxu0 0.0
    %2989 = vmatpush2.xpose.msra.mxu0 0.0
    %2990 = vmatprep.subr.mxu0 0.0
    %2991 = vmatpush2.xpose.msra.mxu0 0.0
    %2992 = vmatprep.subr.mxu0 0.0
    %2993 = vmatpush2.xpose.msra.mxu0 0.0
    %2994 = vmatprep.subr.mxu0 0.0
    %2995 = vmatpush2.xpose.msra.mxu0 0.0
    %2996 = vmatprep.subr.mxu0 0.0
    %2997 = vmatpush2.xpose.msra.mxu0 0.0
    %2998 = vmatprep.subr.mxu0 0.0
    %2999 = vmatpush2.xpose.msra.mxu0 0.0
    %3000 = vmatprep.subr.mxu0 0.0
    %3001 = vmatpush2.xpose.msra.mxu0 0.0
    %3002 = vmatprep.subr.mxu0 0.0
    %3003 = vmatpush2.xpose.msra.mxu0 0.0
    %3004 = vmatprep.subr.mxu0 0.0
    %3005 = vmatpush2.xpose.msra.mxu0 0.0
    %3006 = vmatprep.subr.mxu0 0.0
    %3007 = vmatpush2.xpose.msra.mxu0 0.0
    %3008 = vmatprep.subr.mxu0 0.0
    %3009 = vmatpush2.xpose.msra.mxu0 0.0
    %3010 = vmatprep.mubr.f32.mxu0 0.0
    %3011 = vmatmul.mubr.f32.gmra.mxu0 %v2942
    %v3012 = vpop.f32.mrf.mxu0
    %v3013 = vadd.f32 0.0, %v3012
    %v3014 = vpop.f32.mrf.mxu0
    %3015 = vdwg.mxu0
    %v3016 = vmul.f32 %v3013, 0.35355338
    %v3017 = vmul.f32 %v268, %v2320
    %v3018 = vsub.f32 %v3016, %v3017
    %v3019 = vadd.f32 %v3018, %v1159
    %v3020 = vsel %vm372, %v3019, -inf
    %3021 = vmax.xlane.f32.xlu0 %v3020
    %v3022 = vpop.xlane.xlu0 %3021
    %v3023 = vsub.f32 %v3019, %v3022
    %v3024 = vmul.f32 %v3023, 1.442695
    %v3025 = vpow.pop %v3024
    %v3026 = vsel %vm372, %v3025, 0.0
    %3027 = vadd.xlane.f32.xlu0 %v3026
    %v3028 = vpop.xlane.xlu0 %3027
    %v3029 = vrcp.pop %v3028
    %v3030 = vmul.f32 %v3025, %v3029
    %3031 = vrot.lane.b32.xlu0 %v2238, 64
    %v3032 = vpop.permute.xlu0 %3031
    %v3035 = vsel %vm372, %v3030, 0
    %3037 = vmatprep.subr.mxu0 0.0
    %3038 = vmatpush1.msra.mxu0 0.0
    %3039 = vmatprep.subr.mxu0 0.0
    %3040 = vmatpush1.msra.mxu0 0.0
    %3041 = vmatprep.subr.mxu0 0.0
    %3042 = vmatpush1.msra.mxu0 0.0
    %3043 = vmatprep.subr.mxu0 0.0
    %3044 = vmatpush1.msra.mxu0 0.0
    %3045 = vmatprep.subr.mxu0 0.0
    %3046 = vmatpush1.msra.mxu0 0.0
    %3047 = vmatprep.subr.mxu0 0.0
    %3048 = vmatpush1.msra.mxu0 0.0
    %3049 = vmatprep.subr.mxu0 0.0
    %3050 = vmatpush1.msra.mxu0 0.0
    %3051 = vmatprep.subr.mxu0 0.0
    %3052 = vmatpush1.msra.mxu0 0.0
    %3053 = vmatprep.subr.mxu0 0.0
    %3054 = vmatpush1.msra.mxu0 0.0
    %3055 = vmatprep.subr.mxu0 0.0
    %3056 = vmatpush1.msra.mxu0 0.0
    %3057 = vmatprep.subr.mxu0 0.0
    %3058 = vmatpush1.msra.mxu0 0.0
    %3059 = vmatprep.subr.mxu0 0.0
    %3060 = vmatpush1.msra.mxu0 0.0
    %3061 = vmatprep.subr.mxu0 0.0
    %3062 = vmatpush1.msra.mxu0 0.0
    %3063 = vmatprep.subr.mxu0 0.0
    %3064 = vmatpush1.msra.mxu0 0.0
    %3065 = vmatprep.subr.mxu0 0.0
    %3066 = vmatpush1.msra.mxu0 0.0
    %3067 = vmatprep.subr.mxu0 0.0
    %3068 = vmatpush1.msra.mxu0 %v3032
    %3069 = vmatprep.subr.mxu0 0.0
    %3070 = vmatpush2.msra.mxu0 0.0
    %3071 = vmatprep.subr.mxu0 0.0
    %3072 = vmatpush2.msra.mxu0 0.0
    %3073 = vmatprep.subr.mxu0 0.0
    %3074 = vmatpush2.msra.mxu0 0.0
    %3075 = vmatprep.subr.mxu0 0.0
    %3076 = vmatpush2.msra.mxu0 0.0
    %3077 = vmatprep.subr.mxu0 0.0
    %3078 = vmatpush2.msra.mxu0 0.0
    %3079 = vmatprep.subr.mxu0 0.0
    %3080 = vmatpush2.msra.mxu0 0.0
    %3081 = vmatprep.subr.mxu0 0.0
    %3082 = vmatpush2.msra.mxu0 0.0
    %3083 = vmatprep.subr.mxu0 0.0
    %3084 = vmatpush2.msra.mxu0 0.0
    %3085 = vmatprep.subr.mxu0 0.0
    %3086 = vmatpush2.msra.mxu0 0.0
    %3087 = vmatprep.subr.mxu0 0.0
    %3088 = vmatpush2.msra.mxu0 0.0
    %3089 = vmatprep.subr.mxu0 0.0
    %3090 = vmatpush2.msra.mxu0 0.0
    %3091 = vmatprep.subr.mxu0 0.0
    %3092 = vmatpush2.msra.mxu0 0.0
    %3093 = vmatprep.subr.mxu0 0.0
    %3094 = vmatpush2.msra.mxu0 0.0
    %3095 = vmatprep.subr.mxu0 0.0
    %3096 = vmatpush2.msra.mxu0 0.0
    %3097 = vmatprep.subr.mxu0 0.0
    %3098 = vmatpush2.msra.mxu0 0.0
    %3099 = vmatprep.subr.mxu0 0.0
    %3100 = vmatpush2.msra.mxu0 0.0
    %3101 = vmatprep.mubr.f32.mxu0 0.0
    %3102 = vmatmul.mubr.f32.gmra.mxu0 %v3035
    %v3103 = vpop.f32.mrf.mxu0
    %v3104 = vadd.f32 0.0, %v3103
    %v3105 = vpop.f32.mrf.mxu0
    %3106 = vdwg.mxu0
    %3107 = vrot.lane.b32.xlu0 %v2238, 120
    %v3108 = vpop.permute.xlu0 %3107
    %3109 = vrot.lane.b32.xlu0 %v2238, 88
    %v3110 = vpop.permute.xlu0 %3109
    %v3111 = vsel %vm372, %v3108, 0
    %v3113 = vsel %vm372, %v3110, 0
    %3115 = vmatprep.subr.mxu0 0.0
    %3116 = vmatpush1.xpose.msra.mxu0 0.0
    %3117 = vmatprep.subr.mxu0 0.0
    %3118 = vmatpush1.xpose.msra.mxu0 0.0
    %3119 = vmatprep.subr.mxu0 0.0
    %3120 = vmatpush1.xpose.msra.mxu0 0.0
    %3121 = vmatprep.subr.mxu0 0.0
    %3122 = vmatpush1.xpose.msra.mxu0 0.0
    %3123 = vmatprep.subr.mxu0 0.0
    %3124 = vmatpush1.xpose.msra.mxu0 0.0
    %3125 = vmatprep.subr.mxu0 0.0
    %3126 = vmatpush1.xpose.msra.mxu0 0.0
    %3127 = vmatprep.subr.mxu0 0.0
    %3128 = vmatpush1.xpose.msra.mxu0 0.0
    %3129 = vmatprep.subr.mxu0 0.0
    %3130 = vmatpush1.xpose.msra.mxu0 0.0
    %3131 = vmatprep.subr.mxu0 0.0
    %3132 = vmatpush1.xpose.msra.mxu0 0.0
    %3133 = vmatprep.subr.mxu0 0.0
    %3134 = vmatpush1.xpose.msra.mxu0 0.0
    %3135 = vmatprep.subr.mxu0 0.0
    %3136 = vmatpush1.xpose.msra.mxu0 0.0
    %3137 = vmatprep.subr.mxu0 0.0
    %3138 = vmatpush1.xpose.msra.mxu0 0.0
    %3139 = vmatprep.subr.mxu0 0.0
    %3140 = vmatpush1.xpose.msra.mxu0 0.0
    %3141 = vmatprep.subr.mxu0 0.0
    %3142 = vmatpush1.xpose.msra.mxu0 0.0
    %3143 = vmatprep.subr.mxu0 0.0
    %3144 = vmatpush1.xpose.msra.mxu0 0.0
    %3145 = vmatprep.subr.mxu0 0.0
    %3146 = vmatpush1.xpose.msra.mxu0 %v3113
    %3147 = vmatprep.subr.mxu0 0.0
    %3148 = vmatpush2.xpose.msra.mxu0 0.0
    %3149 = vmatprep.subr.mxu0 0.0
    %3150 = vmatpush2.xpose.msra.mxu0 0.0
    %3151 = vmatprep.subr.mxu0 0.0
    %3152 = vmatpush2.xpose.msra.mxu0 0.0
    %3153 = vmatprep.subr.mxu0 0.0
    %3154 = vmatpush2.xpose.msra.mxu0 0.0
    %3155 = vmatprep.subr.mxu0 0.0
    %3156 = vmatpush2.xpose.msra.mxu0 0.0
    %3157 = vmatprep.subr.mxu0 0.0
    %3158 = vmatpush2.xpose.msra.mxu0 0.0
    %3159 = vmatprep.subr.mxu0 0.0
    %3160 = vmatpush2.xpose.msra.mxu0 0.0
    %3161 = vmatprep.subr.mxu0 0.0
    %3162 = vmatpush2.xpose.msra.mxu0 0.0
    %3163 = vmatprep.subr.mxu0 0.0
    %3164 = vmatpush2.xpose.msra.mxu0 0.0
    %3165 = vmatprep.subr.mxu0 0.0
    %3166 = vmatpush2.xpose.msra.mxu0 0.0
    %3167 = vmatprep.subr.mxu0 0.0
    %3168 = vmatpush2.xpose.msra.mxu0 0.0
    %3169 = vmatprep.subr.mxu0 0.0
    %3170 = vmatpush2.xpose.msra.mxu0 0.0
    %3171 = vmatprep.subr.mxu0 0.0
    %3172 = vmatpush2.xpose.msra.mxu0 0.0
    %3173 = vmatprep.subr.mxu0 0.0
    %3174 = vmatpush2.xpose.msra.mxu0 0.0
    %3175 = vmatprep.subr.mxu0 0.0
    %3176 = vmatpush2.xpose.msra.mxu0 0.0
    %3177 = vmatprep.subr.mxu0 0.0
    %3178 = vmatpush2.xpose.msra.mxu0 0.0
    %3179 = vmatprep.mubr.f32.mxu0 0.0
    %3180 = vmatmul.mubr.f32.gmra.mxu0 %v3111
    %v3181 = vpop.f32.mrf.mxu0
    %v3182 = vadd.f32 0.0, %v3181
    %v3183 = vpop.f32.mrf.mxu0
    %3184 = vdwg.mxu0
    %v3185 = vmul.f32 %v3182, 0.35355338
    %v3186 = vmul.f32 %v268, %v2491
    %v3187 = vsub.f32 %v3185, %v3186
    %v3188 = vadd.f32 %v3187, %v1159
    %v3189 = vsel %vm372, %v3188, -inf
    %3190 = vmax.xlane.f32.xlu0 %v3189
    %v3191 = vpop.xlane.xlu0 %3190
    %v3192 = vsub.f32 %v3188, %v3191
    %v3193 = vmul.f32 %v3192, 1.442695
    %v3194 = vpow.pop %v3193
    %v3195 = vsel %vm372, %v3194, 0.0
    %3196 = vadd.xlane.f32.xlu0 %v3195
    %v3197 = vpop.xlane.xlu0 %3196
    %v3198 = vrcp.pop %v3197
    %v3199 = vmul.f32 %v3194, %v3198
    %3200 = vrot.lane.b32.xlu0 %v2238, 56
    %v3201 = vpop.permute.xlu0 %3200
    %v3204 = vsel %vm372, %v3199, 0
    %3206 = vmatprep.subr.mxu0 0.0
    %3207 = vmatpush1.msra.mxu0 0.0
    %3208 = vmatprep.subr.mxu0 0.0
    %3209 = vmatpush1.msra.mxu0 0.0
    %3210 = vmatprep.subr.mxu0 0.0
    %3211 = vmatpush1.msra.mxu0 0.0
    %3212 = vmatprep.subr.mxu0 0.0
    %3213 = vmatpush1.msra.mxu0 0.0
    %3214 = vmatprep.subr.mxu0 0.0
    %3215 = vmatpush1.msra.mxu0 0.0
    %3216 = vmatprep.subr.mxu0 0.0
    %3217 = vmatpush1.msra.mxu0 0.0
    %3218 = vmatprep.subr.mxu0 0.0
    %3219 = vmatpush1.msra.mxu0 0.0
    %3220 = vmatprep.subr.mxu0 0.0
    %3221 = vmatpush1.msra.mxu0 0.0
    %3222 = vmatprep.subr.mxu0 0.0
    %3223 = vmatpush1.msra.mxu0 0.0
    %3224 = vmatprep.subr.mxu0 0.0
    %3225 = vmatpush1.msra.mxu0 0.0
    %3226 = vmatprep.subr.mxu0 0.0
    %3227 = vmatpush1.msra.mxu0 0.0
    %3228 = vmatprep.subr.mxu0 0.0
    %3229 = vmatpush1.msra.mxu0 0.0
    %3230 = vmatprep.subr.mxu0 0.0
    %3231 = vmatpush1.msra.mxu0 0.0
    %3232 = vmatprep.subr.mxu0 0.0
    %3233 = vmatpush1.msra.mxu0 0.0
    %3234 = vmatprep.subr.mxu0 0.0
    %3235 = vmatpush1.msra.mxu0 0.0
    %3236 = vmatprep.subr.mxu0 0.0
    %3237 = vmatpush1.msra.mxu0 %v3201
    %3238 = vmatprep.subr.mxu0 0.0
    %3239 = vmatpush2.msra.mxu0 0.0
    %3240 = vmatprep.subr.mxu0 0.0
    %3241 = vmatpush2.msra.mxu0 0.0
    %3242 = vmatprep.subr.mxu0 0.0
    %3243 = vmatpush2.msra.mxu0 0.0
    %3244 = vmatprep.subr.mxu0 0.0
    %3245 = vmatpush2.msra.mxu0 0.0
    %3246 = vmatprep.subr.mxu0 0.0
    %3247 = vmatpush2.msra.mxu0 0.0
    %3248 = vmatprep.subr.mxu0 0.0
    %3249 = vmatpush2.msra.mxu0 0.0
    %3250 = vmatprep.subr.mxu0 0.0
    %3251 = vmatpush2.msra.mxu0 0.0
    %3252 = vmatprep.subr.mxu0 0.0
    %3253 = vmatpush2.msra.mxu0 0.0
    %3254 = vmatprep.subr.mxu0 0.0
    %3255 = vmatpush2.msra.mxu0 0.0
    %3256 = vmatprep.subr.mxu0 0.0
    %3257 = vmatpush2.msra.mxu0 0.0
    %3258 = vmatprep.subr.mxu0 0.0
    %3259 = vmatpush2.msra.mxu0 0.0
    %3260 = vmatprep.subr.mxu0 0.0
    %3261 = vmatpush2.msra.mxu0 0.0
    %3262 = vmatprep.subr.mxu0 0.0
    %3263 = vmatpush2.msra.mxu0 0.0
    %3264 = vmatprep.subr.mxu0 0.0
    %3265 = vmatpush2.msra.mxu0 0.0
    %3266 = vmatprep.subr.mxu0 0.0
    %3267 = vmatpush2.msra.mxu0 0.0
    %3268 = vmatprep.subr.mxu0 0.0
    %3269 = vmatpush2.msra.mxu0 0.0
    %3270 = vmatprep.mubr.f32.mxu0 0.0
    %3271 = vmatmul.mubr.f32.gmra.mxu0 %v3204
    %v3272 = vpop.f32.mrf.mxu0
    %v3273 = vadd.f32 0.0, %v3272
    %v3274 = vpop.f32.mrf.mxu0
    %3275 = vdwg.mxu0
    %3276 = vrot.lane.b32.xlu0 %v2238, 112
    %v3277 = vpop.permute.xlu0 %3276
    %3278 = vrot.lane.b32.xlu0 %v2238, 80
    %v3279 = vpop.permute.xlu0 %3278
    %v3280 = vsel %vm372, %v3277, 0
    %v3282 = vsel %vm372, %v3279, 0
    %3284 = vmatprep.subr.mxu0 0.0
    %3285 = vmatpush1.xpose.msra.mxu0 0.0
    %3286 = vmatprep.subr.mxu0 0.0
    %3287 = vmatpush1.xpose.msra.mxu0 0.0
    %3288 = vmatprep.subr.mxu0 0.0
    %3289 = vmatpush1.xpose.msra.mxu0 0.0
    %3290 = vmatprep.subr.mxu0 0.0
    %3291 = vmatpush1.xpose.msra.mxu0 0.0
    %3292 = vmatprep.subr.mxu0 0.0
    %3293 = vmatpush1.xpose.msra.mxu0 0.0
    %3294 = vmatprep.subr.mxu0 0.0
    %3295 = vmatpush1.xpose.msra.mxu0 0.0
    %3296 = vmatprep.subr.mxu0 0.0
    %3297 = vmatpush1.xpose.msra.mxu0 0.0
    %3298 = vmatprep.subr.mxu0 0.0
    %3299 = vmatpush1.xpose.msra.mxu0 0.0
    %3300 = vmatprep.subr.mxu0 0.0
    %3301 = vmatpush1.xpose.msra.mxu0 0.0
    %3302 = vmatprep.subr.mxu0 0.0
    %3303 = vmatpush1.xpose.msra.mxu0 0.0
    %3304 = vmatprep.subr.mxu0 0.0
    %3305 = vmatpush1.xpose.msra.mxu0 0.0
    %3306 = vmatprep.subr.mxu0 0.0
    %3307 = vmatpush1.xpose.msra.mxu0 0.0
    %3308 = vmatprep.subr.mxu0 0.0
    %3309 = vmatpush1.xpose.msra.mxu0 0.0
    %3310 = vmatprep.subr.mxu0 0.0
    %3311 = vmatpush1.xpose.msra.mxu0 0.0
    %3312 = vmatprep.subr.mxu0 0.0
    %3313 = vmatpush1.xpose.msra.mxu0 0.0
    %3314 = vmatprep.subr.mxu0 0.0
    %3315 = vmatpush1.xpose.msra.mxu0 %v3282
    %3316 = vmatprep.subr.mxu0 0.0
    %3317 = vmatpush2.xpose.msra.mxu0 0.0
    %3318 = vmatprep.subr.mxu0 0.0
    %3319 = vmatpush2.xpose.msra.mxu0 0.0
    %3320 = vmatprep.subr.mxu0 0.0
    %3321 = vmatpush2.xpose.msra.mxu0 0.0
    %3322 = vmatprep.subr.mxu0 0.0
    %3323 = vmatpush2.xpose.msra.mxu0 0.0
    %3324 = vmatprep.subr.mxu0 0.0
    %3325 = vmatpush2.xpose.msra.mxu0 0.0
    %3326 = vmatprep.subr.mxu0 0.0
    %3327 = vmatpush2.xpose.msra.mxu0 0.0
    %3328 = vmatprep.subr.mxu0 0.0
    %3329 = vmatpush2.xpose.msra.mxu0 0.0
    %3330 = vmatprep.subr.mxu0 0.0
    %3331 = vmatpush2.xpose.msra.mxu0 0.0
    %3332 = vmatprep.subr.mxu0 0.0
    %3333 = vmatpush2.xpose.msra.mxu0 0.0
    %3334 = vmatprep.subr.mxu0 0.0
    %3335 = vmatpush2.xpose.msra.mxu0 0.0
    %3336 = vmatprep.subr.mxu0 0.0
    %3337 = vmatpush2.xpose.msra.mxu0 0.0
    %3338 = vmatprep.subr.mxu0 0.0
    %3339 = vmatpush2.xpose.msra.mxu0 0.0
    %3340 = vmatprep.subr.mxu0 0.0
    %3341 = vmatpush2.xpose.msra.mxu0 0.0
    %3342 = vmatprep.subr.mxu0 0.0
    %3343 = vmatpush2.xpose.msra.mxu0 0.0
    %3344 = vmatprep.subr.mxu0 0.0
    %3345 = vmatpush2.xpose.msra.mxu0 0.0
    %3346 = vmatprep.subr.mxu0 0.0
    %3347 = vmatpush2.xpose.msra.mxu0 0.0
    %3348 = vmatprep.mubr.f32.mxu0 0.0
    %3349 = vmatmul.mubr.f32.gmra.mxu0 %v3280
    %v3350 = vpop.f32.mrf.mxu0
    %v3351 = vadd.f32 0.0, %v3350
    %v3352 = vpop.f32.mrf.mxu0
    %3353 = vdwg.mxu0
    %v3354 = vmul.f32 %v3351, 0.35355338
    %v3355 = vmul.f32 %v268, %v2662
    %v3356 = vsub.f32 %v3354, %v3355
    %v3357 = vadd.f32 %v3356, %v1159
    %v3358 = vsel %vm372, %v3357, -inf
    %3359 = vmax.xlane.f32.xlu0 %v3358
    %v3360 = vpop.xlane.xlu0 %3359
    %v3361 = vsub.f32 %v3357, %v3360
    %v3362 = vmul.f32 %v3361, 1.442695
    %v3363 = vpow.pop %v3362
    %v3364 = vsel %vm372, %v3363, 0.0
    %3365 = vadd.xlane.f32.xlu0 %v3364
    %v3366 = vpop.xlane.xlu0 %3365
    %v3367 = vrcp.pop %v3366
    %v3368 = vmul.f32 %v3363, %v3367
    %3369 = vrot.lane.b32.xlu0 %v2238, 48
    %v3370 = vpop.permute.xlu0 %3369
    %v3373 = vsel %vm372, %v3368, 0
    %3375 = vmatprep.subr.mxu0 0.0
    %3376 = vmatpush1.msra.mxu0 0.0
    %3377 = vmatprep.subr.mxu0 0.0
    %3378 = vmatpush1.msra.mxu0 0.0
    %3379 = vmatprep.subr.mxu0 0.0
    %3380 = vmatpush1.msra.mxu0 0.0
    %3381 = vmatprep.subr.mxu0 0.0
    %3382 = vmatpush1.msra.mxu0 0.0
    %3383 = vmatprep.subr.mxu0 0.0
    %3384 = vmatpush1.msra.mxu0 0.0
    %3385 = vmatprep.subr.mxu0 0.0
    %3386 = vmatpush1.msra.mxu0 0.0
    %3387 = vmatprep.subr.mxu0 0.0
    %3388 = vmatpush1.msra.mxu0 0.0
    %3389 = vmatprep.subr.mxu0 0.0
    %3390 = vmatpush1.msra.mxu0 0.0
    %3391 = vmatprep.subr.mxu0 0.0
    %3392 = vmatpush1.msra.mxu0 0.0
    %3393 = vmatprep.subr.mxu0 0.0
    %3394 = vmatpush1.msra.mxu0 0.0
    %3395 = vmatprep.subr.mxu0 0.0
    %3396 = vmatpush1.msra.mxu0 0.0
    %3397 = vmatprep.subr.mxu0 0.0
    %3398 = vmatpush1.msra.mxu0 0.0
    %3399 = vmatprep.subr.mxu0 0.0
    %3400 = vmatpush1.msra.mxu0 0.0
    %3401 = vmatprep.subr.mxu0 0.0
    %3402 = vmatpush1.msra.mxu0 0.0
    %3403 = vmatprep.subr.mxu0 0.0
    %3404 = vmatpush1.msra.mxu0 0.0
    %3405 = vmatprep.subr.mxu0 0.0
    %3406 = vmatpush1.msra.mxu0 %v3370
    %3407 = vmatprep.subr.mxu0 0.0
    %3408 = vmatpush2.msra.mxu0 0.0
    %3409 = vmatprep.subr.mxu0 0.0
    %3410 = vmatpush2.msra.mxu0 0.0
    %3411 = vmatprep.subr.mxu0 0.0
    %3412 = vmatpush2.msra.mxu0 0.0
    %3413 = vmatprep.subr.mxu0 0.0
    %3414 = vmatpush2.msra.mxu0 0.0
    %3415 = vmatprep.subr.mxu0 0.0
    %3416 = vmatpush2.msra.mxu0 0.0
    %3417 = vmatprep.subr.mxu0 0.0
    %3418 = vmatpush2.msra.mxu0 0.0
    %3419 = vmatprep.subr.mxu0 0.0
    %3420 = vmatpush2.msra.mxu0 0.0
    %3421 = vmatprep.subr.mxu0 0.0
    %3422 = vmatpush2.msra.mxu0 0.0
    %3423 = vmatprep.subr.mxu0 0.0
    %3424 = vmatpush2.msra.mxu0 0.0
    %3425 = vmatprep.subr.mxu0 0.0
    %3426 = vmatpush2.msra.mxu0 0.0
    %3427 = vmatprep.subr.mxu0 0.0
    %3428 = vmatpush2.msra.mxu0 0.0
    %3429 = vmatprep.subr.mxu0 0.0
    %3430 = vmatpush2.msra.mxu0 0.0
    %3431 = vmatprep.subr.mxu0 0.0
    %3432 = vmatpush2.msra.mxu0 0.0
    %3433 = vmatprep.subr.mxu0 0.0
    %3434 = vmatpush2.msra.mxu0 0.0
    %3435 = vmatprep.subr.mxu0 0.0
    %3436 = vmatpush2.msra.mxu0 0.0
    %3437 = vmatprep.subr.mxu0 0.0
    %3438 = vmatpush2.msra.mxu0 0.0
    %3439 = vmatprep.mubr.f32.mxu0 0.0
    %3440 = vmatmul.mubr.f32.gmra.mxu0 %v3373
    %v3441 = vpop.f32.mrf.mxu0
    %v3442 = vadd.f32 0.0, %v3441
    %v3443 = vpop.f32.mrf.mxu0
    %3444 = vdwg.mxu0
    %3445 = vrot.lane.b32.xlu0 %v2238, 104
    %v3446 = vpop.permute.xlu0 %3445
    %3447 = vrot.lane.b32.xlu0 %v2238, 72
    %v3448 = vpop.permute.xlu0 %3447
    %v3449 = vsel %vm372, %v3446, 0
    %v3451 = vsel %vm372, %v3448, 0
    %3453 = vmatprep.subr.mxu0 0.0
    %3454 = vmatpush1.xpose.msra.mxu0 0.0
    %3455 = vmatprep.subr.mxu0 0.0
    %3456 = vmatpush1.xpose.msra.mxu0 0.0
    %3457 = vmatprep.subr.mxu0 0.0
    %3458 = vmatpush1.xpose.msra.mxu0 0.0
    %3459 = vmatprep.subr.mxu0 0.0
    %3460 = vmatpush1.xpose.msra.mxu0 0.0
    %3461 = vmatprep.subr.mxu0 0.0
    %3462 = vmatpush1.xpose.msra.mxu0 0.0
    %3463 = vmatprep.subr.mxu0 0.0
    %3464 = vmatpush1.xpose.msra.mxu0 0.0
    %3465 = vmatprep.subr.mxu0 0.0
    %3466 = vmatpush1.xpose.msra.mxu0 0.0
    %3467 = vmatprep.subr.mxu0 0.0
    %3468 = vmatpush1.xpose.msra.mxu0 0.0
    %3469 = vmatprep.subr.mxu0 0.0
    %3470 = vmatpush1.xpose.msra.mxu0 0.0
    %3471 = vmatprep.subr.mxu0 0.0
    %3472 = vmatpush1.xpose.msra.mxu0 0.0
    %3473 = vmatprep.subr.mxu0 0.0
    %3474 = vmatpush1.xpose.msra.mxu0 0.0
    %3475 = vmatprep.subr.mxu0 0.0
    %3476 = vmatpush1.xpose.msra.mxu0 0.0
    %3477 = vmatprep.subr.mxu0 0.0
    %3478 = vmatpush1.xpose.msra.mxu0 0.0
    %3479 = vmatprep.subr.mxu0 0.0
    %3480 = vmatpush1.xpose.msra.mxu0 0.0
    %3481 = vmatprep.subr.mxu0 0.0
    %3482 = vmatpush1.xpose.msra.mxu0 0.0
    %3483 = vmatprep.subr.mxu0 0.0
    %3484 = vmatpush1.xpose.msra.mxu0 %v3451
    %3485 = vmatprep.subr.mxu0 0.0
    %3486 = vmatpush2.xpose.msra.mxu0 0.0
    %3487 = vmatprep.subr.mxu0 0.0
    %3488 = vmatpush2.xpose.msra.mxu0 0.0
    %3489 = vmatprep.subr.mxu0 0.0
    %3490 = vmatpush2.xpose.msra.mxu0 0.0
    %3491 = vmatprep.subr.mxu0 0.0
    %3492 = vmatpush2.xpose.msra.mxu0 0.0
    %3493 = vmatprep.subr.mxu0 0.0
    %3494 = vmatpush2.xpose.msra.mxu0 0.0
    %3495 = vmatprep.subr.mxu0 0.0
    %3496 = vmatpush2.xpose.msra.mxu0 0.0
    %3497 = vmatprep.subr.mxu0 0.0
    %3498 = vmatpush2.xpose.msra.mxu0 0.0
    %3499 = vmatprep.subr.mxu0 0.0
    %3500 = vmatpush2.xpose.msra.mxu0 0.0
    %3501 = vmatprep.subr.mxu0 0.0
    %3502 = vmatpush2.xpose.msra.mxu0 0.0
    %3503 = vmatprep.subr.mxu0 0.0
    %3504 = vmatpush2.xpose.msra.mxu0 0.0
    %3505 = vmatprep.subr.mxu0 0.0
    %3506 = vmatpush2.xpose.msra.mxu0 0.0
    %3507 = vmatprep.subr.mxu0 0.0
    %3508 = vmatpush2.xpose.msra.mxu0 0.0
    %3509 = vmatprep.subr.mxu0 0.0
    %3510 = vmatpush2.xpose.msra.mxu0 0.0
    %3511 = vmatprep.subr.mxu0 0.0
    %3512 = vmatpush2.xpose.msra.mxu0 0.0
    %3513 = vmatprep.subr.mxu0 0.0
    %3514 = vmatpush2.xpose.msra.mxu0 0.0
    %3515 = vmatprep.subr.mxu0 0.0
    %3516 = vmatpush2.xpose.msra.mxu0 0.0
    %3517 = vmatprep.mubr.f32.mxu0 0.0
    %3518 = vmatmul.mubr.f32.gmra.mxu0 %v3449
    %v3519 = vpop.f32.mrf.mxu0
    %v3520 = vadd.f32 0.0, %v3519
    %v3521 = vpop.f32.mrf.mxu0
    %3522 = vdwg.mxu0
    %v3523 = vmul.f32 %v3520, 0.35355338
    %v3524 = vmul.f32 %v268, %v2833
    %v3525 = vsub.f32 %v3523, %v3524
    %v3526 = vadd.f32 %v3525, %v1159
    %v3527 = vsel %vm372, %v3526, -inf
    %3528 = vmax.xlane.f32.xlu0 %v3527
    %v3529 = vpop.xlane.xlu0 %3528
    %v3530 = vsub.f32 %v3526, %v3529
    %v3531 = vmul.f32 %v3530, 1.442695
    %v3532 = vpow.pop %v3531
    %v3533 = vsel %vm372, %v3532, 0.0
    %3534 = vadd.xlane.f32.xlu0 %v3533
    %v3535 = vpop.xlane.xlu0 %3534
    %v3536 = vrcp.pop %v3535
    %v3537 = vmul.f32 %v3532, %v3536
    %3538 = vrot.lane.b32.xlu0 %v2238, 40
    %v3539 = vpop.permute.xlu0 %3538
    %v3542 = vsel %vm372, %v3537, 0
    %3544 = vmatprep.subr.mxu0 0.0
    %3545 = vmatpush1.msra.mxu0 0.0
    %3546 = vmatprep.subr.mxu0 0.0
    %3547 = vmatpush1.msra.mxu0 0.0
    %3548 = vmatprep.subr.mxu0 0.0
    %3549 = vmatpush1.msra.mxu0 0.0
    %3550 = vmatprep.subr.mxu0 0.0
    %3551 = vmatpush1.msra.mxu0 0.0
    %3552 = vmatprep.subr.mxu0 0.0
    %3553 = vmatpush1.msra.mxu0 0.0
    %3554 = vmatprep.subr.mxu0 0.0
    %3555 = vmatpush1.msra.mxu0 0.0
    %3556 = vmatprep.subr.mxu0 0.0
    %3557 = vmatpush1.msra.mxu0 0.0
    %3558 = vmatprep.subr.mxu0 0.0
    %3559 = vmatpush1.msra.mxu0 0.0
    %3560 = vmatprep.subr.mxu0 0.0
    %3561 = vmatpush1.msra.mxu0 0.0
    %3562 = vmatprep.subr.mxu0 0.0
    %3563 = vmatpush1.msra.mxu0 0.0
    %3564 = vmatprep.subr.mxu0 0.0
    %3565 = vmatpush1.msra.mxu0 0.0
    %3566 = vmatprep.subr.mxu0 0.0
    %3567 = vmatpush1.msra.mxu0 0.0
    %3568 = vmatprep.subr.mxu0 0.0
    %3569 = vmatpush1.msra.mxu0 0.0
    %3570 = vmatprep.subr.mxu0 0.0
    %3571 = vmatpush1.msra.mxu0 0.0
    %3572 = vmatprep.subr.mxu0 0.0
    %3573 = vmatpush1.msra.mxu0 0.0
    %3574 = vmatprep.subr.mxu0 0.0
    %3575 = vmatpush1.msra.mxu0 %v3539
    %3576 = vmatprep.subr.mxu0 0.0
    %3577 = vmatpush2.msra.mxu0 0.0
    %3578 = vmatprep.subr.mxu0 0.0
    %3579 = vmatpush2.msra.mxu0 0.0
    %3580 = vmatprep.subr.mxu0 0.0
    %3581 = vmatpush2.msra.mxu0 0.0
    %3582 = vmatprep.subr.mxu0 0.0
    %3583 = vmatpush2.msra.mxu0 0.0
    %3584 = vmatprep.subr.mxu0 0.0
    %3585 = vmatpush2.msra.mxu0 0.0
    %3586 = vmatprep.subr.mxu0 0.0
    %3587 = vmatpush2.msra.mxu0 0.0
    %3588 = vmatprep.subr.mxu0 0.0
    %3589 = vmatpush2.msra.mxu0 0.0
    %3590 = vmatprep.subr.mxu0 0.0
    %3591 = vmatpush2.msra.mxu0 0.0
    %3592 = vmatprep.subr.mxu0 0.0
    %3593 = vmatpush2.msra.mxu0 0.0
    %3594 = vmatprep.subr.mxu0 0.0
    %3595 = vmatpush2.msra.mxu0 0.0
    %3596 = vmatprep.subr.mxu0 0.0
    %3597 = vmatpush2.msra.mxu0 0.0
    %3598 = vmatprep.subr.mxu0 0.0
    %3599 = vmatpush2.msra.mxu0 0.0
    %3600 = vmatprep.subr.mxu0 0.0
    %3601 = vmatpush2.msra.mxu0 0.0
    %3602 = vmatprep.subr.mxu0 0.0
    %3603 = vmatpush2.msra.mxu0 0.0
    %3604 = vmatprep.subr.mxu0 0.0
    %3605 = vmatpush2.msra.mxu0 0.0
    %3606 = vmatprep.subr.mxu0 0.0
    %3607 = vmatpush2.msra.mxu0 0.0
    %3608 = vmatprep.mubr.f32.mxu0 0.0
    %3609 = vmatmul.mubr.f32.gmra.mxu0 %v3542
    %v3610 = vpop.f32.mrf.mxu0
    %v3611 = vadd.f32 0.0, %v3610
    %v3612 = vpop.f32.mrf.mxu0
    %3613 = vdwg.mxu0
    %3615 = vrot.lane.b32.xlu0 %v3273, 8
    %v3616 = vpop.permute.xlu0 %3615
    %3619 = vrot.lane.b32.xlu0 %v3442, 16
    %v3620 = vpop.permute.xlu0 %3619
    %3623 = vrot.lane.b32.xlu0 %v3611, 24
    %v3624 = vpop.permute.xlu0 %3623
    %v3626 = vsel %vm372, %v3104, %v3616
    %v3627 = vsel %vm184, %v3626, %v3620
    %v3628 = vsel %vm1073, %v3627, %v3624
    %s3629 = scalar_lea.vmem %s9, 32
    %v3630 = vld [vmem:[%s3629] sm:$0xff]
    %v3631 = vld [vmem:[%s3629 + $0x8] sm:$0xff]
    %v3632 = vld [vmem:[%s3629 + $0x10] sm:$0xff]
    %v3633 = vld [vmem:[%s3629 + $0x18] sm:$0xff]
    %s3634 = scalar_lea.vmem %s10, 1
    %v3635 = vld [vmem:[%s3634] sm:$0x1]
    %v3637 = vlaneseq
    %v3638 = vshrl.u32 %v3637, 7
    %v3639 = vsub.s32 0, %v3638
    %v3640 = vrot.slane %v3635, %v3639
    %v3643 = vsel %vm287, %v2938, 0
    %v3646 = vsel %vm287, %v3628, 0
    %3648 = vmatprep.subr.mxu0 0.0
    %3649 = vmatpush1.msra.mxu0 0.0
    %3650 = vmatprep.subr.mxu0 0.0
    %3651 = vmatpush1.msra.mxu0 0.0
    %3652 = vmatprep.subr.mxu0 0.0
    %3653 = vmatpush1.msra.mxu0 0.0
    %3654 = vmatprep.subr.mxu0 0.0
    %3655 = vmatpush1.msra.mxu0 0.0
    %3656 = vmatprep.subr.mxu0 0.0
    %3657 = vmatpush1.msra.mxu0 0.0
    %3658 = vmatprep.subr.mxu0 0.0
    %3659 = vmatpush1.msra.mxu0 0.0
    %3660 = vmatprep.subr.mxu0 0.0
    %3661 = vmatpush1.msra.mxu0 0.0
    %3662 = vmatprep.subr.mxu0 0.0
    %3663 = vmatpush1.msra.mxu0 0.0
    %3664 = vmatprep.subr.mxu0 0.0
    %3665 = vmatpush1.msra.mxu0 0.0
    %3666 = vmatprep.subr.mxu0 0.0
    %3667 = vmatpush1.msra.mxu0 0.0
    %3668 = vmatprep.subr.mxu0 0.0
    %3669 = vmatpush1.msra.mxu0 0.0
    %3670 = vmatprep.subr.mxu0 0.0
    %3671 = vmatpush1.msra.mxu0 0.0
    %3672 = vmatprep.subr.mxu0 0.0
    %3673 = vmatpush1.msra.mxu0 %v3633
    %3674 = vmatprep.subr.mxu0 0.0
    %3675 = vmatpush1.msra.mxu0 %v3632
    %3676 = vmatprep.subr.mxu0 0.0
    %3677 = vmatpush1.msra.mxu0 %v3631
    %3678 = vmatprep.subr.mxu0 0.0
    %3679 = vmatpush1.msra.mxu0 %v3630
    %3680 = vmatprep.subr.mxu0 0.0
    %3681 = vmatpush2.msra.mxu0 0.0
    %3682 = vmatprep.subr.mxu0 0.0
    %3683 = vmatpush2.msra.mxu0 0.0
    %3684 = vmatprep.subr.mxu0 0.0
    %3685 = vmatpush2.msra.mxu0 0.0
    %3686 = vmatprep.subr.mxu0 0.0
    %3687 = vmatpush2.msra.mxu0 0.0
    %3688 = vmatprep.subr.mxu0 0.0
    %3689 = vmatpush2.msra.mxu0 0.0
    %3690 = vmatprep.subr.mxu0 0.0
    %3691 = vmatpush2.msra.mxu0 0.0
    %3692 = vmatprep.subr.mxu0 0.0
    %3693 = vmatpush2.msra.mxu0 0.0
    %3694 = vmatprep.subr.mxu0 0.0
    %3695 = vmatpush2.msra.mxu0 0.0
    %3696 = vmatprep.subr.mxu0 0.0
    %3697 = vmatpush2.msra.mxu0 0.0
    %3698 = vmatprep.subr.mxu0 0.0
    %3699 = vmatpush2.msra.mxu0 0.0
    %3700 = vmatprep.subr.mxu0 0.0
    %3701 = vmatpush2.msra.mxu0 0.0
    %3702 = vmatprep.subr.mxu0 0.0
    %3703 = vmatpush2.msra.mxu0 0.0
    %3704 = vmatprep.subr.mxu0 0.0
    %3705 = vmatpush2.msra.mxu0 0.0
    %3706 = vmatprep.subr.mxu0 0.0
    %3707 = vmatpush2.msra.mxu0 0.0
    %3708 = vmatprep.subr.mxu0 0.0
    %3709 = vmatpush2.msra.mxu0 0.0
    %3710 = vmatprep.subr.mxu0 0.0
    %3711 = vmatpush2.msra.mxu0 0.0
    %3712 = vmatprep.mubr.f32.mxu0 0.0
    %3713 = vmatmul.mubr.f32.gmra.mxu0 %v3643
    %v3714 = vpop.f32.mrf.mxu0
    %v3715 = vadd.f32 %v3640, %v3714
    %v3716 = vpop.f32.mrf.mxu0
    %3717 = vmatprep.mubr.f32.mxu0 0.0
    %3718 = vmatmul.mubr.f32.gmra.mxu0 %v3646
    %v3719 = vpop.f32.mrf.mxu0
    %v3720 = vadd.f32 %v3640, %v3719
    %v3721 = vpop.f32.mrf.mxu0
    %3722 = vdwg.mxu0
    %v3723 = vadd.f32 %v2145, %v3715
    %v3724 = vadd.f32 %v2146, %v3720
    %s3725 = scalar_lea.vmem %s15, 1
    %v3726 = vld [vmem:[%s3725] sm:$0x1]
    %s3727 = scalar_lea.vmem [#allocation8], 1
    %v3728 = vld [vmem:[%s3727] sm:$0x1]
    %v3729 = vsel %vm287, %v3723, 0.0
    %3730 = vadd.xlane.f32.xlu0 %v3729
    %v3731 = vpop.xlane.xlu0 %3730
    %v3732 = vsel %vm287, %v3724, 0.0
    %3733 = vadd.xlane.f32.xlu0 %v3732
    %v3734 = vpop.xlane.xlu0 %3733
    %v3735 = vmul.f32 %v3731, %v1873
    %v3736 = vmul.f32 %v3734, %v1873
    %v3737 = vsub.f32 %v3723, %v3735
    %v3738 = vsub.f32 %v3724, %v3736
    %v3739 = vmul.f32 %v3737, %v3737
    %v3740 = vmul.f32 %v3738, %v3738
    %v3741 = vsel %vm287, %v3739, 0.0
    %3742 = vadd.xlane.f32.xlu0 %v3741
    %v3743 = vpop.xlane.xlu0 %3742
    %v3744 = vsel %vm287, %v3740, 0.0
    %3745 = vadd.xlane.f32.xlu0 %v3744
    %v3746 = vpop.xlane.xlu0 %3745
    %v3747 = vmul.f32 %v3743, %v1873
    %v3748 = vmul.f32 %v3746, %v1873
    %v3749 = vadd.f32 %v3747, 1e-05
    %v3750 = vadd.f32 %v3748, 1e-05
    %v3751 = vrsqrt.pop %v3749
    %v3752 = vrsqrt.pop %v3750
    %v3753 = vmul.f32 %v3737, %v3751
    %v3754 = vmul.f32 %v3738, %v3752
    %v3756 = vlaneseq
    %v3757 = vshrl.u32 %v3756, 7
    %v3758 = vsub.s32 0, %v3757
    %v3759 = vrot.slane %v3726, %v3758
    %v3761 = vmul.f32 %v3753, %v3759
    %v3762 = vmul.f32 %v3754, %v3759
    %v3764 = vlaneseq
    %v3765 = vshrl.u32 %v3764, 7
    %v3766 = vsub.s32 0, %v3765
    %v3767 = vrot.slane %v3728, %v3766
    %v3769 = vadd.f32 %v3761, %v3767
    %v3770 = vadd.f32 %v3762, %v3767
    %s3771 = scalar_lea.vmem %s11, 32
    %v3772 = vld [vmem:[%s3771] sm:$0xff]
    %v3773 = vld [vmem:[%s3771 + $0x8] sm:$0xff]
    %v3774 = vld [vmem:[%s3771 + $0x10] sm:$0xff]
    %v3775 = vld [vmem:[%s3771 + $0x18] sm:$0xff]
    %s3776 = scalar_lea.vmem %s12, 1
    %v3777 = vld [vmem:[%s3776] sm:$0x1]
    %v3779 = vlaneseq
    %v3780 = vshrl.u32 %v3779, 7
    %v3781 = vsub.s32 0, %v3780
    %v3782 = vrot.slane %v3777, %v3781
    %v3785 = vsel %vm287, %v3769, 0
    %v3788 = vsel %vm287, %v3770, 0
    %3790 = vmatprep.subr.mxu0 0.0
    %3791 = vmatpush1.msra.mxu0 0.0
    %3792 = vmatprep.subr.mxu0 0.0
    %3793 = vmatpush1.msra.mxu0 0.0
    %3794 = vmatprep.subr.mxu0 0.0
    %3795 = vmatpush1.msra.mxu0 0.0
    %3796 = vmatprep.subr.mxu0 0.0
    %3797 = vmatpush1.msra.mxu0 0.0
    %3798 = vmatprep.subr.mxu0 0.0
    %3799 = vmatpush1.msra.mxu0 0.0
    %3800 = vmatprep.subr.mxu0 0.0
    %3801 = vmatpush1.msra.mxu0 0.0
    %3802 = vmatprep.subr.mxu0 0.0
    %3803 = vmatpush1.msra.mxu0 0.0
    %3804 = vmatprep.subr.mxu0 0.0
    %3805 = vmatpush1.msra.mxu0 0.0
    %3806 = vmatprep.subr.mxu0 0.0
    %3807 = vmatpush1.msra.mxu0 0.0
    %3808 = vmatprep.subr.mxu0 0.0
    %3809 = vmatpush1.msra.mxu0 0.0
    %3810 = vmatprep.subr.mxu0 0.0
    %3811 = vmatpush1.msra.mxu0 0.0
    %3812 = vmatprep.subr.mxu0 0.0
    %3813 = vmatpush1.msra.mxu0 0.0
    %3814 = vmatprep.subr.mxu0 0.0
    %3815 = vmatpush1.msra.mxu0 %v3775
    %3816 = vmatprep.subr.mxu0 0.0
    %3817 = vmatpush1.msra.mxu0 %v3774
    %3818 = vmatprep.subr.mxu0 0.0
    %3819 = vmatpush1.msra.mxu0 %v3773
    %3820 = vmatprep.subr.mxu0 0.0
    %3821 = vmatpush1.msra.mxu0 %v3772
    %3822 = vmatprep.subr.mxu0 0.0
    %3823 = vmatpush2.msra.mxu0 0.0
    %3824 = vmatprep.subr.mxu0 0.0
    %3825 = vmatpush2.msra.mxu0 0.0
    %3826 = vmatprep.subr.mxu0 0.0
    %3827 = vmatpush2.msra.mxu0 0.0
    %3828 = vmatprep.subr.mxu0 0.0
    %3829 = vmatpush2.msra.mxu0 0.0
    %3830 = vmatprep.subr.mxu0 0.0
    %3831 = vmatpush2.msra.mxu0 0.0
    %3832 = vmatprep.subr.mxu0 0.0
    %3833 = vmatpush2.msra.mxu0 0.0
    %3834 = vmatprep.subr.mxu0 0.0
    %3835 = vmatpush2.msra.mxu0 0.0
    %3836 = vmatprep.subr.mxu0 0.0
    %3837 = vmatpush2.msra.mxu0 0.0
    %3838 = vmatprep.subr.mxu0 0.0
    %3839 = vmatpush2.msra.mxu0 0.0
    %3840 = vmatprep.subr.mxu0 0.0
    %3841 = vmatpush2.msra.mxu0 0.0
    %3842 = vmatprep.subr.mxu0 0.0
    %3843 = vmatpush2.msra.mxu0 0.0
    %3844 = vmatprep.subr.mxu0 0.0
    %3845 = vmatpush2.msra.mxu0 0.0
    %3846 = vmatprep.subr.mxu0 0.0
    %3847 = vmatpush2.msra.mxu0 0.0
    %3848 = vmatprep.subr.mxu0 0.0
    %3849 = vmatpush2.msra.mxu0 0.0
    %3850 = vmatprep.subr.mxu0 0.0
    %3851 = vmatpush2.msra.mxu0 0.0
    %3852 = vmatprep.subr.mxu0 0.0
    %3853 = vmatpush2.msra.mxu0 0.0
    %3854 = vmatprep.mubr.f32.mxu0 0.0
    %3855 = vmatmul.mubr.f32.gmra.mxu0 %v3785
    %v3856 = vpop.f32.mrf.mxu0
    %v3857 = vadd.f32 %v3782, %v3856
    %v3858 = vpop.f32.mrf.mxu0
    %3859 = vmatprep.mubr.f32.mxu0 0.0
    %3860 = vmatmul.mubr.f32.gmra.mxu0 %v3788
    %v3861 = vpop.f32.mrf.mxu0
    %v3862 = vadd.f32 %v3782, %v3861
    %v3863 = vpop.f32.mrf.mxu0
    %3864 = vdwg.mxu0
    %v3865 = vmax.f32 %v3857, 0.0
    %v3866 = vmax.f32 %v3862, 0.0
    %s3867 = scalar_lea.vmem %s13, 64
    %v3868 = vld [vmem:[%s3867] sm:$0xff]
    %v3869 = vld [vmem:[%s3867 + $0x8] sm:$0xff]
    %v3870 = vld [vmem:[%s3867 + $0x10] sm:$0xff]
    %v3871 = vld [vmem:[%s3867 + $0x18] sm:$0xff]
    %v3872 = vld [vmem:[%s3867 + $0x20] sm:$0xff]
    %v3873 = vld [vmem:[%s3867 + $0x28] sm:$0xff]
    %v3874 = vld [vmem:[%s3867 + $0x30] sm:$0xff]
    %v3875 = vld [vmem:[%s3867 + $0x38] sm:$0xff]
    %s3876 = scalar_lea.vmem %s14, 1
    %v3877 = vld [vmem:[%s3876] sm:$0x1]
    %v3879 = vlaneseq
    %v3880 = vshrl.u32 %v3879, 7
    %v3881 = vsub.s32 0, %v3880
    %v3882 = vrot.slane %v3877, %v3881
    %v3885 = vsel %vm2019, %v3865, 0
    %v3888 = vsel %vm2019, %v3866, 0
    %3890 = vmatprep.subr.mxu0 0.0
    %3891 = vmatpush1.msra.mxu0 0.0
    %3892 = vmatprep.subr.mxu0 0.0
    %3893 = vmatpush1.msra.mxu0 0.0
    %3894 = vmatprep.subr.mxu0 0.0
    %3895 = vmatpush1.msra.mxu0 0.0
    %3896 = vmatprep.subr.mxu0 0.0
    %3897 = vmatpush1.msra.mxu0 0.0
    %3898 = vmatprep.subr.mxu0 0.0
    %3899 = vmatpush1.msra.mxu0 0.0
    %3900 = vmatprep.subr.mxu0 0.0
    %3901 = vmatpush1.msra.mxu0 0.0
    %3902 = vmatprep.subr.mxu0 0.0
    %3903 = vmatpush1.msra.mxu0 0.0
    %3904 = vmatprep.subr.mxu0 0.0
    %3905 = vmatpush1.msra.mxu0 0.0
    %3906 = vmatprep.subr.mxu0 0.0
    %3907 = vmatpush1.msra.mxu0 %v3875
    %3908 = vmatprep.subr.mxu0 0.0
    %3909 = vmatpush1.msra.mxu0 %v3874
    %3910 = vmatprep.subr.mxu0 0.0
    %3911 = vmatpush1.msra.mxu0 %v3873
    %3912 = vmatprep.subr.mxu0 0.0
    %3913 = vmatpush1.msra.mxu0 %v3872
    %3914 = vmatprep.subr.mxu0 0.0
    %3915 = vmatpush1.msra.mxu0 %v3871
    %3916 = vmatprep.subr.mxu0 0.0
    %3917 = vmatpush1.msra.mxu0 %v3870
    %3918 = vmatprep.subr.mxu0 0.0
    %3919 = vmatpush1.msra.mxu0 %v3869
    %3920 = vmatprep.subr.mxu0 0.0
    %3921 = vmatpush1.msra.mxu0 %v3868
    %3922 = vmatprep.subr.mxu0 0.0
    %3923 = vmatpush2.msra.mxu0 0.0
    %3924 = vmatprep.subr.mxu0 0.0
    %3925 = vmatpush2.msra.mxu0 0.0
    %3926 = vmatprep.subr.mxu0 0.0
    %3927 = vmatpush2.msra.mxu0 0.0
    %3928 = vmatprep.subr.mxu0 0.0
    %3929 = vmatpush2.msra.mxu0 0.0
    %3930 = vmatprep.subr.mxu0 0.0
    %3931 = vmatpush2.msra.mxu0 0.0
    %3932 = vmatprep.subr.mxu0 0.0
    %3933 = vmatpush2.msra.mxu0 0.0
    %3934 = vmatprep.subr.mxu0 0.0
    %3935 = vmatpush2.msra.mxu0 0.0
    %3936 = vmatprep.subr.mxu0 0.0
    %3937 = vmatpush2.msra.mxu0 0.0
    %3938 = vmatprep.subr.mxu0 0.0
    %3939 = vmatpush2.msra.mxu0 0.0
    %3940 = vmatprep.subr.mxu0 0.0
    %3941 = vmatpush2.msra.mxu0 0.0
    %3942 = vmatprep.subr.mxu0 0.0
    %3943 = vmatpush2.msra.mxu0 0.0
    %3944 = vmatprep.subr.mxu0 0.0
    %3945 = vmatpush2.msra.mxu0 0.0
    %3946 = vmatprep.subr.mxu0 0.0
    %3947 = vmatpush2.msra.mxu0 0.0
    %3948 = vmatprep.subr.mxu0 0.0
    %3949 = vmatpush2.msra.mxu0 0.0
    %3950 = vmatprep.subr.mxu0 0.0
    %3951 = vmatpush2.msra.mxu0 0.0
    %3952 = vmatprep.subr.mxu0 0.0
    %3953 = vmatpush2.msra.mxu0 0.0
    %3954 = vmatprep.mubr.f32.mxu0 0.0
    %3955 = vmatmul.mubr.f32.gmra.mxu0 %v3885
    %v3956 = vpop.f32.mrf.mxu0
    %v3957 = vadd.f32 %v3882, %v3956
    %v3958 = vpop.f32.mrf.mxu0
    %3959 = vmatprep.mubr.f32.mxu0 0.0
    %3960 = vmatmul.mubr.f32.gmra.mxu0 %v3888
    %v3961 = vpop.f32.mrf.mxu0
    %v3962 = vadd.f32 %v3882, %v3961
    %v3963 = vpop.f32.mrf.mxu0
    %3964 = vdwg.mxu0
    %v3965 = vadd.f32 %v3769, %v3957
    %v3966 = vadd.f32 %v3770, %v3962
    %s3967 = scalar_lea.vmem %s17, 1
    %v3968 = vld [vmem:[%s3967] sm:$0x1]
    %s3969 = scalar_lea.vmem [#allocation9], 1
    %v3970 = vld [vmem:[%s3969] sm:$0x1]
    %v3971 = vsel %vm287, %v3965, 0.0
    %3972 = vadd.xlane.f32.xlu0 %v3971
    %v3973 = vpop.xlane.xlu0 %3972
    %v3974 = vsel %vm287, %v3966, 0.0
    %3975 = vadd.xlane.f32.xlu0 %v3974
    %v3976 = vpop.xlane.xlu0 %3975
    %v3977 = vmul.f32 %v3973, %v1873
    %v3978 = vmul.f32 %v3976, %v1873
    %v3979 = vsub.f32 %v3965, %v3977
    %v3980 = vsub.f32 %v3966, %v3978
    %v3981 = vmul.f32 %v3979, %v3979
    %v3982 = vmul.f32 %v3980, %v3980
    %v3983 = vsel %vm287, %v3981, 0.0
    %3984 = vadd.xlane.f32.xlu0 %v3983
    %v3985 = vpop.xlane.xlu0 %3984
    %v3986 = vsel %vm287, %v3982, 0.0
    %3987 = vadd.xlane.f32.xlu0 %v3986
    %v3988 = vpop.xlane.xlu0 %3987
    %v3989 = vmul.f32 %v3985, %v1873
    %v3990 = vmul.f32 %v3988, %v1873
    %v3991 = vadd.f32 %v3989, 1e-05
    %v3992 = vadd.f32 %v3990, 1e-05
    %v3993 = vrsqrt.pop %v3991
    %v3994 = vrsqrt.pop %v3992
    %v3995 = vmul.f32 %v3979, %v3993
    %v3996 = vmul.f32 %v3980, %v3994
    %v3998 = vlaneseq
    %v3999 = vshrl.u32 %v3998, 7
    %v4000 = vsub.s32 0, %v3999
    %v4001 = vrot.slane %v3968, %v4000
    %v4003 = vmul.f32 %v3995, %v4001
    %v4004 = vmul.f32 %v3996, %v4001
    %v4006 = vlaneseq
    %v4007 = vshrl.u32 %v4006, 7
    %v4008 = vsub.s32 0, %v4007
    %v4009 = vrot.slane %v3970, %v4008
    %v4011 = vadd.f32 %v4003, %v4009
    %v4012 = vadd.f32 %v4004, %v4009
    %v4014 = vrot.slane %v4012, 7
    %vm4016 = vcmask 1040384
    %v4017 = vsel %vm4016, %v4011, %v4014
    %v4018 = vld [vmem:[%s19] sm:$0x1]
    %v4019 = vld [vmem:[#allocation11] sm:$0x1]
    %vm4020 = vcmask 254976
    %v4021 = vsel %vm4020, %v4017, 0.0
    %4022 = vadd.xlane.f32.xlu0 %v4021
    %v4023 = vpop.xlane.xlu0 %4022
    %v4024 = vmul.f32 %v4023, %v1873
    %v4025 = vsub.f32 %v4017, %v4024
    %v4026 = vmul.f32 %v4025, %v4025
    %v4027 = vsel %vm4020, %v4026, 0.0
    %4028 = vadd.xlane.f32.xlu0 %v4027
    %v4029 = vpop.xlane.xlu0 %4028
    %v4030 = vmul.f32 %v4029, %v1873
    %v4031 = vadd.f32 %v4030, 1e-05
    %v4032 = vrsqrt.pop %v4031
    %v4033 = vmul.f32 %v4025, %v4032
    %v4035 = vlaneseq
    %v4036 = vshrl.u32 %v4035, 7
    %v4037 = vsub.s32 0, %v4036
    %v4038 = vrot.slane %v4018, %v4037
    %v4040 = vmul.f32 %v4033, %v4038
    %v4042 = vlaneseq
    %v4043 = vshrl.u32 %v4042, 7
    %v4044 = vsub.s32 0, %v4043
    %v4045 = vrot.slane %v4019, %v4044
    %v4047 = vadd.f32 %v4040, %v4045
    %v4048 = vld [vmem:[%s21] sm:$0xff]
    %v4049 = vld [vmem:[%s21 + $0x8] sm:$0xff]
    %v4050 = vld [vmem:[%s21 + $0x10] sm:$0xff]
    %v4051 = vld [vmem:[%s21 + $0x18] sm:$0xff]
    %v4052 = vld [vmem:[#allocation12] sm:$0x1]
    %v4054 = vlaneseq
    %v4055 = vshrl.u32 %v4054, 7
    %v4056 = vsub.s32 0, %v4055
    %v4057 = vrot.slane %v4052, %v4056
    %v4060 = vsel %vm287, %v4047, 0
    %4062 = vmatprep.subr.mxu0 0.0
    %4063 = vmatpush1.msra.mxu0 0.0
    %4064 = vmatprep.subr.mxu0 0.0
    %4065 = vmatpush1.msra.mxu0 0.0
    %4066 = vmatprep.subr.mxu0 0.0
    %4067 = vmatpush1.msra.mxu0 0.0
    %4068 = vmatprep.subr.mxu0 0.0
    %4069 = vmatpush1.msra.mxu0 0.0
    %4070 = vmatprep.subr.mxu0 0.0
    %4071 = vmatpush1.msra.mxu0 0.0
    %4072 = vmatprep.subr.mxu0 0.0
    %4073 = vmatpush1.msra.mxu0 0.0
    %4074 = vmatprep.subr.mxu0 0.0
    %4075 = vmatpush1.msra.mxu0 0.0
    %4076 = vmatprep.subr.mxu0 0.0
    %4077 = vmatpush1.msra.mxu0 0.0
    %4078 = vmatprep.subr.mxu0 0.0
    %4079 = vmatpush1.msra.mxu0 0.0
    %4080 = vmatprep.subr.mxu0 0.0
    %4081 = vmatpush1.msra.mxu0 0.0
    %4082 = vmatprep.subr.mxu0 0.0
    %4083 = vmatpush1.msra.mxu0 0.0
    %4084 = vmatprep.subr.mxu0 0.0
    %4085 = vmatpush1.msra.mxu0 0.0
    %4086 = vmatprep.subr.mxu0 0.0
    %4087 = vmatpush1.msra.mxu0 %v4051
    %4088 = vmatprep.subr.mxu0 0.0
    %4089 = vmatpush1.msra.mxu0 %v4050
    %4090 = vmatprep.subr.mxu0 0.0
    %4091 = vmatpush1.msra.mxu0 %v4049
    %4092 = vmatprep.subr.mxu0 0.0
    %4093 = vmatpush1.msra.mxu0 %v4048
    %4094 = vmatprep.subr.mxu0 0.0
    %4095 = vmatpush2.msra.mxu0 0.0
    %4096 = vmatprep.subr.mxu0 0.0
    %4097 = vmatpush2.msra.mxu0 0.0
    %4098 = vmatprep.subr.mxu0 0.0
    %4099 = vmatpush2.msra.mxu0 0.0
    %4100 = vmatprep.subr.mxu0 0.0
    %4101 = vmatpush2.msra.mxu0 0.0
    %4102 = vmatprep.subr.mxu0 0.0
    %4103 = vmatpush2.msra.mxu0 0.0
    %4104 = vmatprep.subr.mxu0 0.0
    %4105 = vmatpush2.msra.mxu0 0.0
    %4106 = vmatprep.subr.mxu0 0.0
    %4107 = vmatpush2.msra.mxu0 0.0
    %4108 = vmatprep.subr.mxu0 0.0
    %4109 = vmatpush2.msra.mxu0 0.0
    %4110 = vmatprep.subr.mxu0 0.0
    %4111 = vmatpush2.msra.mxu0 0.0
    %4112 = vmatprep.subr.mxu0 0.0
    %4113 = vmatpush2.msra.mxu0 0.0
    %4114 = vmatprep.subr.mxu0 0.0
    %4115 = vmatpush2.msra.mxu0 0.0
    %4116 = vmatprep.subr.mxu0 0.0
    %4117 = vmatpush2.msra.mxu0 0.0
    %4118 = vmatprep.subr.mxu0 0.0
    %4119 = vmatpush2.msra.mxu0 0.0
    %4120 = vmatprep.subr.mxu0 0.0
    %4121 = vmatpush2.msra.mxu0 0.0
    %4122 = vmatprep.subr.mxu0 0.0
    %4123 = vmatpush2.msra.mxu0 0.0
    %4124 = vmatprep.subr.mxu0 0.0
    %4125 = vmatpush2.msra.mxu0 0.0
    %4126 = vmatprep.mubr.f32.mxu0 0.0
    %4127 = vmatmul.mubr.f32.gmra.mxu0 %v4060
    %v4128 = vpop.f32.mrf.mxu0
    %v4129 = vadd.f32 %v4057, %v4128
    %v4130 = vpop.f32.mrf.mxu0
    %4131 = vdwg.mxu0
    %vm4132 = vcmask 58368
    %v4133 = vsel %vm4132, %v4129, -inf
    %4134 = vmax.xlane.f32.xlu0 %v4133
    %v4135 = vpop.xlane.xlu0 %4134
    %v4136 = vsub.f32 %v4129, %v4135
    %v4137 = vmul.f32 %v4136, 1.442695
    %v4138 = vpow.pop %v4137
    %v4139 = vsel %vm4132, %v4138, 0.0
    %4140 = vadd.xlane.f32.xlu0 %v4139
    %v4141 = vpop.xlane.xlu0 %4140
    %v4142 = vlog2.pop %v4141
    %v4143 = vmul.f32 %v4142, 0.6931472
    %v4144 = vsub.f32 %v4136, %v4143
    %4145 = vst.msk [vmem:[#allocation15] sm:$0x3] %vm4132, %v4144
    // Predicated region
    $region126: #{forward.1} parent=1 // pred_check
      _
    $region127: #{forward.1} parent=1 // pred_check_branch
      %4147 = sbr.rel (0) target = $region129
    $region128: #{forward.1} parent=1 // pred_region
      %s4149 = ssub.s32 32, 32
      %4150 = vsyncadd [#allocation4], %s4149
      %s4152 = sshll.u32 [#allocation15], 4
      %s4153 = int_to_ptr.vmem [resolvable:$true] %s4152
      %4155 = dma.vmem_to_hbm [thread:$0]  %s4153, 32, %s24, [#allocation4]
    $region129: #{forward.1} parent=1 // pred_fallthru
      _
    // Predicated region
    $region130: #{forward.1} parent=1 // pred_check
      _
    $region131: #{forward.1} parent=1 // pred_check_branch
      %4157 = sbr.rel (0) target = $region133
    $region132: #{forward.1} parent=1 // pred_region
      %4158 = dma.done [#allocation4], 32
    $region133: #{forward.1} parent=1 // pred_fallthru
      _
    %4159 = vsyncpa [#allocation3], 1
    %4160 = vsyncpa [#allocation7], 1
    %4161 = vsyncpa [#allocation10], 1
    %4162 = vsyncpa [#allocation13], 1
    %4163 = vsyncpa [#allocation4], 1
    %4164 = vsyncpa [#allocation5], 1

</llo_original>
